<compile_context>
chip_gen: v5e
topology: v5e:2x2
jax: 0.10.0
libtpu: 0.0.40
codegen_flags: <defaults>
</compile_context>

<pallas_src>
import functools

import jax
import jax.numpy as jnp
from jax.experimental import pallas as pl
from jax.experimental.pallas import tpu as pltpu


def _dense_block_kernel(x_ref, w_ref, b_ref, g_ref, be_ref, a_ref,
                        o_ref, skip_ref, rhs_ref,
                        *, depth, C, T, F, eps, skip_off):
    """Whole DenseBlock for one batch element.

    x_ref   : (1, C, T*F)        input, flattened (t, f) on lanes
    w_ref   : (depth, C, Kp)     conv weights, K = tap-major 6*cmax, zero-padded
    b_ref   : (depth, C, 1)      conv bias
    g_ref   : (depth, 1, T*F)    LayerNorm gamma, tiled over T
    be_ref  : (depth, 1, T*F)    LayerNorm beta, tiled over T
    a_ref   : (depth, C, 1)      PReLU per-channel slope
    o_ref   : (1, C, T*F)        last layer's output
    skip_ref: (cmax, skip_len)   lane-padded skip buffer (VMEM scratch)
    rhs_ref : (Kp, T*F)          K-stacked conv rhs (VMEM scratch)
    """
    TF = T * F
    cmax = C * depth
    K = 6 * cmax
    Kp = rhs_ref.shape[0]
    back_pad = skip_ref.shape[1] - skip_off - TF

    # ---- per-step init: zero only what can be read before being written ----
    # (no program_id gating: under megacore-parallel each core owns a disjoint
    #  subset of steps and its own scratch copies)
    skip_ref[:, pl.ds(0, skip_off)] = jnp.zeros((cmax, skip_off), jnp.float32)
    skip_ref[:, pl.ds(skip_off + TF, back_pad)] = jnp.zeros((cmax, back_pad), jnp.float32)
    if depth > 1:
        # rows that will hold later-layer outputs: make them exact zeros so the
        # fused matmul never touches stale / uninitialized VMEM (weights there
        # are zero-padded too, belt-and-braces).
        skip_ref[pl.ds(C, cmax - C), pl.ds(skip_off, TF)] = jnp.zeros((cmax - C, TF), jnp.float32)
    if Kp > K:
        rhs_ref[pl.ds(K, Kp - K), :] = jnp.zeros((Kp - K, TF), jnp.float32)

    # drop the input into skip rows [0, C)
    skip_ref[pl.ds(0, C), pl.ds(skip_off, TF)] = x_ref[0].astype(jnp.float32)

    # lane -> frequency-bin helpers (F is a power of two, asserted in wrapper)
    lane = jax.lax.broadcasted_iota(jnp.int32, (1, TF), 1)
    fpos = lane & (F - 1)
    not_first = fpos != 0           # f - 1 exists
    not_last = fpos != (F - 1)      # f + 1 exists

    # recursive-doubling butterfly masks, computed once and reused every layer
    offsets = []
    o = 1
    while o < F:
        offsets.append(o)
        o *= 2
    masks = [(lane & o) == 0 for o in offsets]

    def group_sum(val):
        """Every lane gets the sum over its own contiguous F-lane group.

        Pure-vreg recursive doubling: the ±o partners come from pltpu.roll
        (XLU lane rotation), no VMEM round-trips.  Full-axis circular wrap is
        never selected by the (lane & o) mask, so the result is exact.
        """
        for o, m in zip(offsets, masks):
            up = pltpu.roll(val, TF - o, 1)   # lane j -> val[j + o]
            dn = pltpu.roll(val, o, 1)        # lane j -> val[j - o]
            val = val + jnp.where(m, up, dn)
        return val

    inv_f = 1.0 / F
    out = None
    for i in range(depth):                    # depth is small & static -> unrolled
        dil = 2 ** i

        # ---- K-stack the 6 (dt, df) tap windows of the skip buffer ----------
        for k in range(6):
            kt, kf = divmod(k, 3)
            dt = (1 - kt) * dil               # look-back in time (0 or dil)
            df = kf - 1                       # frequency offset in {-1, 0, +1}
            off = skip_off - dt * F + df      # window start inside padded buffer
            win = skip_ref[:, pl.ds(off, TF)]                    # (cmax, TF)
            if df == 1:                       # f+1 wrapped into the next time row
                win = jnp.where(not_last, win, 0.0)
            elif df == -1:                    # f-1 wrapped into the previous row
                win = jnp.where(not_first, win, 0.0)
            rhs_ref[pl.ds(k * cmax, cmax), :] = win

        # ---- one MXU matmul per layer: (C, Kp) x (Kp, TF), K ~= one 128 tile --
        y = jnp.dot(w_ref[i], rhs_ref[...],
                    preferred_element_type=jnp.float32) + b_ref[i]   # (C, TF)

        # ---- LayerNorm over F: single stacked reduction pass -----------------
        s = group_sum(jnp.concatenate([y, y * y], axis=0))           # (2C, TF)
        mean = s[:C] * inv_f
        var = s[C:] * inv_f - mean * mean
        yn = (y - mean) * jax.lax.rsqrt(var + eps)
        yn = yn * g_ref[i] + be_ref[i]        # (1, TF) broadcasts over channels

        # ---- PReLU with per-channel slope ------------------------------------
        out = jnp.where(yn > 0, yn, a_ref[i] * yn)

        if i + 1 < depth:
            # dense concatenation: append this layer's output to the skip buffer
            skip_ref[pl.ds((i + 1) * C, C), pl.ds(skip_off, TF)] = out

    o_ref[0] = out.astype(o_ref.dtype)        # single lane-dense (C, T*F) store


def pack_dense_block_params(params, in_channels):
    """Pack per-layer torch-layout parameters once, outside the forward pass."""
    depth = len(params)
    C = in_channels
    cmax = C * depth
    Kp = ((6 * cmax + 127) // 128) * 128       # lane-dense K, one (or few) 128-tiles

    w_list, b_list, a_list, g_list, be_list = [], [], [], [], []
    for i, p in enumerate(params):
        cin = C * (i + 1)
        # torch concat order is [out_{i-1}, ..., out_0, x]; the kernel's skip
        # buffer keeps [x, out_0, ..., out_{i-1}], so remap the conv's
        # input-channel axis accordingly.
        sr = jnp.arange(cin)
        perm = (i - sr // C) * C + (sr % C)
        w = p["w"][:, perm, :, :]                                # (C, cin, 2, 3)
        w = jnp.transpose(w, (2, 3, 0, 1)).reshape(6, C, cin)    # tap-major
        w = jnp.pad(w, ((0, 0), (0, 0), (0, cmax - cin)))        # (6, C, cmax)
        w = jnp.transpose(w, (1, 0, 2)).reshape(C, 6 * cmax)     # K = k*cmax + row
        w = jnp.pad(w, ((0, 0), (0, Kp - 6 * cmax)))             # (C, Kp)
        w_list.append(w)
        b_list.append(p["b"].reshape(C, 1))
        a_list.append(p["alpha"].reshape(C, 1))
        g_list.append(p["gamma"])
        be_list.append(p["beta"])

    return dict(
        w=jnp.stack(w_list),        # (depth, C, Kp)  lane-dense fused-tap weights
        b=jnp.stack(b_list),        # (depth, C, 1)
        alpha=jnp.stack(a_list),    # (depth, C, 1)
        gamma=jnp.stack(g_list),    # (depth, F)
        beta=jnp.stack(be_list),    # (depth, F)
    )


def dense_block_fused(x, packed):
    """DenseBlock.forward (returns the last layer's output) as ONE pallas_call."""
    B, C, T, F = x.shape
    depth, _, Kp = packed["w"].shape
    cmax = C * depth
    TF = T * F
    assert F & (F - 1) == 0 and F <= 256, "LayerNorm reduction assumes power-of-two input_size <= 256"
    assert 6 * cmax <= Kp
    # TODO(synk): non-power-of-two input_size needs a generic F-group reduction.

    # Front pad of the skip buffer covers the largest causal dilated shift for
    # EVERY layer (taps with dt >= T then simply read zeros), rounded to a
    # 128-lane boundary so the center stays lane-aligned.
    max_shift = (2 ** (depth - 1)) * F + 1
    skip_off = ((max_shift + 127) // 128) * 128
    skip_len = skip_off + TF + 128

    # LayerNorm affine params tiled over T so they broadcast over the (t, f) lanes.
    g_t = jnp.tile(packed["gamma"], (1, T)).reshape(depth, 1, TF)
    be_t = jnp.tile(packed["beta"], (1, T)).reshape(depth, 1, TF)
    x2 = x.reshape(B, C, TF)

    kernel = functools.partial(
        _dense_block_kernel, depth=depth, C=C, T=T, F=F, eps=1e-5,
        skip_off=skip_off)

    out = pl.pallas_call(
        kernel,
        out_shape=jax.ShapeDtypeStruct((B, C, TF), x.dtype),
        grid_spec=pltpu.PrefetchScalarGridSpec(
            num_scalar_prefetch=0,
            grid=(B,),
            in_specs=[
                pl.BlockSpec((1, C, TF), lambda b: (b, 0, 0)),
                pl.BlockSpec((depth, C, Kp), lambda b: (0, 0, 0)),
                pl.BlockSpec((depth, C, 1), lambda b: (0, 0, 0)),
                pl.BlockSpec((depth, 1, TF), lambda b: (0, 0, 0)),
                pl.BlockSpec((depth, 1, TF), lambda b: (0, 0, 0)),
                pl.BlockSpec((depth, C, 1), lambda b: (0, 0, 0)),
            ],
            out_specs=pl.BlockSpec((1, C, TF), lambda b: (b, 0, 0)),
            scratch_shapes=[
                pltpu.VMEM((cmax, skip_len), jnp.float32),   # growing skip tensor
                pltpu.VMEM((Kp, TF), jnp.float32),           # K-stacked conv rhs
            ],
        ),
        compiler_params=pltpu.CompilerParams(
            dimension_semantics=("parallel",)),
    )(x2, packed["w"], packed["b"], g_t, be_t, packed["alpha"])

    return out.reshape(B, C, T, F)


def init_params(key, in_channels, input_size, depth):
    """Deterministic synthetic parameters matching the PyTorch module shapes."""
    params = []
    for i in range(depth):
        cin = in_channels * (i + 1)
        key, k1, k2 = jax.random.split(key, 3)
        fan_in = cin * 2 * 3
        bound = 1.0 / (fan_in ** 0.5)
        params.append(dict(
            w=jax.random.uniform(k1, (in_channels, cin, 2, 3), jnp.float32, -bound, bound),
            b=jax.random.uniform(k2, (in_channels,), jnp.float32, -bound, bound),
            gamma=jnp.ones((input_size,), jnp.float32),
            beta=jnp.zeros((input_size,), jnp.float32),
            alpha=jnp.full((in_channels,), 0.25, jnp.float32),  # PReLU default init
        ))
    return params


# ------------------------- pure-JAX reference (for checking) -------------------------
def _ref_layer(x, w, b, gamma, beta, alpha, dil):
    xp = jnp.pad(x, ((0, 0), (0, 0), (dil, 0), (1, 1)))
    y = jax.lax.conv_general_dilated(
        xp, w, window_strides=(1, 1), padding="VALID",
        rhs_dilation=(dil, 1),
        dimension_numbers=("NCHW", "OIHW", "NCHW"))
    y = y + b[None, :, None, None]
    mean = jnp.mean(y, axis=-1, keepdims=True)
    var = jnp.mean((y - mean) ** 2, axis=-1, keepdims=True)
    yn = (y - mean) * jax.lax.rsqrt(var + 1e-5)
    yn = yn * gamma[None, None, None, :] + beta[None, None, None, :]
    return jnp.where(yn > 0, yn, alpha[None, :, None, None] * yn)


def _ref_block(x, params):
    skip = x
    out = None
    for i, p in enumerate(params):
        out = _ref_layer(skip, p["w"], p["b"], p["gamma"], p["beta"], p["alpha"], 2 ** i)
        skip = jnp.concatenate([out, skip], axis=1)
    return out
# --------------------------------------------------------------------------------------


if __name__ == "__main__":
    B, C, T, F = 2, 4, 16, 16      # batch, in_channels, time, input_size
    depth = 5

    key = jax.random.PRNGKey(0)
    kx, kp = jax.random.split(key)
    x = jax.random.normal(kx, (B, C, T, F), jnp.float32)
    params = init_params(kp, C, F, depth)

    packed = pack_dense_block_params(params, C)     # pre-packed once, outside forward
    fwd = jax.jit(dense_block_fused)
    out = jax.block_until_ready(fwd(x, packed))

    ref = jax.block_until_ready(_ref_block(x, params))
    assert out.shape == (B, C, T, F)
    assert jnp.allclose(out, ref, atol=1e-4, rtol=1e-4), "mismatch vs pure-JAX reference"

    print("KERNEL_OK")
</pallas_src>

<mosaic_0001>
module attributes {stable_mosaic.version = 11 : i64} {
  func.func @_dense_block_kernel(%arg0: i32, %arg1: memref<1x4x256xf32, #tpu.memory_space<vmem>>, %arg2: memref<5x4x128xf32, #tpu.memory_space<vmem>>, %arg3: memref<5x4x1xf32, #tpu.memory_space<vmem>>, %arg4: memref<5x1x256xf32, #tpu.memory_space<vmem>>, %arg5: memref<5x1x256xf32, #tpu.memory_space<vmem>>, %arg6: memref<5x4x1xf32, #tpu.memory_space<vmem>>, %arg7: memref<1x4x256xf32, #tpu.memory_space<vmem>>, %arg8: memref<20x768xf32, #tpu.memory_space<vmem>>, %arg9: memref<128x256xf32, #tpu.memory_space<vmem>>) attributes {dimension_semantics = [#tpu.dimension_semantics<parallel>], iteration_bounds = array<i64: 2>, scalar_prefetch = 0 : i64, scratch_operands = 2 : i64, tpu.core_type = #tpu.core_type<tc>, window_params = [{transform_indices = @transform_0, window_bounds = array<i64: 1, 4, 256>}, {pipeline_mode = #tpu.pipeline_mode<synchronous>, transform_indices = @transform_1, window_bounds = array<i64: 5, 4, 128>}, {pipeline_mode = #tpu.pipeline_mode<synchronous>, transform_indices = @transform_2, window_bounds = array<i64: 5, 4, 1>}, {pipeline_mode = #tpu.pipeline_mode<synchronous>, transform_indices = @transform_3, window_bounds = array<i64: 5, 1, 256>}, {pipeline_mode = #tpu.pipeline_mode<synchronous>, transform_indices = @transform_4, window_bounds = array<i64: 5, 1, 256>}, {pipeline_mode = #tpu.pipeline_mode<synchronous>, transform_indices = @transform_5, window_bounds = array<i64: 5, 4, 1>}, {transform_indices = @transform_6, window_bounds = array<i64: 1, 4, 256>}]} {
    %cst = arith.constant 0.000000e+00 : f32
    %0 = vector.broadcast %cst : f32 to vector<20x384xf32>
    %c0 = arith.constant 0 : index
    %c0_0 = arith.constant 0 : index
    %1 = vector.load %arg8[%c0, %c0_0] : memref<20x768xf32, #tpu.memory_space<vmem>>, vector<20x384xf32>
    tpu.vector_store %arg8[%c0, %c0_0], %0 {strides = array<i32>} : memref<20x768xf32, #tpu.memory_space<vmem>>, vector<20x384xf32>,
    %cst_1 = arith.constant 0.000000e+00 : f32
    %2 = vector.broadcast %cst_1 : f32 to vector<20x128xf32>
    %c0_2 = arith.constant 0 : index
    %c640 = arith.constant 640 : index
    %3 = vector.load %arg8[%c0_2, %c640] : memref<20x768xf32, #tpu.memory_space<vmem>>, vector<20x128xf32>
    tpu.vector_store %arg8[%c0_2, %c640], %2 {strides = array<i32>} : memref<20x768xf32, #tpu.memory_space<vmem>>, vector<20x128xf32>,
    %cst_3 = arith.constant 0.000000e+00 : f32
    %4 = vector.broadcast %cst_3 : f32 to vector<16x256xf32>
    %c4 = arith.constant 4 : index
    %c384 = arith.constant 384 : index
    %5 = vector.load %arg8[%c4, %c384] : memref<20x768xf32, #tpu.memory_space<vmem>>, vector<16x256xf32>
    tpu.vector_store %arg8[%c4, %c384], %4 {strides = array<i32>} : memref<20x768xf32, #tpu.memory_space<vmem>>, vector<16x256xf32>,
    %cst_4 = arith.constant 0.000000e+00 : f32
    %6 = vector.broadcast %cst_4 : f32 to vector<8x256xf32>
    %c120 = arith.constant 120 : index
    %c0_5 = arith.constant 0 : index
    %7 = vector.load %arg9[%c120, %c0_5] : memref<128x256xf32, #tpu.memory_space<vmem>>, vector<8x256xf32>
    tpu.vector_store %arg9[%c120, %c0_5], %6 {strides = array<i32>} : memref<128x256xf32, #tpu.memory_space<vmem>>, vector<8x256xf32>,
    %c0_6 = arith.constant 0 : index
    %c0_7 = arith.constant 0 : index
    %c0_8 = arith.constant 0 : index
    %8 = vector.load %arg1[%c0_6, %c0_7, %c0_8] : memref<1x4x256xf32, #tpu.memory_space<vmem>>, vector<1x4x256xf32>
    %9 = vector.shape_cast %8 : vector<1x4x256xf32> to vector<4x256xf32>
    %c0_9 = arith.constant 0 : index
    %c384_10 = arith.constant 384 : index
    %10 = vector.load %arg8[%c0_9, %c384_10] : memref<20x768xf32, #tpu.memory_space<vmem>>, vector<4x256xf32>
    tpu.vector_store %arg8[%c0_9, %c384_10], %9 {strides = array<i32>} : memref<20x768xf32, #tpu.memory_space<vmem>>, vector<4x256xf32>,
    %11 = tpu.iota {dimensions = array<i32: 1>} : vector<1x256xi32>
    %c15_i32 = arith.constant 15 : i32
    %12 = vector.broadcast %c15_i32 : i32 to vector<1x256xi32>
    %13 = arith.andi %11, %12 : vector<1x256xi32>
    %c0_i32 = arith.constant 0 : i32
    %14 = vector.broadcast %c0_i32 : i32 to vector<1x256xi32>
    %15 = arith.cmpi ne, %13, %14 : vector<1x256xi32>
    %c15_i32_11 = arith.constant 15 : i32
    %16 = vector.broadcast %c15_i32_11 : i32 to vector<1x256xi32>
    %17 = arith.cmpi ne, %13, %16 : vector<1x256xi32>
    %c1_i32 = arith.constant 1 : i32
    %18 = vector.broadcast %c1_i32 : i32 to vector<1x256xi32>
    %19 = arith.andi %11, %18 : vector<1x256xi32>
    %c0_i32_12 = arith.constant 0 : i32
    %20 = vector.broadcast %c0_i32_12 : i32 to vector<1x256xi32>
    %21 = arith.cmpi eq, %19, %20 : vector<1x256xi32>
    %c2_i32 = arith.constant 2 : i32
    %22 = vector.broadcast %c2_i32 : i32 to vector<1x256xi32>
    %23 = arith.andi %11, %22 : vector<1x256xi32>
    %c0_i32_13 = arith.constant 0 : i32
    %24 = vector.broadcast %c0_i32_13 : i32 to vector<1x256xi32>
    %25 = arith.cmpi eq, %23, %24 : vector<1x256xi32>
    %c4_i32 = arith.constant 4 : i32
    %26 = vector.broadcast %c4_i32 : i32 to vector<1x256xi32>
    %27 = arith.andi %11, %26 : vector<1x256xi32>
    %c0_i32_14 = arith.constant 0 : i32
    %28 = vector.broadcast %c0_i32_14 : i32 to vector<1x256xi32>
    %29 = arith.cmpi eq, %27, %28 : vector<1x256xi32>
    %c8_i32 = arith.constant 8 : i32
    %30 = vector.broadcast %c8_i32 : i32 to vector<1x256xi32>
    %31 = arith.andi %11, %30 : vector<1x256xi32>
    %c0_i32_15 = arith.constant 0 : i32
    %32 = vector.broadcast %c0_i32_15 : i32 to vector<1x256xi32>
    %33 = arith.cmpi eq, %31, %32 : vector<1x256xi32>
    %c0_16 = arith.constant 0 : index
    %c367 = arith.constant 367 : index
    %34 = vector.load %arg8[%c0_16, %c367] : memref<20x768xf32, #tpu.memory_space<vmem>>, vector<20x256xf32>
    %cst_17 = arith.constant 0.000000e+00 : f32
    %35 = vector.shape_cast %15 : vector<1x256xi1> to vector<1x256xi1>
    %36 = vector.broadcast %35 : vector<1x256xi1> to vector<20x256xi1>
    %37 = vector.broadcast %cst_17 : f32 to vector<20x256xf32>
    %38 = arith.select %36, %34, %37 : vector<20x256xi1>, vector<20x256xf32>
    %c0_18 = arith.constant 0 : index
    %c0_19 = arith.constant 0 : index
    %39 = vector.load %arg9[%c0_18, %c0_19] : memref<128x256xf32, #tpu.memory_space<vmem>>, vector<20x256xf32>
    tpu.vector_store %arg9[%c0_18, %c0_19], %38 {strides = array<i32>} : memref<128x256xf32, #tpu.memory_space<vmem>>, vector<20x256xf32>,
    %c0_20 = arith.constant 0 : index
    %c368 = arith.constant 368 : index
    %40 = vector.load %arg8[%c0_20, %c368] : memref<20x768xf32, #tpu.memory_space<vmem>>, vector<20x256xf32>
    %c20 = arith.constant 20 : index
    %c0_21 = arith.constant 0 : index
    %41 = vector.load %arg9[%c20, %c0_21] : memref<128x256xf32, #tpu.memory_space<vmem>>, vector<20x256xf32>
    tpu.vector_store %arg9[%c20, %c0_21], %40 {strides = array<i32>} : memref<128x256xf32, #tpu.memory_space<vmem>>, vector<20x256xf32>,
    %c0_22 = arith.constant 0 : index
    %c369 = arith.constant 369 : index
    %42 = vector.load %arg8[%c0_22, %c369] : memref<20x768xf32, #tpu.memory_space<vmem>>, vector<20x256xf32>
    %cst_23 = arith.constant 0.000000e+00 : f32
    %43 = vector.shape_cast %17 : vector<1x256xi1> to vector<1x256xi1>
    %44 = vector.broadcast %43 : vector<1x256xi1> to vector<20x256xi1>
    %45 = vector.broadcast %cst_23 : f32 to vector<20x256xf32>
    %46 = arith.select %44, %42, %45 : vector<20x256xi1>, vector<20x256xf32>
    %c40 = arith.constant 40 : index
    %c0_24 = arith.constant 0 : index
    %47 = vector.load %arg9[%c40, %c0_24] : memref<128x256xf32, #tpu.memory_space<vmem>>, vector<20x256xf32>
    tpu.vector_store %arg9[%c40, %c0_24], %46 {strides = array<i32>} : memref<128x256xf32, #tpu.memory_space<vmem>>, vector<20x256xf32>,
    %c0_25 = arith.constant 0 : index
    %c383 = arith.constant 383 : index
    %48 = vector.load %arg8[%c0_25, %c383] : memref<20x768xf32, #tpu.memory_space<vmem>>, vector<20x256xf32>
    %cst_26 = arith.constant 0.000000e+00 : f32
    %49 = vector.shape_cast %15 : vector<1x256xi1> to vector<1x256xi1>
    %50 = vector.broadcast %49 : vector<1x256xi1> to vector<20x256xi1>
    %51 = vector.broadcast %cst_26 : f32 to vector<20x256xf32>
    %52 = arith.select %50, %48, %51 : vector<20x256xi1>, vector<20x256xf32>
    %c60 = arith.constant 60 : index
    %c0_27 = arith.constant 0 : index
    %53 = vector.load %arg9[%c60, %c0_27] : memref<128x256xf32, #tpu.memory_space<vmem>>, vector<20x256xf32>
    tpu.vector_store %arg9[%c60, %c0_27], %52 {strides = array<i32>} : memref<128x256xf32, #tpu.memory_space<vmem>>, vector<20x256xf32>,
    %c0_28 = arith.constant 0 : index
    %c384_29 = arith.constant 384 : index
    %54 = vector.load %arg8[%c0_28, %c384_29] : memref<20x768xf32, #tpu.memory_space<vmem>>, vector<20x256xf32>
    %c80 = arith.constant 80 : index
    %c0_30 = arith.constant 0 : index
    %55 = vector.load %arg9[%c80, %c0_30] : memref<128x256xf32, #tpu.memory_space<vmem>>, vector<20x256xf32>
    tpu.vector_store %arg9[%c80, %c0_30], %54 {strides = array<i32>} : memref<128x256xf32, #tpu.memory_space<vmem>>, vector<20x256xf32>,
    %c0_31 = arith.constant 0 : index
    %c385 = arith.constant 385 : index
    %56 = vector.load %arg8[%c0_31, %c385] : memref<20x768xf32, #tpu.memory_space<vmem>>, vector<20x256xf32>
    %cst_32 = arith.constant 0.000000e+00 : f32
    %57 = vector.shape_cast %17 : vector<1x256xi1> to vector<1x256xi1>
    %58 = vector.broadcast %57 : vector<1x256xi1> to vector<20x256xi1>
    %59 = vector.broadcast %cst_32 : f32 to vector<20x256xf32>
    %60 = arith.select %58, %56, %59 : vector<20x256xi1>, vector<20x256xf32>
    %c100 = arith.constant 100 : index
    %c0_33 = arith.constant 0 : index
    %61 = vector.load %arg9[%c100, %c0_33] : memref<128x256xf32, #tpu.memory_space<vmem>>, vector<20x256xf32>
    tpu.vector_store %arg9[%c100, %c0_33], %60 {strides = array<i32>} : memref<128x256xf32, #tpu.memory_space<vmem>>, vector<20x256xf32>,
    %c0_34 = arith.constant 0 : index
    %c0_35 = arith.constant 0 : index
    %c0_36 = arith.constant 0 : index
    %62 = vector.load %arg2[%c0_34, %c0_35, %c0_36] : memref<5x4x128xf32, #tpu.memory_space<vmem>>, vector<1x4x128xf32>
    %63 = vector.shape_cast %62 : vector<1x4x128xf32> to vector<4x128xf32>
    %c0_37 = arith.constant 0 : index
    %c0_38 = arith.constant 0 : index
    %64 = vector.load %arg9[%c0_37, %c0_38] : memref<128x256xf32, #tpu.memory_space<vmem>>, vector<128x256xf32>
    %cst_39 = arith.constant dense<0.000000e+00> : vector<4x256xf32>
    %65 = tpu.matmul %63, %64, %cst_39 {dimension_numbers = #tpu.dot_dimension_numbers<[1], [0], [0], [1], [0, 0, 1, 1], [], []>} : vector<4x128xf32>, vector<128x256xf32>, vector<4x256xf32> -> vector<4x256xf32>
    %c0_40 = arith.constant 0 : index
    %c0_41 = arith.constant 0 : index
    %c0_42 = arith.constant 0 : index
    %66 = vector.load %arg3[%c0_40, %c0_41, %c0_42] : memref<5x4x1xf32, #tpu.memory_space<vmem>>, vector<1x4x1xf32>
    %67 = vector.shape_cast %66 : vector<1x4x1xf32> to vector<4x1xf32>
    %68 = vector.broadcast %67 : vector<4x1xf32> to vector<4x256xf32>
    %69 = arith.addf %65, %68 : vector<4x256xf32>
    %70 = arith.mulf %69, %69 : vector<4x256xf32>
    %71 = tpu.concatenate %69, %70 in 0 : vector<4x256xf32>, vector<4x256xf32> -> vector<8x256xf32>
    %c255_i32 = arith.constant 255 : i32
    %72 = tpu.dynamic_rotate %71 by %c255_i32 dim 1 : vector<8x256xf32>, i32 -> vector<8x256xf32>
    %c1_i32_43 = arith.constant 1 : i32
    %73 = tpu.dynamic_rotate %71 by %c1_i32_43 dim 1 : vector<8x256xf32>, i32 -> vector<8x256xf32>
    %74 = vector.shape_cast %21 : vector<1x256xi1> to vector<1x256xi1>
    %75 = vector.broadcast %74 : vector<1x256xi1> to vector<8x256xi1>
    %76 = arith.select %75, %72, %73 : vector<8x256xi1>, vector<8x256xf32>
    %77 = arith.addf %71, %76 : vector<8x256xf32>
    %c254_i32 = arith.constant 254 : i32
    %78 = tpu.dynamic_rotate %77 by %c254_i32 dim 1 : vector<8x256xf32>, i32 -> vector<8x256xf32>
    %c2_i32_44 = arith.constant 2 : i32
    %79 = tpu.dynamic_rotate %77 by %c2_i32_44 dim 1 : vector<8x256xf32>, i32 -> vector<8x256xf32>
    %80 = vector.shape_cast %25 : vector<1x256xi1> to vector<1x256xi1>
    %81 = vector.broadcast %80 : vector<1x256xi1> to vector<8x256xi1>
    %82 = arith.select %81, %78, %79 : vector<8x256xi1>, vector<8x256xf32>
    %83 = arith.addf %77, %82 : vector<8x256xf32>
    %c252_i32 = arith.constant 252 : i32
    %84 = tpu.dynamic_rotate %83 by %c252_i32 dim 1 : vector<8x256xf32>, i32 -> vector<8x256xf32>
    %c4_i32_45 = arith.constant 4 : i32
    %85 = tpu.dynamic_rotate %83 by %c4_i32_45 dim 1 : vector<8x256xf32>, i32 -> vector<8x256xf32>
    %86 = vector.shape_cast %29 : vector<1x256xi1> to vector<1x256xi1>
    %87 = vector.broadcast %86 : vector<1x256xi1> to vector<8x256xi1>
    %88 = arith.select %87, %84, %85 : vector<8x256xi1>, vector<8x256xf32>
    %89 = arith.addf %83, %88 : vector<8x256xf32>
    %c248_i32 = arith.constant 248 : i32
    %90 = tpu.dynamic_rotate %89 by %c248_i32 dim 1 : vector<8x256xf32>, i32 -> vector<8x256xf32>
    %c8_i32_46 = arith.constant 8 : i32
    %91 = tpu.dynamic_rotate %89 by %c8_i32_46 dim 1 : vector<8x256xf32>, i32 -> vector<8x256xf32>
    %92 = vector.shape_cast %33 : vector<1x256xi1> to vector<1x256xi1>
    %93 = vector.broadcast %92 : vector<1x256xi1> to vector<8x256xi1>
    %94 = arith.select %93, %90, %91 : vector<8x256xi1>, vector<8x256xf32>
    %95 = arith.addf %89, %94 : vector<8x256xf32>
    %96 = vector.extract_strided_slice %95 {offsets = [0, 0], sizes = [4, 256], strides = [1, 1]} : vector<8x256xf32> to vector<4x256xf32>
    %cst_47 = arith.constant 6.250000e-02 : f32
    %97 = vector.broadcast %cst_47 : f32 to vector<4x256xf32>
    %98 = arith.mulf %96, %97 : vector<4x256xf32>
    %99 = vector.extract_strided_slice %95 {offsets = [4, 0], sizes = [4, 256], strides = [1, 1]} : vector<8x256xf32> to vector<4x256xf32>
    %cst_48 = arith.constant 6.250000e-02 : f32
    %100 = vector.broadcast %cst_48 : f32 to vector<4x256xf32>
    %101 = arith.mulf %99, %100 : vector<4x256xf32>
    %102 = arith.mulf %98, %98 : vector<4x256xf32>
    %103 = arith.subf %101, %102 : vector<4x256xf32>
    %104 = arith.subf %69, %98 : vector<4x256xf32>
    %cst_49 = arith.constant 9.99999974E-6 : f32
    %105 = vector.broadcast %cst_49 : f32 to vector<4x256xf32>
    %106 = arith.addf %103, %105 : vector<4x256xf32>
    %107 = math.rsqrt %106 : vector<4x256xf32>
    %108 = arith.mulf %104, %107 : vector<4x256xf32>
    %c0_50 = arith.constant 0 : index
    %c0_51 = arith.constant 0 : index
    %c0_52 = arith.constant 0 : index
    %109 = vector.load %arg4[%c0_50, %c0_51, %c0_52] : memref<5x1x256xf32, #tpu.memory_space<vmem>>, vector<1x1x256xf32>
    %110 = vector.shape_cast %109 : vector<1x1x256xf32> to vector<1x256xf32>
    %111 = vector.broadcast %110 : vector<1x256xf32> to vector<4x256xf32>
    %112 = arith.mulf %108, %111 : vector<4x256xf32>
    %c0_53 = arith.constant 0 : index
    %c0_54 = arith.constant 0 : index
    %c0_55 = arith.constant 0 : index
    %113 = vector.load %arg5[%c0_53, %c0_54, %c0_55] : memref<5x1x256xf32, #tpu.memory_space<vmem>>, vector<1x1x256xf32>
    %114 = vector.shape_cast %113 : vector<1x1x256xf32> to vector<1x256xf32>
    %115 = vector.broadcast %114 : vector<1x256xf32> to vector<4x256xf32>
    %116 = arith.addf %112, %115 : vector<4x256xf32>
    %cst_56 = arith.constant 0.000000e+00 : f32
    %117 = vector.broadcast %cst_56 : f32 to vector<4x256xf32>
    %118 = arith.cmpf ogt, %116, %117 : vector<4x256xf32>
    %c0_57 = arith.constant 0 : index
    %c0_58 = arith.constant 0 : index
    %c0_59 = arith.constant 0 : index
    %119 = vector.load %arg6[%c0_57, %c0_58, %c0_59] : memref<5x4x1xf32, #tpu.memory_space<vmem>>, vector<1x4x1xf32>
    %120 = vector.shape_cast %119 : vector<1x4x1xf32> to vector<4x1xf32>
    %121 = vector.broadcast %120 : vector<4x1xf32> to vector<4x256xf32>
    %122 = arith.mulf %121, %116 : vector<4x256xf32>
    %123 = arith.select %118, %116, %122 : vector<4x256xi1>, vector<4x256xf32>
    %c4_60 = arith.constant 4 : index
    %c384_61 = arith.constant 384 : index
    %124 = vector.load %arg8[%c4_60, %c384_61] : memref<20x768xf32, #tpu.memory_space<vmem>>, vector<4x256xf32>
    tpu.vector_store %arg8[%c4_60, %c384_61], %123 {strides = array<i32>} : memref<20x768xf32, #tpu.memory_space<vmem>>, vector<4x256xf32>,
    %c0_62 = arith.constant 0 : index
    %c351 = arith.constant 351 : index
    %125 = vector.load %arg8[%c0_62, %c351] : memref<20x768xf32, #tpu.memory_space<vmem>>, vector<20x256xf32>
    %cst_63 = arith.constant 0.000000e+00 : f32
    %126 = vector.shape_cast %15 : vector<1x256xi1> to vector<1x256xi1>
    %127 = vector.broadcast %126 : vector<1x256xi1> to vector<20x256xi1>
    %128 = vector.broadcast %cst_63 : f32 to vector<20x256xf32>
    %129 = arith.select %127, %125, %128 : vector<20x256xi1>, vector<20x256xf32>
    %c0_64 = arith.constant 0 : index
    %c0_65 = arith.constant 0 : index
    %130 = vector.load %arg9[%c0_64, %c0_65] : memref<128x256xf32, #tpu.memory_space<vmem>>, vector<20x256xf32>
    tpu.vector_store %arg9[%c0_64, %c0_65], %129 {strides = array<i32>} : memref<128x256xf32, #tpu.memory_space<vmem>>, vector<20x256xf32>,
    %c0_66 = arith.constant 0 : index
    %c352 = arith.constant 352 : index
    %131 = vector.load %arg8[%c0_66, %c352] : memref<20x768xf32, #tpu.memory_space<vmem>>, vector<20x256xf32>
    %c20_67 = arith.constant 20 : index
    %c0_68 = arith.constant 0 : index
    %132 = vector.load %arg9[%c20_67, %c0_68] : memref<128x256xf32, #tpu.memory_space<vmem>>, vector<20x256xf32>
    tpu.vector_store %arg9[%c20_67, %c0_68], %131 {strides = array<i32>} : memref<128x256xf32, #tpu.memory_space<vmem>>, vector<20x256xf32>,
    %c0_69 = arith.constant 0 : index
    %c353 = arith.constant 353 : index
    %133 = vector.load %arg8[%c0_69, %c353] : memref<20x768xf32, #tpu.memory_space<vmem>>, vector<20x256xf32>
    %cst_70 = arith.constant 0.000000e+00 : f32
    %134 = vector.shape_cast %17 : vector<1x256xi1> to vector<1x256xi1>
    %135 = vector.broadcast %134 : vector<1x256xi1> to vector<20x256xi1>
    %136 = vector.broadcast %cst_70 : f32 to vector<20x256xf32>
    %137 = arith.select %135, %133, %136 : vector<20x256xi1>, vector<20x256xf32>
    %c40_71 = arith.constant 40 : index
    %c0_72 = arith.constant 0 : index
    %138 = vector.load %arg9[%c40_71, %c0_72] : memref<128x256xf32, #tpu.memory_space<vmem>>, vector<20x256xf32>
    tpu.vector_store %arg9[%c40_71, %c0_72], %137 {strides = array<i32>} : memref<128x256xf32, #tpu.memory_space<vmem>>, vector<20x256xf32>,
    %c0_73 = arith.constant 0 : index
    %c383_74 = arith.constant 383 : index
    %139 = vector.load %arg8[%c0_73, %c383_74] : memref<20x768xf32, #tpu.memory_space<vmem>>, vector<20x256xf32>
    %cst_75 = arith.constant 0.000000e+00 : f32
    %140 = vector.shape_cast %15 : vector<1x256xi1> to vector<1x256xi1>
    %141 = vector.broadcast %140 : vector<1x256xi1> to vector<20x256xi1>
    %142 = vector.broadcast %cst_75 : f32 to vector<20x256xf32>
    %143 = arith.select %141, %139, %142 : vector<20x256xi1>, vector<20x256xf32>
    %c60_76 = arith.constant 60 : index
    %c0_77 = arith.constant 0 : index
    %144 = vector.load %arg9[%c60_76, %c0_77] : memref<128x256xf32, #tpu.memory_space<vmem>>, vector<20x256xf32>
    tpu.vector_store %arg9[%c60_76, %c0_77], %143 {strides = array<i32>} : memref<128x256xf32, #tpu.memory_space<vmem>>, vector<20x256xf32>,
    %c0_78 = arith.constant 0 : index
    %c384_79 = arith.constant 384 : index
    %145 = vector.load %arg8[%c0_78, %c384_79] : memref<20x768xf32, #tpu.memory_space<vmem>>, vector<20x256xf32>
    %c80_80 = arith.constant 80 : index
    %c0_81 = arith.constant 0 : index
    %146 = vector.load %arg9[%c80_80, %c0_81] : memref<128x256xf32, #tpu.memory_space<vmem>>, vector<20x256xf32>
    tpu.vector_store %arg9[%c80_80, %c0_81], %145 {strides = array<i32>} : memref<128x256xf32, #tpu.memory_space<vmem>>, vector<20x256xf32>,
    %c0_82 = arith.constant 0 : index
    %c385_83 = arith.constant 385 : index
    %147 = vector.load %arg8[%c0_82, %c385_83] : memref<20x768xf32, #tpu.memory_space<vmem>>, vector<20x256xf32>
    %cst_84 = arith.constant 0.000000e+00 : f32
    %148 = vector.shape_cast %17 : vector<1x256xi1> to vector<1x256xi1>
    %149 = vector.broadcast %148 : vector<1x256xi1> to vector<20x256xi1>
    %150 = vector.broadcast %cst_84 : f32 to vector<20x256xf32>
    %151 = arith.select %149, %147, %150 : vector<20x256xi1>, vector<20x256xf32>
    %c100_85 = arith.constant 100 : index
    %c0_86 = arith.constant 0 : index
    %152 = vector.load %arg9[%c100_85, %c0_86] : memref<128x256xf32, #tpu.memory_space<vmem>>, vector<20x256xf32>
    tpu.vector_store %arg9[%c100_85, %c0_86], %151 {strides = array<i32>} : memref<128x256xf32, #tpu.memory_space<vmem>>, vector<20x256xf32>,
    %c1 = arith.constant 1 : index
    %c0_87 = arith.constant 0 : index
    %c0_88 = arith.constant 0 : index
    %153 = vector.load %arg2[%c1, %c0_87, %c0_88] : memref<5x4x128xf32, #tpu.memory_space<vmem>>, vector<1x4x128xf32>
    %154 = vector.shape_cast %153 : vector<1x4x128xf32> to vector<4x128xf32>
    %c0_89 = arith.constant 0 : index
    %c0_90 = arith.constant 0 : index
    %155 = vector.load %arg9[%c0_89, %c0_90] : memref<128x256xf32, #tpu.memory_space<vmem>>, vector<128x256xf32>
    %cst_91 = arith.constant dense<0.000000e+00> : vector<4x256xf32>
    %156 = tpu.matmul %154, %155, %cst_91 {dimension_numbers = #tpu.dot_dimension_numbers<[1], [0], [0], [1], [0, 0, 1, 1], [], []>} : vector<4x128xf32>, vector<128x256xf32>, vector<4x256xf32> -> vector<4x256xf32>
    %c1_92 = arith.constant 1 : index
    %c0_93 = arith.constant 0 : index
    %c0_94 = arith.constant 0 : index
    %157 = vector.load %arg3[%c1_92, %c0_93, %c0_94] : memref<5x4x1xf32, #tpu.memory_space<vmem>>, vector<1x4x1xf32>
    %158 = vector.shape_cast %157 : vector<1x4x1xf32> to vector<4x1xf32>
    %159 = vector.broadcast %158 : vector<4x1xf32> to vector<4x256xf32>
    %160 = arith.addf %156, %159 : vector<4x256xf32>
    %161 = arith.mulf %160, %160 : vector<4x256xf32>
    %162 = tpu.concatenate %160, %161 in 0 : vector<4x256xf32>, vector<4x256xf32> -> vector<8x256xf32>
    %c255_i32_95 = arith.constant 255 : i32
    %163 = tpu.dynamic_rotate %162 by %c255_i32_95 dim 1 : vector<8x256xf32>, i32 -> vector<8x256xf32>
    %c1_i32_96 = arith.constant 1 : i32
    %164 = tpu.dynamic_rotate %162 by %c1_i32_96 dim 1 : vector<8x256xf32>, i32 -> vector<8x256xf32>
    %165 = vector.shape_cast %21 : vector<1x256xi1> to vector<1x256xi1>
    %166 = vector.broadcast %165 : vector<1x256xi1> to vector<8x256xi1>
    %167 = arith.select %166, %163, %164 : vector<8x256xi1>, vector<8x256xf32>
    %168 = arith.addf %162, %167 : vector<8x256xf32>
    %c254_i32_97 = arith.constant 254 : i32
    %169 = tpu.dynamic_rotate %168 by %c254_i32_97 dim 1 : vector<8x256xf32>, i32 -> vector<8x256xf32>
    %c2_i32_98 = arith.constant 2 : i32
    %170 = tpu.dynamic_rotate %168 by %c2_i32_98 dim 1 : vector<8x256xf32>, i32 -> vector<8x256xf32>
    %171 = vector.shape_cast %25 : vector<1x256xi1> to vector<1x256xi1>
    %172 = vector.broadcast %171 : vector<1x256xi1> to vector<8x256xi1>
    %173 = arith.select %172, %169, %170 : vector<8x256xi1>, vector<8x256xf32>
    %174 = arith.addf %168, %173 : vector<8x256xf32>
    %c252_i32_99 = arith.constant 252 : i32
    %175 = tpu.dynamic_rotate %174 by %c252_i32_99 dim 1 : vector<8x256xf32>, i32 -> vector<8x256xf32>
    %c4_i32_100 = arith.constant 4 : i32
    %176 = tpu.dynamic_rotate %174 by %c4_i32_100 dim 1 : vector<8x256xf32>, i32 -> vector<8x256xf32>
    %177 = vector.shape_cast %29 : vector<1x256xi1> to vector<1x256xi1>
    %178 = vector.broadcast %177 : vector<1x256xi1> to vector<8x256xi1>
    %179 = arith.select %178, %175, %176 : vector<8x256xi1>, vector<8x256xf32>
    %180 = arith.addf %174, %179 : vector<8x256xf32>
    %c248_i32_101 = arith.constant 248 : i32
    %181 = tpu.dynamic_rotate %180 by %c248_i32_101 dim 1 : vector<8x256xf32>, i32 -> vector<8x256xf32>
    %c8_i32_102 = arith.constant 8 : i32
    %182 = tpu.dynamic_rotate %180 by %c8_i32_102 dim 1 : vector<8x256xf32>, i32 -> vector<8x256xf32>
    %183 = vector.shape_cast %33 : vector<1x256xi1> to vector<1x256xi1>
    %184 = vector.broadcast %183 : vector<1x256xi1> to vector<8x256xi1>
    %185 = arith.select %184, %181, %182 : vector<8x256xi1>, vector<8x256xf32>
    %186 = arith.addf %180, %185 : vector<8x256xf32>
    %187 = vector.extract_strided_slice %186 {offsets = [0, 0], sizes = [4, 256], strides = [1, 1]} : vector<8x256xf32> to vector<4x256xf32>
    %cst_103 = arith.constant 6.250000e-02 : f32
    %188 = vector.broadcast %cst_103 : f32 to vector<4x256xf32>
    %189 = arith.mulf %187, %188 : vector<4x256xf32>
    %190 = vector.extract_strided_slice %186 {offsets = [4, 0], sizes = [4, 256], strides = [1, 1]} : vector<8x256xf32> to vector<4x256xf32>
    %cst_104 = arith.constant 6.250000e-02 : f32
    %191 = vector.broadcast %cst_104 : f32 to vector<4x256xf32>
    %192 = arith.mulf %190, %191 : vector<4x256xf32>
    %193 = arith.mulf %189, %189 : vector<4x256xf32>
    %194 = arith.subf %192, %193 : vector<4x256xf32>
    %195 = arith.subf %160, %189 : vector<4x256xf32>
    %cst_105 = arith.constant 9.99999974E-6 : f32
    %196 = vector.broadcast %cst_105 : f32 to vector<4x256xf32>
    %197 = arith.addf %194, %196 : vector<4x256xf32>
    %198 = math.rsqrt %197 : vector<4x256xf32>
    %199 = arith.mulf %195, %198 : vector<4x256xf32>
    %c1_106 = arith.constant 1 : index
    %c0_107 = arith.constant 0 : index
    %c0_108 = arith.constant 0 : index
    %200 = vector.load %arg4[%c1_106, %c0_107, %c0_108] : memref<5x1x256xf32, #tpu.memory_space<vmem>>, vector<1x1x256xf32>
    %201 = vector.shape_cast %200 : vector<1x1x256xf32> to vector<1x256xf32>
    %202 = vector.broadcast %201 : vector<1x256xf32> to vector<4x256xf32>
    %203 = arith.mulf %199, %202 : vector<4x256xf32>
    %c1_109 = arith.constant 1 : index
    %c0_110 = arith.constant 0 : index
    %c0_111 = arith.constant 0 : index
    %204 = vector.load %arg5[%c1_109, %c0_110, %c0_111] : memref<5x1x256xf32, #tpu.memory_space<vmem>>, vector<1x1x256xf32>
    %205 = vector.shape_cast %204 : vector<1x1x256xf32> to vector<1x256xf32>
    %206 = vector.broadcast %205 : vector<1x256xf32> to vector<4x256xf32>
    %207 = arith.addf %203, %206 : vector<4x256xf32>
    %cst_112 = arith.constant 0.000000e+00 : f32
    %208 = vector.broadcast %cst_112 : f32 to vector<4x256xf32>
    %209 = arith.cmpf ogt, %207, %208 : vector<4x256xf32>
    %c1_113 = arith.constant 1 : index
    %c0_114 = arith.constant 0 : index
    %c0_115 = arith.constant 0 : index
    %210 = vector.load %arg6[%c1_113, %c0_114, %c0_115] : memref<5x4x1xf32, #tpu.memory_space<vmem>>, vector<1x4x1xf32>
    %211 = vector.shape_cast %210 : vector<1x4x1xf32> to vector<4x1xf32>
    %212 = vector.broadcast %211 : vector<4x1xf32> to vector<4x256xf32>
    %213 = arith.mulf %212, %207 : vector<4x256xf32>
    %214 = arith.select %209, %207, %213 : vector<4x256xi1>, vector<4x256xf32>
    %c8 = arith.constant 8 : index
    %c384_116 = arith.constant 384 : index
    %215 = vector.load %arg8[%c8, %c384_116] : memref<20x768xf32, #tpu.memory_space<vmem>>, vector<4x256xf32>
    tpu.vector_store %arg8[%c8, %c384_116], %214 {strides = array<i32>} : memref<20x768xf32, #tpu.memory_space<vmem>>, vector<4x256xf32>,
    %c0_117 = arith.constant 0 : index
    %c319 = arith.constant 319 : index
    %216 = vector.load %arg8[%c0_117, %c319] : memref<20x768xf32, #tpu.memory_space<vmem>>, vector<20x256xf32>
    %cst_118 = arith.constant 0.000000e+00 : f32
    %217 = vector.shape_cast %15 : vector<1x256xi1> to vector<1x256xi1>
    %218 = vector.broadcast %217 : vector<1x256xi1> to vector<20x256xi1>
    %219 = vector.broadcast %cst_118 : f32 to vector<20x256xf32>
    %220 = arith.select %218, %216, %219 : vector<20x256xi1>, vector<20x256xf32>
    %c0_119 = arith.constant 0 : index
    %c0_120 = arith.constant 0 : index
    %221 = vector.load %arg9[%c0_119, %c0_120] : memref<128x256xf32, #tpu.memory_space<vmem>>, vector<20x256xf32>
    tpu.vector_store %arg9[%c0_119, %c0_120], %220 {strides = array<i32>} : memref<128x256xf32, #tpu.memory_space<vmem>>, vector<20x256xf32>,
    %c0_121 = arith.constant 0 : index
    %c320 = arith.constant 320 : index
    %222 = vector.load %arg8[%c0_121, %c320] : memref<20x768xf32, #tpu.memory_space<vmem>>, vector<20x256xf32>
    %c20_122 = arith.constant 20 : index
    %c0_123 = arith.constant 0 : index
    %223 = vector.load %arg9[%c20_122, %c0_123] : memref<128x256xf32, #tpu.memory_space<vmem>>, vector<20x256xf32>
    tpu.vector_store %arg9[%c20_122, %c0_123], %222 {strides = array<i32>} : memref<128x256xf32, #tpu.memory_space<vmem>>, vector<20x256xf32>,
    %c0_124 = arith.constant 0 : index
    %c321 = arith.constant 321 : index
    %224 = vector.load %arg8[%c0_124, %c321] : memref<20x768xf32, #tpu.memory_space<vmem>>, vector<20x256xf32>
    %cst_125 = arith.constant 0.000000e+00 : f32
    %225 = vector.shape_cast %17 : vector<1x256xi1> to vector<1x256xi1>
    %226 = vector.broadcast %225 : vector<1x256xi1> to vector<20x256xi1>
    %227 = vector.broadcast %cst_125 : f32 to vector<20x256xf32>
    %228 = arith.select %226, %224, %227 : vector<20x256xi1>, vector<20x256xf32>
    %c40_126 = arith.constant 40 : index
    %c0_127 = arith.constant 0 : index
    %229 = vector.load %arg9[%c40_126, %c0_127] : memref<128x256xf32, #tpu.memory_space<vmem>>, vector<20x256xf32>
    tpu.vector_store %arg9[%c40_126, %c0_127], %228 {strides = array<i32>} : memref<128x256xf32, #tpu.memory_space<vmem>>, vector<20x256xf32>,
    %c0_128 = arith.constant 0 : index
    %c383_129 = arith.constant 383 : index
    %230 = vector.load %arg8[%c0_128, %c383_129] : memref<20x768xf32, #tpu.memory_space<vmem>>, vector<20x256xf32>
    %cst_130 = arith.constant 0.000000e+00 : f32
    %231 = vector.shape_cast %15 : vector<1x256xi1> to vector<1x256xi1>
    %232 = vector.broadcast %231 : vector<1x256xi1> to vector<20x256xi1>
    %233 = vector.broadcast %cst_130 : f32 to vector<20x256xf32>
    %234 = arith.select %232, %230, %233 : vector<20x256xi1>, vector<20x256xf32>
    %c60_131 = arith.constant 60 : index
    %c0_132 = arith.constant 0 : index
    %235 = vector.load %arg9[%c60_131, %c0_132] : memref<128x256xf32, #tpu.memory_space<vmem>>, vector<20x256xf32>
    tpu.vector_store %arg9[%c60_131, %c0_132], %234 {strides = array<i32>} : memref<128x256xf32, #tpu.memory_space<vmem>>, vector<20x256xf32>,
    %c0_133 = arith.constant 0 : index
    %c384_134 = arith.constant 384 : index
    %236 = vector.load %arg8[%c0_133, %c384_134] : memref<20x768xf32, #tpu.memory_space<vmem>>, vector<20x256xf32>
    %c80_135 = arith.constant 80 : index
    %c0_136 = arith.constant 0 : index
    %237 = vector.load %arg9[%c80_135, %c0_136] : memref<128x256xf32, #tpu.memory_space<vmem>>, vector<20x256xf32>
    tpu.vector_store %arg9[%c80_135, %c0_136], %236 {strides = array<i32>} : memref<128x256xf32, #tpu.memory_space<vmem>>, vector<20x256xf32>,
    %c0_137 = arith.constant 0 : index
    %c385_138 = arith.constant 385 : index
    %238 = vector.load %arg8[%c0_137, %c385_138] : memref<20x768xf32, #tpu.memory_space<vmem>>, vector<20x256xf32>
    %cst_139 = arith.constant 0.000000e+00 : f32
    %239 = vector.shape_cast %17 : vector<1x256xi1> to vector<1x256xi1>
    %240 = vector.broadcast %239 : vector<1x256xi1> to vector<20x256xi1>
    %241 = vector.broadcast %cst_139 : f32 to vector<20x256xf32>
    %242 = arith.select %240, %238, %241 : vector<20x256xi1>, vector<20x256xf32>
    %c100_140 = arith.constant 100 : index
    %c0_141 = arith.constant 0 : index
    %243 = vector.load %arg9[%c100_140, %c0_141] : memref<128x256xf32, #tpu.memory_space<vmem>>, vector<20x256xf32>
    tpu.vector_store %arg9[%c100_140, %c0_141], %242 {strides = array<i32>} : memref<128x256xf32, #tpu.memory_space<vmem>>, vector<20x256xf32>,
    %c2 = arith.constant 2 : index
    %c0_142 = arith.constant 0 : index
    %c0_143 = arith.constant 0 : index
    %244 = vector.load %arg2[%c2, %c0_142, %c0_143] : memref<5x4x128xf32, #tpu.memory_space<vmem>>, vector<1x4x128xf32>
    %245 = vector.shape_cast %244 : vector<1x4x128xf32> to vector<4x128xf32>
    %c0_144 = arith.constant 0 : index
    %c0_145 = arith.constant 0 : index
    %246 = vector.load %arg9[%c0_144, %c0_145] : memref<128x256xf32, #tpu.memory_space<vmem>>, vector<128x256xf32>
    %cst_146 = arith.constant dense<0.000000e+00> : vector<4x256xf32>
    %247 = tpu.matmul %245, %246, %cst_146 {dimension_numbers = #tpu.dot_dimension_numbers<[1], [0], [0], [1], [0, 0, 1, 1], [], []>} : vector<4x128xf32>, vector<128x256xf32>, vector<4x256xf32> -> vector<4x256xf32>
    %c2_147 = arith.constant 2 : index
    %c0_148 = arith.constant 0 : index
    %c0_149 = arith.constant 0 : index
    %248 = vector.load %arg3[%c2_147, %c0_148, %c0_149] : memref<5x4x1xf32, #tpu.memory_space<vmem>>, vector<1x4x1xf32>
    %249 = vector.shape_cast %248 : vector<1x4x1xf32> to vector<4x1xf32>
    %250 = vector.broadcast %249 : vector<4x1xf32> to vector<4x256xf32>
    %251 = arith.addf %247, %250 : vector<4x256xf32>
    %252 = arith.mulf %251, %251 : vector<4x256xf32>
    %253 = tpu.concatenate %251, %252 in 0 : vector<4x256xf32>, vector<4x256xf32> -> vector<8x256xf32>
    %c255_i32_150 = arith.constant 255 : i32
    %254 = tpu.dynamic_rotate %253 by %c255_i32_150 dim 1 : vector<8x256xf32>, i32 -> vector<8x256xf32>
    %c1_i32_151 = arith.constant 1 : i32
    %255 = tpu.dynamic_rotate %253 by %c1_i32_151 dim 1 : vector<8x256xf32>, i32 -> vector<8x256xf32>
    %256 = vector.shape_cast %21 : vector<1x256xi1> to vector<1x256xi1>
    %257 = vector.broadcast %256 : vector<1x256xi1> to vector<8x256xi1>
    %258 = arith.select %257, %254, %255 : vector<8x256xi1>, vector<8x256xf32>
    %259 = arith.addf %253, %258 : vector<8x256xf32>
    %c254_i32_152 = arith.constant 254 : i32
    %260 = tpu.dynamic_rotate %259 by %c254_i32_152 dim 1 : vector<8x256xf32>, i32 -> vector<8x256xf32>
    %c2_i32_153 = arith.constant 2 : i32
    %261 = tpu.dynamic_rotate %259 by %c2_i32_153 dim 1 : vector<8x256xf32>, i32 -> vector<8x256xf32>
    %262 = vector.shape_cast %25 : vector<1x256xi1> to vector<1x256xi1>
    %263 = vector.broadcast %262 : vector<1x256xi1> to vector<8x256xi1>
    %264 = arith.select %263, %260, %261 : vector<8x256xi1>, vector<8x256xf32>
    %265 = arith.addf %259, %264 : vector<8x256xf32>
    %c252_i32_154 = arith.constant 252 : i32
    %266 = tpu.dynamic_rotate %265 by %c252_i32_154 dim 1 : vector<8x256xf32>, i32 -> vector<8x256xf32>
    %c4_i32_155 = arith.constant 4 : i32
    %267 = tpu.dynamic_rotate %265 by %c4_i32_155 dim 1 : vector<8x256xf32>, i32 -> vector<8x256xf32>
    %268 = vector.shape_cast %29 : vector<1x256xi1> to vector<1x256xi1>
    %269 = vector.broadcast %268 : vector<1x256xi1> to vector<8x256xi1>
    %270 = arith.select %269, %266, %267 : vector<8x256xi1>, vector<8x256xf32>
    %271 = arith.addf %265, %270 : vector<8x256xf32>
    %c248_i32_156 = arith.constant 248 : i32
    %272 = tpu.dynamic_rotate %271 by %c248_i32_156 dim 1 : vector<8x256xf32>, i32 -> vector<8x256xf32>
    %c8_i32_157 = arith.constant 8 : i32
    %273 = tpu.dynamic_rotate %271 by %c8_i32_157 dim 1 : vector<8x256xf32>, i32 -> vector<8x256xf32>
    %274 = vector.shape_cast %33 : vector<1x256xi1> to vector<1x256xi1>
    %275 = vector.broadcast %274 : vector<1x256xi1> to vector<8x256xi1>
    %276 = arith.select %275, %272, %273 : vector<8x256xi1>, vector<8x256xf32>
    %277 = arith.addf %271, %276 : vector<8x256xf32>
    %278 = vector.extract_strided_slice %277 {offsets = [0, 0], sizes = [4, 256], strides = [1, 1]} : vector<8x256xf32> to vector<4x256xf32>
    %cst_158 = arith.constant 6.250000e-02 : f32
    %279 = vector.broadcast %cst_158 : f32 to vector<4x256xf32>
    %280 = arith.mulf %278, %279 : vector<4x256xf32>
    %281 = vector.extract_strided_slice %277 {offsets = [4, 0], sizes = [4, 256], strides = [1, 1]} : vector<8x256xf32> to vector<4x256xf32>
    %cst_159 = arith.constant 6.250000e-02 : f32
    %282 = vector.broadcast %cst_159 : f32 to vector<4x256xf32>
    %283 = arith.mulf %281, %282 : vector<4x256xf32>
    %284 = arith.mulf %280, %280 : vector<4x256xf32>
    %285 = arith.subf %283, %284 : vector<4x256xf32>
    %286 = arith.subf %251, %280 : vector<4x256xf32>
    %cst_160 = arith.constant 9.99999974E-6 : f32
    %287 = vector.broadcast %cst_160 : f32 to vector<4x256xf32>
    %288 = arith.addf %285, %287 : vector<4x256xf32>
    %289 = math.rsqrt %288 : vector<4x256xf32>
    %290 = arith.mulf %286, %289 : vector<4x256xf32>
    %c2_161 = arith.constant 2 : index
    %c0_162 = arith.constant 0 : index
    %c0_163 = arith.constant 0 : index
    %291 = vector.load %arg4[%c2_161, %c0_162, %c0_163] : memref<5x1x256xf32, #tpu.memory_space<vmem>>, vector<1x1x256xf32>
    %292 = vector.shape_cast %291 : vector<1x1x256xf32> to vector<1x256xf32>
    %293 = vector.broadcast %292 : vector<1x256xf32> to vector<4x256xf32>
    %294 = arith.mulf %290, %293 : vector<4x256xf32>
    %c2_164 = arith.constant 2 : index
    %c0_165 = arith.constant 0 : index
    %c0_166 = arith.constant 0 : index
    %295 = vector.load %arg5[%c2_164, %c0_165, %c0_166] : memref<5x1x256xf32, #tpu.memory_space<vmem>>, vector<1x1x256xf32>
    %296 = vector.shape_cast %295 : vector<1x1x256xf32> to vector<1x256xf32>
    %297 = vector.broadcast %296 : vector<1x256xf32> to vector<4x256xf32>
    %298 = arith.addf %294, %297 : vector<4x256xf32>
    %cst_167 = arith.constant 0.000000e+00 : f32
    %299 = vector.broadcast %cst_167 : f32 to vector<4x256xf32>
    %300 = arith.cmpf ogt, %298, %299 : vector<4x256xf32>
    %c2_168 = arith.constant 2 : index
    %c0_169 = arith.constant 0 : index
    %c0_170 = arith.constant 0 : index
    %301 = vector.load %arg6[%c2_168, %c0_169, %c0_170] : memref<5x4x1xf32, #tpu.memory_space<vmem>>, vector<1x4x1xf32>
    %302 = vector.shape_cast %301 : vector<1x4x1xf32> to vector<4x1xf32>
    %303 = vector.broadcast %302 : vector<4x1xf32> to vector<4x256xf32>
    %304 = arith.mulf %303, %298 : vector<4x256xf32>
    %305 = arith.select %300, %298, %304 : vector<4x256xi1>, vector<4x256xf32>
    %c12 = arith.constant 12 : index
    %c384_171 = arith.constant 384 : index
    %306 = vector.load %arg8[%c12, %c384_171] : memref<20x768xf32, #tpu.memory_space<vmem>>, vector<4x256xf32>
    tpu.vector_store %arg8[%c12, %c384_171], %305 {strides = array<i32>} : memref<20x768xf32, #tpu.memory_space<vmem>>, vector<4x256xf32>,
    %c0_172 = arith.constant 0 : index
    %c255 = arith.constant 255 : index
    %307 = vector.load %arg8[%c0_172, %c255] : memref<20x768xf32, #tpu.memory_space<vmem>>, vector<20x256xf32>
    %cst_173 = arith.constant 0.000000e+00 : f32
    %308 = vector.shape_cast %15 : vector<1x256xi1> to vector<1x256xi1>
    %309 = vector.broadcast %308 : vector<1x256xi1> to vector<20x256xi1>
    %310 = vector.broadcast %cst_173 : f32 to vector<20x256xf32>
    %311 = arith.select %309, %307, %310 : vector<20x256xi1>, vector<20x256xf32>
    %c0_174 = arith.constant 0 : index
    %c0_175 = arith.constant 0 : index
    %312 = vector.load %arg9[%c0_174, %c0_175] : memref<128x256xf32, #tpu.memory_space<vmem>>, vector<20x256xf32>
    tpu.vector_store %arg9[%c0_174, %c0_175], %311 {strides = array<i32>} : memref<128x256xf32, #tpu.memory_space<vmem>>, vector<20x256xf32>,
    %c0_176 = arith.constant 0 : index
    %c256 = arith.constant 256 : index
    %313 = vector.load %arg8[%c0_176, %c256] : memref<20x768xf32, #tpu.memory_space<vmem>>, vector<20x256xf32>
    %c20_177 = arith.constant 20 : index
    %c0_178 = arith.constant 0 : index
    %314 = vector.load %arg9[%c20_177, %c0_178] : memref<128x256xf32, #tpu.memory_space<vmem>>, vector<20x256xf32>
    tpu.vector_store %arg9[%c20_177, %c0_178], %313 {strides = array<i32>} : memref<128x256xf32, #tpu.memory_space<vmem>>, vector<20x256xf32>,
    %c0_179 = arith.constant 0 : index
    %c257 = arith.constant 257 : index
    %315 = vector.load %arg8[%c0_179, %c257] : memref<20x768xf32, #tpu.memory_space<vmem>>, vector<20x256xf32>
    %cst_180 = arith.constant 0.000000e+00 : f32
    %316 = vector.shape_cast %17 : vector<1x256xi1> to vector<1x256xi1>
    %317 = vector.broadcast %316 : vector<1x256xi1> to vector<20x256xi1>
    %318 = vector.broadcast %cst_180 : f32 to vector<20x256xf32>
    %319 = arith.select %317, %315, %318 : vector<20x256xi1>, vector<20x256xf32>
    %c40_181 = arith.constant 40 : index
    %c0_182 = arith.constant 0 : index
    %320 = vector.load %arg9[%c40_181, %c0_182] : memref<128x256xf32, #tpu.memory_space<vmem>>, vector<20x256xf32>
    tpu.vector_store %arg9[%c40_181, %c0_182], %319 {strides = array<i32>} : memref<128x256xf32, #tpu.memory_space<vmem>>, vector<20x256xf32>,
    %c0_183 = arith.constant 0 : index
    %c383_184 = arith.constant 383 : index
    %321 = vector.load %arg8[%c0_183, %c383_184] : memref<20x768xf32, #tpu.memory_space<vmem>>, vector<20x256xf32>
    %cst_185 = arith.constant 0.000000e+00 : f32
    %322 = vector.shape_cast %15 : vector<1x256xi1> to vector<1x256xi1>
    %323 = vector.broadcast %322 : vector<1x256xi1> to vector<20x256xi1>
    %324 = vector.broadcast %cst_185 : f32 to vector<20x256xf32>
    %325 = arith.select %323, %321, %324 : vector<20x256xi1>, vector<20x256xf32>
    %c60_186 = arith.constant 60 : index
    %c0_187 = arith.constant 0 : index
    %326 = vector.load %arg9[%c60_186, %c0_187] : memref<128x256xf32, #tpu.memory_space<vmem>>, vector<20x256xf32>
    tpu.vector_store %arg9[%c60_186, %c0_187], %325 {strides = array<i32>} : memref<128x256xf32, #tpu.memory_space<vmem>>, vector<20x256xf32>,
    %c0_188 = arith.constant 0 : index
    %c384_189 = arith.constant 384 : index
    %327 = vector.load %arg8[%c0_188, %c384_189] : memref<20x768xf32, #tpu.memory_space<vmem>>, vector<20x256xf32>
    %c80_190 = arith.constant 80 : index
    %c0_191 = arith.constant 0 : index
    %328 = vector.load %arg9[%c80_190, %c0_191] : memref<128x256xf32, #tpu.memory_space<vmem>>, vector<20x256xf32>
    tpu.vector_store %arg9[%c80_190, %c0_191], %327 {strides = array<i32>} : memref<128x256xf32, #tpu.memory_space<vmem>>, vector<20x256xf32>,
    %c0_192 = arith.constant 0 : index
    %c385_193 = arith.constant 385 : index
    %329 = vector.load %arg8[%c0_192, %c385_193] : memref<20x768xf32, #tpu.memory_space<vmem>>, vector<20x256xf32>
    %cst_194 = arith.constant 0.000000e+00 : f32
    %330 = vector.shape_cast %17 : vector<1x256xi1> to vector<1x256xi1>
    %331 = vector.broadcast %330 : vector<1x256xi1> to vector<20x256xi1>
    %332 = vector.broadcast %cst_194 : f32 to vector<20x256xf32>
    %333 = arith.select %331, %329, %332 : vector<20x256xi1>, vector<20x256xf32>
    %c100_195 = arith.constant 100 : index
    %c0_196 = arith.constant 0 : index
    %334 = vector.load %arg9[%c100_195, %c0_196] : memref<128x256xf32, #tpu.memory_space<vmem>>, vector<20x256xf32>
    tpu.vector_store %arg9[%c100_195, %c0_196], %333 {strides = array<i32>} : memref<128x256xf32, #tpu.memory_space<vmem>>, vector<20x256xf32>,
    %c3 = arith.constant 3 : index
    %c0_197 = arith.constant 0 : index
    %c0_198 = arith.constant 0 : index
    %335 = vector.load %arg2[%c3, %c0_197, %c0_198] : memref<5x4x128xf32, #tpu.memory_space<vmem>>, vector<1x4x128xf32>
    %336 = vector.shape_cast %335 : vector<1x4x128xf32> to vector<4x128xf32>
    %c0_199 = arith.constant 0 : index
    %c0_200 = arith.constant 0 : index
    %337 = vector.load %arg9[%c0_199, %c0_200] : memref<128x256xf32, #tpu.memory_space<vmem>>, vector<128x256xf32>
    %cst_201 = arith.constant dense<0.000000e+00> : vector<4x256xf32>
    %338 = tpu.matmul %336, %337, %cst_201 {dimension_numbers = #tpu.dot_dimension_numbers<[1], [0], [0], [1], [0, 0, 1, 1], [], []>} : vector<4x128xf32>, vector<128x256xf32>, vector<4x256xf32> -> vector<4x256xf32>
    %c3_202 = arith.constant 3 : index
    %c0_203 = arith.constant 0 : index
    %c0_204 = arith.constant 0 : index
    %339 = vector.load %arg3[%c3_202, %c0_203, %c0_204] : memref<5x4x1xf32, #tpu.memory_space<vmem>>, vector<1x4x1xf32>
    %340 = vector.shape_cast %339 : vector<1x4x1xf32> to vector<4x1xf32>
    %341 = vector.broadcast %340 : vector<4x1xf32> to vector<4x256xf32>
    %342 = arith.addf %338, %341 : vector<4x256xf32>
    %343 = arith.mulf %342, %342 : vector<4x256xf32>
    %344 = tpu.concatenate %342, %343 in 0 : vector<4x256xf32>, vector<4x256xf32> -> vector<8x256xf32>
    %c255_i32_205 = arith.constant 255 : i32
    %345 = tpu.dynamic_rotate %344 by %c255_i32_205 dim 1 : vector<8x256xf32>, i32 -> vector<8x256xf32>
    %c1_i32_206 = arith.constant 1 : i32
    %346 = tpu.dynamic_rotate %344 by %c1_i32_206 dim 1 : vector<8x256xf32>, i32 -> vector<8x256xf32>
    %347 = vector.shape_cast %21 : vector<1x256xi1> to vector<1x256xi1>
    %348 = vector.broadcast %347 : vector<1x256xi1> to vector<8x256xi1>
    %349 = arith.select %348, %345, %346 : vector<8x256xi1>, vector<8x256xf32>
    %350 = arith.addf %344, %349 : vector<8x256xf32>
    %c254_i32_207 = arith.constant 254 : i32
    %351 = tpu.dynamic_rotate %350 by %c254_i32_207 dim 1 : vector<8x256xf32>, i32 -> vector<8x256xf32>
    %c2_i32_208 = arith.constant 2 : i32
    %352 = tpu.dynamic_rotate %350 by %c2_i32_208 dim 1 : vector<8x256xf32>, i32 -> vector<8x256xf32>
    %353 = vector.shape_cast %25 : vector<1x256xi1> to vector<1x256xi1>
    %354 = vector.broadcast %353 : vector<1x256xi1> to vector<8x256xi1>
    %355 = arith.select %354, %351, %352 : vector<8x256xi1>, vector<8x256xf32>
    %356 = arith.addf %350, %355 : vector<8x256xf32>
    %c252_i32_209 = arith.constant 252 : i32
    %357 = tpu.dynamic_rotate %356 by %c252_i32_209 dim 1 : vector<8x256xf32>, i32 -> vector<8x256xf32>
    %c4_i32_210 = arith.constant 4 : i32
    %358 = tpu.dynamic_rotate %356 by %c4_i32_210 dim 1 : vector<8x256xf32>, i32 -> vector<8x256xf32>
    %359 = vector.shape_cast %29 : vector<1x256xi1> to vector<1x256xi1>
    %360 = vector.broadcast %359 : vector<1x256xi1> to vector<8x256xi1>
    %361 = arith.select %360, %357, %358 : vector<8x256xi1>, vector<8x256xf32>
    %362 = arith.addf %356, %361 : vector<8x256xf32>
    %c248_i32_211 = arith.constant 248 : i32
    %363 = tpu.dynamic_rotate %362 by %c248_i32_211 dim 1 : vector<8x256xf32>, i32 -> vector<8x256xf32>
    %c8_i32_212 = arith.constant 8 : i32
    %364 = tpu.dynamic_rotate %362 by %c8_i32_212 dim 1 : vector<8x256xf32>, i32 -> vector<8x256xf32>
    %365 = vector.shape_cast %33 : vector<1x256xi1> to vector<1x256xi1>
    %366 = vector.broadcast %365 : vector<1x256xi1> to vector<8x256xi1>
    %367 = arith.select %366, %363, %364 : vector<8x256xi1>, vector<8x256xf32>
    %368 = arith.addf %362, %367 : vector<8x256xf32>
    %369 = vector.extract_strided_slice %368 {offsets = [0, 0], sizes = [4, 256], strides = [1, 1]} : vector<8x256xf32> to vector<4x256xf32>
    %cst_213 = arith.constant 6.250000e-02 : f32
    %370 = vector.broadcast %cst_213 : f32 to vector<4x256xf32>
    %371 = arith.mulf %369, %370 : vector<4x256xf32>
    %372 = vector.extract_strided_slice %368 {offsets = [4, 0], sizes = [4, 256], strides = [1, 1]} : vector<8x256xf32> to vector<4x256xf32>
    %cst_214 = arith.constant 6.250000e-02 : f32
    %373 = vector.broadcast %cst_214 : f32 to vector<4x256xf32>
    %374 = arith.mulf %372, %373 : vector<4x256xf32>
    %375 = arith.mulf %371, %371 : vector<4x256xf32>
    %376 = arith.subf %374, %375 : vector<4x256xf32>
    %377 = arith.subf %342, %371 : vector<4x256xf32>
    %cst_215 = arith.constant 9.99999974E-6 : f32
    %378 = vector.broadcast %cst_215 : f32 to vector<4x256xf32>
    %379 = arith.addf %376, %378 : vector<4x256xf32>
    %380 = math.rsqrt %379 : vector<4x256xf32>
    %381 = arith.mulf %377, %380 : vector<4x256xf32>
    %c3_216 = arith.constant 3 : index
    %c0_217 = arith.constant 0 : index
    %c0_218 = arith.constant 0 : index
    %382 = vector.load %arg4[%c3_216, %c0_217, %c0_218] : memref<5x1x256xf32, #tpu.memory_space<vmem>>, vector<1x1x256xf32>
    %383 = vector.shape_cast %382 : vector<1x1x256xf32> to vector<1x256xf32>
    %384 = vector.broadcast %383 : vector<1x256xf32> to vector<4x256xf32>
    %385 = arith.mulf %381, %384 : vector<4x256xf32>
    %c3_219 = arith.constant 3 : index
    %c0_220 = arith.constant 0 : index
    %c0_221 = arith.constant 0 : index
    %386 = vector.load %arg5[%c3_219, %c0_220, %c0_221] : memref<5x1x256xf32, #tpu.memory_space<vmem>>, vector<1x1x256xf32>
    %387 = vector.shape_cast %386 : vector<1x1x256xf32> to vector<1x256xf32>
    %388 = vector.broadcast %387 : vector<1x256xf32> to vector<4x256xf32>
    %389 = arith.addf %385, %388 : vector<4x256xf32>
    %cst_222 = arith.constant 0.000000e+00 : f32
    %390 = vector.broadcast %cst_222 : f32 to vector<4x256xf32>
    %391 = arith.cmpf ogt, %389, %390 : vector<4x256xf32>
    %c3_223 = arith.constant 3 : index
    %c0_224 = arith.constant 0 : index
    %c0_225 = arith.constant 0 : index
    %392 = vector.load %arg6[%c3_223, %c0_224, %c0_225] : memref<5x4x1xf32, #tpu.memory_space<vmem>>, vector<1x4x1xf32>
    %393 = vector.shape_cast %392 : vector<1x4x1xf32> to vector<4x1xf32>
    %394 = vector.broadcast %393 : vector<4x1xf32> to vector<4x256xf32>
    %395 = arith.mulf %394, %389 : vector<4x256xf32>
    %396 = arith.select %391, %389, %395 : vector<4x256xi1>, vector<4x256xf32>
    %c16 = arith.constant 16 : index
    %c384_226 = arith.constant 384 : index
    %397 = vector.load %arg8[%c16, %c384_226] : memref<20x768xf32, #tpu.memory_space<vmem>>, vector<4x256xf32>
    tpu.vector_store %arg8[%c16, %c384_226], %396 {strides = array<i32>} : memref<20x768xf32, #tpu.memory_space<vmem>>, vector<4x256xf32>,
    %c0_227 = arith.constant 0 : index
    %c127 = arith.constant 127 : index
    %398 = vector.load %arg8[%c0_227, %c127] : memref<20x768xf32, #tpu.memory_space<vmem>>, vector<20x256xf32>
    %cst_228 = arith.constant 0.000000e+00 : f32
    %399 = vector.shape_cast %15 : vector<1x256xi1> to vector<1x256xi1>
    %400 = vector.broadcast %399 : vector<1x256xi1> to vector<20x256xi1>
    %401 = vector.broadcast %cst_228 : f32 to vector<20x256xf32>
    %402 = arith.select %400, %398, %401 : vector<20x256xi1>, vector<20x256xf32>
    %c0_229 = arith.constant 0 : index
    %c0_230 = arith.constant 0 : index
    %403 = vector.load %arg9[%c0_229, %c0_230] : memref<128x256xf32, #tpu.memory_space<vmem>>, vector<20x256xf32>
    tpu.vector_store %arg9[%c0_229, %c0_230], %402 {strides = array<i32>} : memref<128x256xf32, #tpu.memory_space<vmem>>, vector<20x256xf32>,
    %c0_231 = arith.constant 0 : index
    %c128 = arith.constant 128 : index
    %404 = vector.load %arg8[%c0_231, %c128] : memref<20x768xf32, #tpu.memory_space<vmem>>, vector<20x256xf32>
    %c20_232 = arith.constant 20 : index
    %c0_233 = arith.constant 0 : index
    %405 = vector.load %arg9[%c20_232, %c0_233] : memref<128x256xf32, #tpu.memory_space<vmem>>, vector<20x256xf32>
    tpu.vector_store %arg9[%c20_232, %c0_233], %404 {strides = array<i32>} : memref<128x256xf32, #tpu.memory_space<vmem>>, vector<20x256xf32>,
    %c0_234 = arith.constant 0 : index
    %c129 = arith.constant 129 : index
    %406 = vector.load %arg8[%c0_234, %c129] : memref<20x768xf32, #tpu.memory_space<vmem>>, vector<20x256xf32>
    %cst_235 = arith.constant 0.000000e+00 : f32
    %407 = vector.shape_cast %17 : vector<1x256xi1> to vector<1x256xi1>
    %408 = vector.broadcast %407 : vector<1x256xi1> to vector<20x256xi1>
    %409 = vector.broadcast %cst_235 : f32 to vector<20x256xf32>
    %410 = arith.select %408, %406, %409 : vector<20x256xi1>, vector<20x256xf32>
    %c40_236 = arith.constant 40 : index
    %c0_237 = arith.constant 0 : index
    %411 = vector.load %arg9[%c40_236, %c0_237] : memref<128x256xf32, #tpu.memory_space<vmem>>, vector<20x256xf32>
    tpu.vector_store %arg9[%c40_236, %c0_237], %410 {strides = array<i32>} : memref<128x256xf32, #tpu.memory_space<vmem>>, vector<20x256xf32>,
    %c0_238 = arith.constant 0 : index
    %c383_239 = arith.constant 383 : index
    %412 = vector.load %arg8[%c0_238, %c383_239] : memref<20x768xf32, #tpu.memory_space<vmem>>, vector<20x256xf32>
    %cst_240 = arith.constant 0.000000e+00 : f32
    %413 = vector.shape_cast %15 : vector<1x256xi1> to vector<1x256xi1>
    %414 = vector.broadcast %413 : vector<1x256xi1> to vector<20x256xi1>
    %415 = vector.broadcast %cst_240 : f32 to vector<20x256xf32>
    %416 = arith.select %414, %412, %415 : vector<20x256xi1>, vector<20x256xf32>
    %c60_241 = arith.constant 60 : index
    %c0_242 = arith.constant 0 : index
    %417 = vector.load %arg9[%c60_241, %c0_242] : memref<128x256xf32, #tpu.memory_space<vmem>>, vector<20x256xf32>
    tpu.vector_store %arg9[%c60_241, %c0_242], %416 {strides = array<i32>} : memref<128x256xf32, #tpu.memory_space<vmem>>, vector<20x256xf32>,
    %c0_243 = arith.constant 0 : index
    %c384_244 = arith.constant 384 : index
    %418 = vector.load %arg8[%c0_243, %c384_244] : memref<20x768xf32, #tpu.memory_space<vmem>>, vector<20x256xf32>
    %c80_245 = arith.constant 80 : index
    %c0_246 = arith.constant 0 : index
    %419 = vector.load %arg9[%c80_245, %c0_246] : memref<128x256xf32, #tpu.memory_space<vmem>>, vector<20x256xf32>
    tpu.vector_store %arg9[%c80_245, %c0_246], %418 {strides = array<i32>} : memref<128x256xf32, #tpu.memory_space<vmem>>, vector<20x256xf32>,
    %c0_247 = arith.constant 0 : index
    %c385_248 = arith.constant 385 : index
    %420 = vector.load %arg8[%c0_247, %c385_248] : memref<20x768xf32, #tpu.memory_space<vmem>>, vector<20x256xf32>
    %cst_249 = arith.constant 0.000000e+00 : f32
    %421 = vector.shape_cast %17 : vector<1x256xi1> to vector<1x256xi1>
    %422 = vector.broadcast %421 : vector<1x256xi1> to vector<20x256xi1>
    %423 = vector.broadcast %cst_249 : f32 to vector<20x256xf32>
    %424 = arith.select %422, %420, %423 : vector<20x256xi1>, vector<20x256xf32>
    %c100_250 = arith.constant 100 : index
    %c0_251 = arith.constant 0 : index
    %425 = vector.load %arg9[%c100_250, %c0_251] : memref<128x256xf32, #tpu.memory_space<vmem>>, vector<20x256xf32>
    tpu.vector_store %arg9[%c100_250, %c0_251], %424 {strides = array<i32>} : memref<128x256xf32, #tpu.memory_space<vmem>>, vector<20x256xf32>,
    %c4_252 = arith.constant 4 : index
    %c0_253 = arith.constant 0 : index
    %c0_254 = arith.constant 0 : index
    %426 = vector.load %arg2[%c4_252, %c0_253, %c0_254] : memref<5x4x128xf32, #tpu.memory_space<vmem>>, vector<1x4x128xf32>
    %427 = vector.shape_cast %426 : vector<1x4x128xf32> to vector<4x128xf32>
    %c0_255 = arith.constant 0 : index
    %c0_256 = arith.constant 0 : index
    %428 = vector.load %arg9[%c0_255, %c0_256] : memref<128x256xf32, #tpu.memory_space<vmem>>, vector<128x256xf32>
    %cst_257 = arith.constant dense<0.000000e+00> : vector<4x256xf32>
    %429 = tpu.matmul %427, %428, %cst_257 {dimension_numbers = #tpu.dot_dimension_numbers<[1], [0], [0], [1], [0, 0, 1, 1], [], []>} : vector<4x128xf32>, vector<128x256xf32>, vector<4x256xf32> -> vector<4x256xf32>
    %c4_258 = arith.constant 4 : index
    %c0_259 = arith.constant 0 : index
    %c0_260 = arith.constant 0 : index
    %430 = vector.load %arg3[%c4_258, %c0_259, %c0_260] : memref<5x4x1xf32, #tpu.memory_space<vmem>>, vector<1x4x1xf32>
    %431 = vector.shape_cast %430 : vector<1x4x1xf32> to vector<4x1xf32>
    %432 = vector.broadcast %431 : vector<4x1xf32> to vector<4x256xf32>
    %433 = arith.addf %429, %432 : vector<4x256xf32>
    %434 = arith.mulf %433, %433 : vector<4x256xf32>
    %435 = tpu.concatenate %433, %434 in 0 : vector<4x256xf32>, vector<4x256xf32> -> vector<8x256xf32>
    %c255_i32_261 = arith.constant 255 : i32
    %436 = tpu.dynamic_rotate %435 by %c255_i32_261 dim 1 : vector<8x256xf32>, i32 -> vector<8x256xf32>
    %c1_i32_262 = arith.constant 1 : i32
    %437 = tpu.dynamic_rotate %435 by %c1_i32_262 dim 1 : vector<8x256xf32>, i32 -> vector<8x256xf32>
    %438 = vector.shape_cast %21 : vector<1x256xi1> to vector<1x256xi1>
    %439 = vector.broadcast %438 : vector<1x256xi1> to vector<8x256xi1>
    %440 = arith.select %439, %436, %437 : vector<8x256xi1>, vector<8x256xf32>
    %441 = arith.addf %435, %440 : vector<8x256xf32>
    %c254_i32_263 = arith.constant 254 : i32
    %442 = tpu.dynamic_rotate %441 by %c254_i32_263 dim 1 : vector<8x256xf32>, i32 -> vector<8x256xf32>
    %c2_i32_264 = arith.constant 2 : i32
    %443 = tpu.dynamic_rotate %441 by %c2_i32_264 dim 1 : vector<8x256xf32>, i32 -> vector<8x256xf32>
    %444 = vector.shape_cast %25 : vector<1x256xi1> to vector<1x256xi1>
    %445 = vector.broadcast %444 : vector<1x256xi1> to vector<8x256xi1>
    %446 = arith.select %445, %442, %443 : vector<8x256xi1>, vector<8x256xf32>
    %447 = arith.addf %441, %446 : vector<8x256xf32>
    %c252_i32_265 = arith.constant 252 : i32
    %448 = tpu.dynamic_rotate %447 by %c252_i32_265 dim 1 : vector<8x256xf32>, i32 -> vector<8x256xf32>
    %c4_i32_266 = arith.constant 4 : i32
    %449 = tpu.dynamic_rotate %447 by %c4_i32_266 dim 1 : vector<8x256xf32>, i32 -> vector<8x256xf32>
    %450 = vector.shape_cast %29 : vector<1x256xi1> to vector<1x256xi1>
    %451 = vector.broadcast %450 : vector<1x256xi1> to vector<8x256xi1>
    %452 = arith.select %451, %448, %449 : vector<8x256xi1>, vector<8x256xf32>
    %453 = arith.addf %447, %452 : vector<8x256xf32>
    %c248_i32_267 = arith.constant 248 : i32
    %454 = tpu.dynamic_rotate %453 by %c248_i32_267 dim 1 : vector<8x256xf32>, i32 -> vector<8x256xf32>
    %c8_i32_268 = arith.constant 8 : i32
    %455 = tpu.dynamic_rotate %453 by %c8_i32_268 dim 1 : vector<8x256xf32>, i32 -> vector<8x256xf32>
    %456 = vector.shape_cast %33 : vector<1x256xi1> to vector<1x256xi1>
    %457 = vector.broadcast %456 : vector<1x256xi1> to vector<8x256xi1>
    %458 = arith.select %457, %454, %455 : vector<8x256xi1>, vector<8x256xf32>
    %459 = arith.addf %453, %458 : vector<8x256xf32>
    %460 = vector.extract_strided_slice %459 {offsets = [0, 0], sizes = [4, 256], strides = [1, 1]} : vector<8x256xf32> to vector<4x256xf32>
    %cst_269 = arith.constant 6.250000e-02 : f32
    %461 = vector.broadcast %cst_269 : f32 to vector<4x256xf32>
    %462 = arith.mulf %460, %461 : vector<4x256xf32>
    %463 = vector.extract_strided_slice %459 {offsets = [4, 0], sizes = [4, 256], strides = [1, 1]} : vector<8x256xf32> to vector<4x256xf32>
    %cst_270 = arith.constant 6.250000e-02 : f32
    %464 = vector.broadcast %cst_270 : f32 to vector<4x256xf32>
    %465 = arith.mulf %463, %464 : vector<4x256xf32>
    %466 = arith.mulf %462, %462 : vector<4x256xf32>
    %467 = arith.subf %465, %466 : vector<4x256xf32>
    %468 = arith.subf %433, %462 : vector<4x256xf32>
    %cst_271 = arith.constant 9.99999974E-6 : f32
    %469 = vector.broadcast %cst_271 : f32 to vector<4x256xf32>
    %470 = arith.addf %467, %469 : vector<4x256xf32>
    %471 = math.rsqrt %470 : vector<4x256xf32>
    %472 = arith.mulf %468, %471 : vector<4x256xf32>
    %c4_272 = arith.constant 4 : index
    %c0_273 = arith.constant 0 : index
    %c0_274 = arith.constant 0 : index
    %473 = vector.load %arg4[%c4_272, %c0_273, %c0_274] : memref<5x1x256xf32, #tpu.memory_space<vmem>>, vector<1x1x256xf32>
    %474 = vector.shape_cast %473 : vector<1x1x256xf32> to vector<1x256xf32>
    %475 = vector.broadcast %474 : vector<1x256xf32> to vector<4x256xf32>
    %476 = arith.mulf %472, %475 : vector<4x256xf32>
    %c4_275 = arith.constant 4 : index
    %c0_276 = arith.constant 0 : index
    %c0_277 = arith.constant 0 : index
    %477 = vector.load %arg5[%c4_275, %c0_276, %c0_277] : memref<5x1x256xf32, #tpu.memory_space<vmem>>, vector<1x1x256xf32>
    %478 = vector.shape_cast %477 : vector<1x1x256xf32> to vector<1x256xf32>
    %479 = vector.broadcast %478 : vector<1x256xf32> to vector<4x256xf32>
    %480 = arith.addf %476, %479 : vector<4x256xf32>
    %cst_278 = arith.constant 0.000000e+00 : f32
    %481 = vector.broadcast %cst_278 : f32 to vector<4x256xf32>
    %482 = arith.cmpf ogt, %480, %481 : vector<4x256xf32>
    %c4_279 = arith.constant 4 : index
    %c0_280 = arith.constant 0 : index
    %c0_281 = arith.constant 0 : index
    %483 = vector.load %arg6[%c4_279, %c0_280, %c0_281] : memref<5x4x1xf32, #tpu.memory_space<vmem>>, vector<1x4x1xf32>
    %484 = vector.shape_cast %483 : vector<1x4x1xf32> to vector<4x1xf32>
    %485 = vector.broadcast %484 : vector<4x1xf32> to vector<4x256xf32>
    %486 = arith.mulf %485, %480 : vector<4x256xf32>
    %487 = arith.select %482, %480, %486 : vector<4x256xi1>, vector<4x256xf32>
    %c0_282 = arith.constant 0 : index
    %c0_283 = arith.constant 0 : index
    %c0_284 = arith.constant 0 : index
    %488 = vector.load %arg7[%c0_282, %c0_283, %c0_284] : memref<1x4x256xf32, #tpu.memory_space<vmem>>, vector<1x4x256xf32>
    %489 = vector.shape_cast %488 : vector<1x4x256xf32> to vector<4x256xf32>
    %490 = vector.shape_cast %487 : vector<4x256xf32> to vector<1x4x256xf32>
    tpu.vector_store %arg7[%c0_282, %c0_283, %c0_284], %490 {strides = array<i32>} : memref<1x4x256xf32, #tpu.memory_space<vmem>>, vector<1x4x256xf32>,
    return
  }
  func.func @transform_0(%arg0: i32) -> (i32, i32, i32) {
    %c0_i32 = arith.constant 0 : i32
    %c0_i32_0 = arith.constant 0 : i32
    %c0_i32_1 = arith.constant 0 : i32
    return %arg0, %c0_i32, %c0_i32_0 : i32, i32, i32
  }
  func.func @transform_1(%arg0: i32) -> (i32, i32, i32) {
    %c0_i32 = arith.constant 0 : i32
    %c0_i32_0 = arith.constant 0 : i32
    %c0_i32_1 = arith.constant 0 : i32
    %c0_i32_2 = arith.constant 0 : i32
    return %c0_i32, %c0_i32_0, %c0_i32_1 : i32, i32, i32
  }
  func.func @transform_2(%arg0: i32) -> (i32, i32, i32) {
    %c0_i32 = arith.constant 0 : i32
    %c0_i32_0 = arith.constant 0 : i32
    %c0_i32_1 = arith.constant 0 : i32
    %c0_i32_2 = arith.constant 0 : i32
    return %c0_i32, %c0_i32_0, %c0_i32_1 : i32, i32, i32
  }
  func.func @transform_3(%arg0: i32) -> (i32, i32, i32) {
    %c0_i32 = arith.constant 0 : i32
    %c0_i32_0 = arith.constant 0 : i32
    %c0_i32_1 = arith.constant 0 : i32
    %c0_i32_2 = arith.constant 0 : i32
    return %c0_i32, %c0_i32_0, %c0_i32_1 : i32, i32, i32
  }
  func.func @transform_4(%arg0: i32) -> (i32, i32, i32) {
    %c0_i32 = arith.constant 0 : i32
    %c0_i32_0 = arith.constant 0 : i32
    %c0_i32_1 = arith.constant 0 : i32
    %c0_i32_2 = arith.constant 0 : i32
    return %c0_i32, %c0_i32_0, %c0_i32_1 : i32, i32, i32
  }
  func.func @transform_5(%arg0: i32) -> (i32, i32, i32) {
    %c0_i32 = arith.constant 0 : i32
    %c0_i32_0 = arith.constant 0 : i32
    %c0_i32_1 = arith.constant 0 : i32
    %c0_i32_2 = arith.constant 0 : i32
    return %c0_i32, %c0_i32_0, %c0_i32_1 : i32, i32, i32
  }
  func.func @transform_6(%arg0: i32) -> (i32, i32, i32) {
    %c0_i32 = arith.constant 0 : i32
    %c0_i32_0 = arith.constant 0 : i32
    %c0_i32_1 = arith.constant 0 : i32
    return %arg0, %c0_i32, %c0_i32_0 : i32, i32, i32
  }
}

</mosaic_0001>

<llo_original>
// kernel: dense_block_fused.1
$region0: #{dense_block_fused.1}
  #allocation0 [shape = 'u32[]', space=smem, size = 0x4, offset = 0x4, fixed_abs, tag = 'smem constant byte address 0x4 - core index']
  #allocation1 [shape = 'u32[72,128]{1,0:T(1,128)}', space=vmem, size = 0x9000, scoped, tag = 'internal scratch']
  #allocation2 [shape = 'f32[20,768]{1,0:T(8,128)}', space=vmem, size = 0x12000, scoped, tag = 'scratch operand']
  #allocation3 [shape = 'f32[128,256]{1,0:T(8,128)}', space=vmem, size = 0x20000, scoped, tag = 'scratch operand']
  %s0 = inlined_call_operand.vmem [shape: f32[2,4,256], index: 0, kind: input, shape index: {}]
  %s1 = inlined_call_operand.vmem [shape: f32[5,4,128], index: 1, kind: input, shape index: {}]
  %s2 = inlined_call_operand.vmem [shape: f32[5,4,1], index: 2, kind: input, shape index: {}]
  %s3 = inlined_call_operand.vmem [shape: f32[5,1,256], index: 3, kind: input, shape index: {}]
  %s4 = inlined_call_operand.vmem [shape: f32[5,1,256], index: 4, kind: input, shape index: {}]
  %s5 = inlined_call_operand.vmem [shape: f32[5,4,1], index: 5, kind: input, shape index: {}]
  %s6 = inlined_call_operand.vmem [shape: f32[2,4,256], index: 6, kind: output, shape index: {}]
  %s7 = sld [smem:[#allocation0]]
  $region57: #{dense_block_fused.1} parent=0
    _
  %s9 = ssub.s32 1, %s7
  %s10 = scalar_select 0, %s9, %s7
  loop: start=0, step=1, limit=4
  $region2: #{dense_block_fused.1} parent=0 // loop_pre_header
    _
  $region3: #{dense_block_fused.1} parent=0 // loop_header
    %s12 = sphi 0, %s16
    %p13 = scmp.ge.s32.totalorder %s12, 4
    %s22 = sphi 0, %s24
    %s25 = sphi 0, %s22
    %s26 = sphi 0, %s25
    %s42 = sphi 0, %s26
    %s46 = sphi 0, %s46
    %s48 = sphi 0, %s46
    %s49 = sphi 0, %s48
    %s63 = sphi 0, %s49
    %s67 = sphi 0, %s67
    %s69 = sphi 0, %s67
    %s70 = sphi 0, %s69
    %s84 = sphi 0, %s70
    %s88 = sphi 0, %s88
    %s90 = sphi 0, %s88
    %s91 = sphi 0, %s90
    %s105 = sphi 0, %s91
    %s109 = sphi 0, %s109
    %s111 = sphi 0, %s109
    %s112 = sphi 0, %s111
    %s126 = sphi 0, %s112
    %s130 = sphi 0, %s130
    %s132 = sphi 0, %s130
    %s133 = sphi 0, %s132
    %s147 = sphi 0, %s133
    %s153 = sphi 0, %s155
    %s156 = sphi 0, %s153
    %s157 = sphi 0, %s156
    %s173 = sphi 0, %s157
  $region4: #{dense_block_fused.1} parent=0 // loop_header_branch
    %15 = sbr.rel (%p13) target = $region8
  $region5: #{dense_block_fused.1} parent=0 // loop_body
    %s17 = ssub.s32 %s12, 1
    %s18 = ssub.s32 %s12, 2
    %s19 = sadd.s32 %s12, 1
    %s20 = ssub.s32 %s12, %s19
    %p21 = scmp.eq.s32.totalorder %s20, 0
    %s23 = sadd.s32 %s22, 1
    %s24 = scalar_select %p21, %s22, %s23
    %p27 = pneg %p21
    %p28 = scmp.eq.s32.totalorder %s12, 1
    %p29 = por %p27, %p28
    %p30 = scmp.ne.s32.totalorder %s22, %s25
    %p31 = scmp.eq.s32.totalorder %s12, 0
    %p32 = por %p30, %p31
    %p33 = scmp.ne.s32.totalorder %s22, %s25
    %p34 = scmp.eq.s32.totalorder %s17, 1
    %p35 = por %p33, %p34
    %p36 = scmp.ne.s32.totalorder %s25, %s26
    %p37 = scmp.eq.s32.totalorder %s17, 0
    %p38 = por %p36, %p37
    %p39 = scmp.ne.s32.totalorder %s25, %s26
    %p40 = scmp.eq.s32.totalorder %s18, 1
    %p41 = por %p39, %p40
    %p43 = scmp.ne.s32.totalorder %s26, %s42
    %p44 = scmp.eq.s32.totalorder %s18, 0
    %p45 = por %p43, %p44
    %s47 = sadd.s32 %s46, 1
    %p50 = scmp.eq.s32.totalorder %s12, 1
    %p51 = scmp.ne.s32.totalorder %s46, %s48
    %p52 = scmp.eq.s32.totalorder %s12, 0
    %p53 = por %p51, %p52
    %p54 = scmp.ne.s32.totalorder %s46, %s48
    %p55 = scmp.eq.s32.totalorder %s17, 1
    %p56 = por %p54, %p55
    %p57 = scmp.ne.s32.totalorder %s48, %s49
    %p58 = scmp.eq.s32.totalorder %s17, 0
    %p59 = por %p57, %p58
    %p60 = scmp.ne.s32.totalorder %s48, %s49
    %p61 = scmp.eq.s32.totalorder %s18, 1
    %p62 = por %p60, %p61
    %p64 = scmp.ne.s32.totalorder %s49, %s63
    %p65 = scmp.eq.s32.totalorder %s18, 0
    %p66 = por %p64, %p65
    %s68 = sadd.s32 %s67, 1
    %p71 = scmp.eq.s32.totalorder %s12, 1
    %p72 = scmp.ne.s32.totalorder %s67, %s69
    %p73 = scmp.eq.s32.totalorder %s12, 0
    %p74 = por %p72, %p73
    %p75 = scmp.ne.s32.totalorder %s67, %s69
    %p76 = scmp.eq.s32.totalorder %s17, 1
    %p77 = por %p75, %p76
    %p78 = scmp.ne.s32.totalorder %s69, %s70
    %p79 = scmp.eq.s32.totalorder %s17, 0
    %p80 = por %p78, %p79
    %p81 = scmp.ne.s32.totalorder %s69, %s70
    %p82 = scmp.eq.s32.totalorder %s18, 1
    %p83 = por %p81, %p82
    %p85 = scmp.ne.s32.totalorder %s70, %s84
    %p86 = scmp.eq.s32.totalorder %s18, 0
    %p87 = por %p85, %p86
    %s89 = sadd.s32 %s88, 1
    %p92 = scmp.eq.s32.totalorder %s12, 1
    %p93 = scmp.ne.s32.totalorder %s88, %s90
    %p94 = scmp.eq.s32.totalorder %s12, 0
    %p95 = por %p93, %p94
    %p96 = scmp.ne.s32.totalorder %s88, %s90
    %p97 = scmp.eq.s32.totalorder %s17, 1
    %p98 = por %p96, %p97
    %p99 = scmp.ne.s32.totalorder %s90, %s91
    %p100 = scmp.eq.s32.totalorder %s17, 0
    %p101 = por %p99, %p100
    %p102 = scmp.ne.s32.totalorder %s90, %s91
    %p103 = scmp.eq.s32.totalorder %s18, 1
    %p104 = por %p102, %p103
    %p106 = scmp.ne.s32.totalorder %s91, %s105
    %p107 = scmp.eq.s32.totalorder %s18, 0
    %p108 = por %p106, %p107
    %s110 = sadd.s32 %s109, 1
    %p113 = scmp.eq.s32.totalorder %s12, 1
    %p114 = scmp.ne.s32.totalorder %s109, %s111
    %p115 = scmp.eq.s32.totalorder %s12, 0
    %p116 = por %p114, %p115
    %p117 = scmp.ne.s32.totalorder %s109, %s111
    %p118 = scmp.eq.s32.totalorder %s17, 1
    %p119 = por %p117, %p118
    %p120 = scmp.ne.s32.totalorder %s111, %s112
    %p121 = scmp.eq.s32.totalorder %s17, 0
    %p122 = por %p120, %p121
    %p123 = scmp.ne.s32.totalorder %s111, %s112
    %p124 = scmp.eq.s32.totalorder %s18, 1
    %p125 = por %p123, %p124
    %p127 = scmp.ne.s32.totalorder %s112, %s126
    %p128 = scmp.eq.s32.totalorder %s18, 0
    %p129 = por %p127, %p128
    %s131 = sadd.s32 %s130, 1
    %p134 = scmp.eq.s32.totalorder %s12, 1
    %p135 = scmp.ne.s32.totalorder %s130, %s132
    %p136 = scmp.eq.s32.totalorder %s12, 0
    %p137 = por %p135, %p136
    %p138 = scmp.ne.s32.totalorder %s130, %s132
    %p139 = scmp.eq.s32.totalorder %s17, 1
    %p140 = por %p138, %p139
    %p141 = scmp.ne.s32.totalorder %s132, %s133
    %p142 = scmp.eq.s32.totalorder %s17, 0
    %p143 = por %p141, %p142
    %p144 = scmp.ne.s32.totalorder %s132, %s133
    %p145 = scmp.eq.s32.totalorder %s18, 1
    %p146 = por %p144, %p145
    %p148 = scmp.ne.s32.totalorder %s133, %s147
    %p149 = scmp.eq.s32.totalorder %s18, 0
    %p150 = por %p148, %p149
    %s151 = ssub.s32 %s12, %s19
    %p152 = scmp.eq.s32.totalorder %s151, 0
    %s154 = sadd.s32 %s153, 1
    %s155 = scalar_select %p152, %s153, %s154
    %p158 = pneg %p152
    %p159 = scmp.eq.s32.totalorder %s12, 1
    %p160 = por %p158, %p159
    %p161 = scmp.ne.s32.totalorder %s153, %s156
    %p162 = scmp.eq.s32.totalorder %s12, 0
    %p163 = por %p161, %p162
    %p164 = scmp.ne.s32.totalorder %s153, %s156
    %p165 = scmp.eq.s32.totalorder %s17, 1
    %p166 = por %p164, %p165
    %p167 = scmp.ne.s32.totalorder %s156, %s157
    %p168 = scmp.eq.s32.totalorder %s17, 0
    %p169 = por %p167, %p168
    %p170 = scmp.ne.s32.totalorder %s156, %s157
    %p171 = scmp.eq.s32.totalorder %s18, 1
    %p172 = por %p170, %p171
    %p174 = scmp.ne.s32.totalorder %s157, %s173
    %p175 = scmp.eq.s32.totalorder %s18, 0
    %p176 = por %p174, %p175
    %p177 = scmp.le.s32.totalorder 1, %s12
    %p178 = scmp.lt.s32.totalorder %s12, 3
    %p179 = pnand %p177, %p178
    %p180 = pneg %p179
    // Predicated region
    $region9: #{dense_block_fused.1} parent=5 // pred_check
      _
    $region10: #{dense_block_fused.1} parent=5 // pred_check_branch
      %182 = sbr.rel (%p179) target = $region12
    $region11: #{dense_block_fused.1} parent=5 // pred_region
      %s183 = ssub.s32 %s12, 1
      // Predicated region
      $region13: #{dense_block_fused.1} parent=11 // pred_check
        %p184 = pneg %p59
      $region14: #{dense_block_fused.1} parent=11 // pred_check_branch
        %186 = sbr.rel (%p184) target = $region16
      $region15: #{dense_block_fused.1} parent=11 // pred_region
        _
      $region16: #{dense_block_fused.1} parent=11 // pred_fallthru
        _
      // Predicated region
      $region17: #{dense_block_fused.1} parent=11 // pred_check
        %p187 = pneg %p80
      $region18: #{dense_block_fused.1} parent=11 // pred_check_branch
        %189 = sbr.rel (%p187) target = $region20
      $region19: #{dense_block_fused.1} parent=11 // pred_region
        _
      $region20: #{dense_block_fused.1} parent=11 // pred_fallthru
        _
      // Predicated region
      $region21: #{dense_block_fused.1} parent=11 // pred_check
        %p190 = pneg %p101
      $region22: #{dense_block_fused.1} parent=11 // pred_check_branch
        %192 = sbr.rel (%p190) target = $region24
      $region23: #{dense_block_fused.1} parent=11 // pred_region
        _
      $region24: #{dense_block_fused.1} parent=11 // pred_fallthru
        _
      // Predicated region
      $region25: #{dense_block_fused.1} parent=11 // pred_check
        %p193 = pneg %p122
      $region26: #{dense_block_fused.1} parent=11 // pred_check_branch
        %195 = sbr.rel (%p193) target = $region28
      $region27: #{dense_block_fused.1} parent=11 // pred_region
        _
      $region28: #{dense_block_fused.1} parent=11 // pred_fallthru
        _
      // Predicated region
      $region29: #{dense_block_fused.1} parent=11 // pred_check
        %p196 = pneg %p143
      $region30: #{dense_block_fused.1} parent=11 // pred_check_branch
        %198 = sbr.rel (%p196) target = $region32
      $region31: #{dense_block_fused.1} parent=11 // pred_region
        _
      $region32: #{dense_block_fused.1} parent=11 // pred_fallthru
        _
    $region12: #{dense_block_fused.1} parent=5 // pred_fallthru
      _
    %p199 = scmp.lt.s32.totalorder %s12, 2
    // Predicated region
    $region33: #{dense_block_fused.1} parent=5 // pred_check
      %p200 = pneg %p199
    $region34: #{dense_block_fused.1} parent=5 // pred_check_branch
      %202 = sbr.rel (%p200) target = $region36
    $region35: #{dense_block_fused.1} parent=5 // pred_region
      // Predicated region
      $region37: #{dense_block_fused.1} parent=35 // pred_check
        %p203 = pneg %p32
      $region38: #{dense_block_fused.1} parent=35 // pred_check_branch
        %205 = sbr.rel (%p203) target = $region40
      $region39: #{dense_block_fused.1} parent=35 // pred_region
        %p206 = scmp.lt.s32.totalorder %s12, 1
        %s207 = scalar_select %p206, %s12, 1
        %s208 = smul.addr %s207, 2
        %s209 = smul.addr %s208, 4
        %s210 = scalar_lea.vmem %s0, %s209
      $region40: #{dense_block_fused.1} parent=35 // pred_fallthru
        _
    $region36: #{dense_block_fused.1} parent=5 // pred_fallthru
      _
    %p211 = scmp.le.s32.totalorder 1, %s12
    %p212 = scmp.lt.s32.totalorder %s12, 3
    %p213 = pnand %p211, %p212
    %p214 = pneg %p213
    // Predicated region
    $region41: #{dense_block_fused.1} parent=5 // pred_check
      _
    $region42: #{dense_block_fused.1} parent=5 // pred_check_branch
      %216 = sbr.rel (%p213) target = $region44
    $region43: #{dense_block_fused.1} parent=5 // pred_region
      %s217 = ssub.s32 %s12, 1
      %p218 = scmp.lt.s32.totalorder %s17, 1
      %s219 = scalar_select %p218, %s17, 1
      %s220 = smul.addr %s219, 2
      %s221 = smul.addr %s220, 4
      %s222 = scalar_lea.vmem %s0, %s221
      %p223 = pneg %p38
      %p224 = pneg %p35
      %p225 = pneg %p59
      %p226 = pneg %p56
      %p227 = pneg %p80
      %p228 = pneg %p77
      %p229 = pneg %p101
      %p230 = pneg %p98
      %p231 = pneg %p122
      %p232 = pneg %p119
      %p233 = pneg %p143
      %p234 = pneg %p140
      %p235 = pneg %p169
      %p236 = pneg %p166
      %p237 = scmp.lt.s32.totalorder %s17, 1
      %s238 = scalar_select %p237, %s17, 1
      %s239 = smul.addr %s238, 2
      %s240 = smul.addr %s239, 4
      %s241 = scalar_lea.vmem %s6, %s240
      %p242 = scmp.lt.s32.totalorder %s17, 1
      %s243 = scalar_select %p242, %s17, 1
      %s244 = smul.addr %s243, 2
      %s245 = smul.addr %s244, 4
      %s246 = scalar_lea.vmem %s0, %s245
      %p247 = scmp.lt.s32.totalorder %s17, 1
      %s248 = scalar_select %p247, %s17, 1
      %s249 = smul.addr %s248, 2
      %s250 = smul.addr %s249, 4
      %s251 = scalar_lea.vmem %s6, %s250
      %252 = vst [vmem:[#allocation2] sm:$0xff] 0.0
      %253 = vst [vmem:[#allocation2 + $0x8] sm:$0xff] 0.0
      %254 = vst [vmem:[#allocation2 + $0x10] sm:$0xff] 0.0
      %255 = vst [vmem:[#allocation2 + $0x30] sm:$0xff] 0.0
      %256 = vst [vmem:[#allocation2 + $0x38] sm:$0xff] 0.0
      %257 = vst [vmem:[#allocation2 + $0x40] sm:$0xff] 0.0
      %258 = vst [vmem:[#allocation2 + $0x60] sm:$0xf] 0.0
      %259 = vst [vmem:[#allocation2 + $0x68] sm:$0xf] 0.0
      %260 = vst [vmem:[#allocation2 + $0x70] sm:$0xf] 0.0
      %261 = vst [vmem:[#allocation2 + $0x28] sm:$0xff] 0.0
      %262 = vst [vmem:[#allocation2 + $0x58] sm:$0xff] 0.0
      %263 = vst [vmem:[#allocation2 + $0x88] sm:$0xf] 0.0
      %264 = vst [vmem:[#allocation2 + $0x18] sm:$0xf0] 0.0
      %265 = vst [vmem:[#allocation2 + $0x20] sm:$0xf0] 0.0
      %266 = vst [vmem:[#allocation2 + $0x48] sm:$0xff] 0.0
      %267 = vst [vmem:[#allocation2 + $0x50] sm:$0xff] 0.0
      %268 = vst [vmem:[#allocation2 + $0x78] sm:$0xf] 0.0
      %269 = vst [vmem:[#allocation2 + $0x80] sm:$0xf] 0.0
      %270 = vst [vmem:[#allocation3 + $0xf0] sm:$0xff] 0.0
      %271 = vst [vmem:[#allocation3 + $0xf8] sm:$0xff] 0.0
      %v272 = vld [vmem:[%s246] sm:$0xff]
      %274 = vst [vmem:[#allocation1] ss:$2 sm:$0xff] %v272
      %v275 = vld.sshfl [vmem:[#allocation1] sm:$0xff pattern:$0x75316420]
      %v276 = vld.sshfl [vmem:[#allocation1 + $0x8] sm:$0xff pattern:$0x75316420]
      %279 = vst [vmem:[#allocation2 + $0x18] sm:$0xf] %v275
      %280 = vst [vmem:[#allocation2 + $0x20] sm:$0xf] %v276
      %v281 = vlaneseq
      %v282 = vand.u32 %v281, 127
      %v283 = vadd.s32 %v282, 128
      %v284 = vand.u32 %v282, 15
      %v285 = vand.u32 %v283, 15
      %vm286 = vcmp.ne.s32.totalorder %v284, 0
      %vm287 = vcmp.ne.s32.totalorder %v285, 0
      %vm288 = vcmp.ne.s32.totalorder %v284, 15
      %vm289 = vcmp.ne.s32.totalorder %v285, 15
      %v290 = vand.u32 %v282, 1
      %v291 = vand.u32 %v283, 1
      %vm292 = vcmp.eq.s32.totalorder %v290, 0
      %vm293 = vcmp.eq.s32.totalorder %v291, 0
      %v294 = vand.u32 %v282, 2
      %v295 = vand.u32 %v283, 2
      %vm296 = vcmp.eq.s32.totalorder %v294, 0
      %vm297 = vcmp.eq.s32.totalorder %v295, 0
      %v298 = vand.u32 %v282, 4
      %v299 = vand.u32 %v283, 4
      %vm300 = vcmp.eq.s32.totalorder %v298, 0
      %vm301 = vcmp.eq.s32.totalorder %v299, 0
      %v302 = vand.u32 %v282, 8
      %v303 = vand.u32 %v283, 8
      %vm304 = vcmp.eq.s32.totalorder %v302, 0
      %vm305 = vcmp.eq.s32.totalorder %v303, 0
      %v306 = vld [vmem:[#allocation2 + $0x10] sm:$0xff]
      %v307 = vld [vmem:[#allocation2 + $0x18] sm:$0xff]
      %v308 = vld [vmem:[#allocation2 + $0x20] sm:$0xff]
      %v309 = vld [vmem:[#allocation2 + $0x40] sm:$0xff]
      %v310 = vld [vmem:[#allocation2 + $0x48] sm:$0xff]
      %v311 = vld [vmem:[#allocation2 + $0x50] sm:$0xff]
      %v312 = vld [vmem:[#allocation2 + $0x70] sm:$0xf]
      %v313 = vld [vmem:[#allocation2 + $0x78] sm:$0xf]
      %v314 = vld [vmem:[#allocation2 + $0x80] sm:$0xf]
      %v315 = vsel %vm286, 1, 0
      %v316 = vsel %vm287, 1, 0
      %vm317 = vcmp.eq.s32.totalorder %v315, 1
      %vm318 = vcmp.eq.s32.totalorder %v316, 1
      %328 = vrot.lane.b32.xlu0 %v306, 17
      %v329 = vpop.permute.xlu0 %328
      %330 = vrot.lane.b32.xlu0 %v307, 17
      %v331 = vpop.permute.xlu0 %330
      %332 = vrot.lane.b32.xlu0 %v308, 17
      %v333 = vpop.permute.xlu0 %332
      %334 = vrot.lane.b32.xlu0 %v309, 17
      %v335 = vpop.permute.xlu0 %334
      %336 = vrot.lane.b32.xlu0 %v310, 17
      %v337 = vpop.permute.xlu0 %336
      %338 = vrot.lane.b32.xlu0 %v311, 17
      %v339 = vpop.permute.xlu0 %338
      %340 = vrot.lane.b32.xlu0 %v312, 17
      %v341 = vpop.permute.xlu0 %340
      %342 = vrot.lane.b32.xlu0 %v313, 17
      %v343 = vpop.permute.xlu0 %342
      %344 = vrot.lane.b32.xlu0 %v314, 17
      %v345 = vpop.permute.xlu0 %344
      %vm346 = vcmask 138240
      %v347 = vsel %vm346, %v329, %v331
      %v348 = vsel %vm346, %v331, %v333
      %v349 = vsel %vm346, %v335, %v337
      %v350 = vsel %vm346, %v337, %v339
      %v351 = vsel %vm346, %v341, %v343
      %v352 = vsel %vm346, %v343, %v345
      %v359 = vsel %vm317, %v347, 0.0
      %v360 = vsel %vm318, %v348, 0.0
      %v361 = vsel %vm317, %v349, 0.0
      %v362 = vsel %vm318, %v350, 0.0
      %v363 = vsel %vm317, %v351, 0.0
      %v364 = vsel %vm318, %v352, 0.0
      %365 = vst [vmem:[#allocation3] sm:$0xff] %v359
      %366 = vst [vmem:[#allocation3 + $0x8] sm:$0xff] %v360
      %367 = vst [vmem:[#allocation3 + $0x10] sm:$0xff] %v361
      %368 = vst [vmem:[#allocation3 + $0x18] sm:$0xff] %v362
      %369 = vst [vmem:[#allocation3 + $0x20] sm:$0xf] %v363
      %370 = vst [vmem:[#allocation3 + $0x28] sm:$0xf] %v364
      %v371 = vld [vmem:[#allocation2 + $0x10] sm:$0xff]
      %v372 = vld [vmem:[#allocation2 + $0x18] sm:$0xff]
      %v373 = vld [vmem:[#allocation2 + $0x20] sm:$0xff]
      %v374 = vld [vmem:[#allocation2 + $0x40] sm:$0xff]
      %v375 = vld [vmem:[#allocation2 + $0x48] sm:$0xff]
      %v376 = vld [vmem:[#allocation2 + $0x50] sm:$0xff]
      %v377 = vld [vmem:[#allocation2 + $0x70] sm:$0xf]
      %v378 = vld [vmem:[#allocation2 + $0x78] sm:$0xf]
      %v379 = vld [vmem:[#allocation2 + $0x80] sm:$0xf]
      %vm389 = vcmask 1043456
      %v390 = vrot.slane %v371, 4
      %v391 = vrot.slane %v372, 4
      %v392 = vrot.slane %v373, 4
      %v393 = vrot.slane %v374, 4
      %v394 = vsel %vm389, %v390, %v393
      %v395 = vrot.slane %v375, 4
      %v396 = vsel %vm389, %v391, %v395
      %v397 = vrot.slane %v376, 4
      %v398 = vsel %vm389, %v392, %v397
      %v399 = vrot.slane %v377, 4
      %v400 = vsel %vm389, %v393, %v399
      %v401 = vrot.slane %v378, 4
      %v402 = vsel %vm389, %v395, %v401
      %v403 = vrot.slane %v379, 4
      %v404 = vsel %vm389, %v397, %v403
      %405 = vrot.lane.b32.xlu0 %v390, 16
      %v406 = vpop.permute.xlu0 %405
      %407 = vrot.lane.b32.xlu0 %v391, 16
      %v408 = vpop.permute.xlu0 %407
      %409 = vrot.lane.b32.xlu0 %v392, 16
      %v410 = vpop.permute.xlu0 %409
      %411 = vrot.lane.b32.xlu0 %v394, 16
      %v412 = vpop.permute.xlu0 %411
      %413 = vrot.lane.b32.xlu0 %v396, 16
      %v414 = vpop.permute.xlu0 %413
      %415 = vrot.lane.b32.xlu0 %v398, 16
      %v416 = vpop.permute.xlu0 %415
      %417 = vrot.lane.b32.xlu0 %v400, 16
      %v418 = vpop.permute.xlu0 %417
      %419 = vrot.lane.b32.xlu0 %v402, 16
      %v420 = vpop.permute.xlu0 %419
      %421 = vrot.lane.b32.xlu0 %v404, 16
      %v422 = vpop.permute.xlu0 %421
      %vm423 = vcmask 130048
      %v424 = vsel %vm423, %v406, %v408
      %v425 = vsel %vm423, %v408, %v410
      %v426 = vsel %vm423, %v412, %v414
      %v427 = vsel %vm423, %v414, %v416
      %v428 = vsel %vm423, %v418, %v420
      %v429 = vsel %vm423, %v420, %v422
      %436 = vst [vmem:[#allocation3 + $0x20] sm:$0xf0] %v424
      %437 = vst [vmem:[#allocation3 + $0x28] sm:$0xf0] %v425
      %438 = vst [vmem:[#allocation3 + $0x30] sm:$0xff] %v426
      %439 = vst [vmem:[#allocation3 + $0x38] sm:$0xff] %v427
      %440 = vst [vmem:[#allocation3 + $0x40] sm:$0xff] %v428
      %441 = vst [vmem:[#allocation3 + $0x48] sm:$0xff] %v429
      %v442 = vld [vmem:[#allocation2 + $0x10] sm:$0xff]
      %v443 = vld [vmem:[#allocation2 + $0x18] sm:$0xff]
      %v444 = vld [vmem:[#allocation2 + $0x20] sm:$0xff]
      %v445 = vld [vmem:[#allocation2 + $0x40] sm:$0xff]
      %v446 = vld [vmem:[#allocation2 + $0x48] sm:$0xff]
      %v447 = vld [vmem:[#allocation2 + $0x50] sm:$0xff]
      %v448 = vld [vmem:[#allocation2 + $0x70] sm:$0xf]
      %v449 = vld [vmem:[#allocation2 + $0x78] sm:$0xf]
      %v450 = vld [vmem:[#allocation2 + $0x80] sm:$0xf]
      %v451 = vsel %vm288, 1, 0
      %v452 = vsel %vm289, 1, 0
      %vm453 = vcmp.eq.s32.totalorder %v451, 1
      %vm454 = vcmp.eq.s32.totalorder %v452, 1
      %464 = vrot.lane.b32.xlu0 %v442, 15
      %v465 = vpop.permute.xlu0 %464
      %466 = vrot.lane.b32.xlu0 %v443, 15
      %v467 = vpop.permute.xlu0 %466
      %468 = vrot.lane.b32.xlu0 %v444, 15
      %v469 = vpop.permute.xlu0 %468
      %470 = vrot.lane.b32.xlu0 %v445, 15
      %v471 = vpop.permute.xlu0 %470
      %472 = vrot.lane.b32.xlu0 %v446, 15
      %v473 = vpop.permute.xlu0 %472
      %474 = vrot.lane.b32.xlu0 %v447, 15
      %v475 = vpop.permute.xlu0 %474
      %476 = vrot.lane.b32.xlu0 %v448, 15
      %v477 = vpop.permute.xlu0 %476
      %478 = vrot.lane.b32.xlu0 %v449, 15
      %v479 = vpop.permute.xlu0 %478
      %480 = vrot.lane.b32.xlu0 %v450, 15
      %v481 = vpop.permute.xlu0 %480
      %vm482 = vcmask 121856
      %v483 = vsel %vm482, %v465, %v467
      %v484 = vsel %vm482, %v467, %v469
      %v485 = vsel %vm482, %v471, %v473
      %v486 = vsel %vm482, %v473, %v475
      %v487 = vsel %vm482, %v477, %v479
      %v488 = vsel %vm482, %v479, %v481
      %v495 = vsel %vm453, %v483, 0.0
      %v496 = vsel %vm454, %v484, 0.0
      %v497 = vsel %vm453, %v485, 0.0
      %v498 = vsel %vm454, %v486, 0.0
      %v499 = vsel %vm453, %v487, 0.0
      %v500 = vsel %vm454, %v488, 0.0
      %501 = vst [vmem:[#allocation3 + $0x50] sm:$0xff] %v495
      %502 = vst [vmem:[#allocation3 + $0x58] sm:$0xff] %v496
      %503 = vst [vmem:[#allocation3 + $0x60] sm:$0xff] %v497
      %504 = vst [vmem:[#allocation3 + $0x68] sm:$0xff] %v498
      %505 = vst [vmem:[#allocation3 + $0x70] sm:$0xf] %v499
      %506 = vst [vmem:[#allocation3 + $0x78] sm:$0xf] %v500
      %v507 = vld [vmem:[#allocation2 + $0x10] sm:$0xff]
      %v508 = vld [vmem:[#allocation2 + $0x18] sm:$0xff]
      %v509 = vld [vmem:[#allocation2 + $0x20] sm:$0xff]
      %v510 = vld [vmem:[#allocation2 + $0x40] sm:$0xff]
      %v511 = vld [vmem:[#allocation2 + $0x48] sm:$0xff]
      %v512 = vld [vmem:[#allocation2 + $0x50] sm:$0xff]
      %v513 = vld [vmem:[#allocation2 + $0x70] sm:$0xf]
      %v514 = vld [vmem:[#allocation2 + $0x78] sm:$0xf]
      %v515 = vld [vmem:[#allocation2 + $0x80] sm:$0xf]
      %525 = vrot.lane.b32.xlu0 %v507, 1
      %v526 = vpop.permute.xlu0 %525
      %527 = vrot.lane.b32.xlu0 %v508, 1
      %v528 = vpop.permute.xlu0 %527
      %529 = vrot.lane.b32.xlu0 %v509, 1
      %v530 = vpop.permute.xlu0 %529
      %531 = vrot.lane.b32.xlu0 %v510, 1
      %v532 = vpop.permute.xlu0 %531
      %533 = vrot.lane.b32.xlu0 %v511, 1
      %v534 = vpop.permute.xlu0 %533
      %535 = vrot.lane.b32.xlu0 %v512, 1
      %v536 = vpop.permute.xlu0 %535
      %537 = vrot.lane.b32.xlu0 %v513, 1
      %v538 = vpop.permute.xlu0 %537
      %539 = vrot.lane.b32.xlu0 %v514, 1
      %v540 = vpop.permute.xlu0 %539
      %541 = vrot.lane.b32.xlu0 %v515, 1
      %v542 = vpop.permute.xlu0 %541
      %vm543 = vcmask 7168
      %v544 = vsel %vm543, %v526, %v528
      %v545 = vsel %vm543, %v528, %v530
      %v546 = vsel %vm543, %v532, %v534
      %v547 = vsel %vm543, %v534, %v536
      %v548 = vsel %vm543, %v538, %v540
      %v549 = vsel %vm543, %v540, %v542
      %v556 = vsel %vm317, %v544, 0.0
      %v557 = vsel %vm318, %v545, 0.0
      %v558 = vsel %vm317, %v546, 0.0
      %v559 = vsel %vm318, %v547, 0.0
      %v560 = vsel %vm317, %v548, 0.0
      %v561 = vsel %vm318, %v549, 0.0
      %v568 = vrot.slane %v556, 4
      %v569 = vrot.slane %v557, 4
      %v570 = vrot.slane %v558, 4
      %v571 = vsel %vm389, %v568, %v570
      %v572 = vrot.slane %v559, 4
      %v573 = vsel %vm389, %v569, %v572
      %v574 = vrot.slane %v560, 4
      %v575 = vsel %vm389, %v570, %v574
      %v576 = vrot.slane %v561, 4
      %v577 = vsel %vm389, %v572, %v576
      %584 = vst [vmem:[#allocation3 + $0x70] sm:$0xf0] %v568
      %585 = vst [vmem:[#allocation3 + $0x78] sm:$0xf0] %v569
      %586 = vst [vmem:[#allocation3 + $0x80] sm:$0xff] %v571
      %587 = vst [vmem:[#allocation3 + $0x88] sm:$0xff] %v573
      %588 = vst [vmem:[#allocation3 + $0x90] sm:$0xff] %v575
      %589 = vst [vmem:[#allocation3 + $0x98] sm:$0xff] %v577
      %v590 = vld [vmem:[#allocation2 + $0x18] sm:$0xff]
      %v591 = vld [vmem:[#allocation2 + $0x20] sm:$0xff]
      %v592 = vld [vmem:[#allocation2 + $0x48] sm:$0xff]
      %v593 = vld [vmem:[#allocation2 + $0x50] sm:$0xff]
      %v594 = vld [vmem:[#allocation2 + $0x78] sm:$0xf]
      %v595 = vld [vmem:[#allocation2 + $0x80] sm:$0xf]
      %596 = vst [vmem:[#allocation3 + $0xa0] sm:$0xff] %v590
      %597 = vst [vmem:[#allocation3 + $0xa8] sm:$0xff] %v591
      %598 = vst [vmem:[#allocation3 + $0xb0] sm:$0xff] %v592
      %599 = vst [vmem:[#allocation3 + $0xb8] sm:$0xff] %v593
      %600 = vst [vmem:[#allocation3 + $0xc0] sm:$0xf] %v594
      %601 = vst [vmem:[#allocation3 + $0xc8] sm:$0xf] %v595
      %v602 = vld [vmem:[#allocation2 + $0x18] sm:$0xff]
      %v603 = vld [vmem:[#allocation2 + $0x20] sm:$0xff]
      %v604 = vld [vmem:[#allocation2 + $0x28] sm:$0xff]
      %v605 = vld [vmem:[#allocation2 + $0x48] sm:$0xff]
      %v606 = vld [vmem:[#allocation2 + $0x50] sm:$0xff]
      %v607 = vld [vmem:[#allocation2 + $0x58] sm:$0xff]
      %v608 = vld [vmem:[#allocation2 + $0x78] sm:$0xf]
      %v609 = vld [vmem:[#allocation2 + $0x80] sm:$0xf]
      %v610 = vld [vmem:[#allocation2 + $0x88] sm:$0xf]
      %620 = vrot.lane.b32.xlu0 %v602, 127
      %v621 = vpop.permute.xlu0 %620
      %622 = vrot.lane.b32.xlu0 %v603, 127
      %v623 = vpop.permute.xlu0 %622
      %624 = vrot.lane.b32.xlu0 %v604, 127
      %v625 = vpop.permute.xlu0 %624
      %626 = vrot.lane.b32.xlu0 %v605, 127
      %v627 = vpop.permute.xlu0 %626
      %628 = vrot.lane.b32.xlu0 %v606, 127
      %v629 = vpop.permute.xlu0 %628
      %630 = vrot.lane.b32.xlu0 %v607, 127
      %v631 = vpop.permute.xlu0 %630
      %632 = vrot.lane.b32.xlu0 %v608, 127
      %v633 = vpop.permute.xlu0 %632
      %634 = vrot.lane.b32.xlu0 %v609, 127
      %v635 = vpop.permute.xlu0 %634
      %636 = vrot.lane.b32.xlu0 %v610, 127
      %v637 = vpop.permute.xlu0 %636
      %vm638 = vcmask 1039360
      %v639 = vsel %vm638, %v621, %v623
      %v640 = vsel %vm638, %v623, %v625
      %v641 = vsel %vm638, %v627, %v629
      %v642 = vsel %vm638, %v629, %v631
      %v643 = vsel %vm638, %v633, %v635
      %v644 = vsel %vm638, %v635, %v637
      %v651 = vsel %vm453, %v639, 0.0
      %v652 = vsel %vm454, %v640, 0.0
      %v653 = vsel %vm453, %v641, 0.0
      %v654 = vsel %vm454, %v642, 0.0
      %v655 = vsel %vm453, %v643, 0.0
      %v656 = vsel %vm454, %v644, 0.0
      %v663 = vrot.slane %v651, 4
      %v664 = vrot.slane %v652, 4
      %v665 = vrot.slane %v653, 4
      %v666 = vsel %vm389, %v663, %v665
      %v667 = vrot.slane %v654, 4
      %v668 = vsel %vm389, %v664, %v667
      %v669 = vrot.slane %v655, 4
      %v670 = vsel %vm389, %v665, %v669
      %v671 = vrot.slane %v656, 4
      %v672 = vsel %vm389, %v667, %v671
      %679 = vst [vmem:[#allocation3 + $0xc0] sm:$0xf0] %v663
      %680 = vst [vmem:[#allocation3 + $0xc8] sm:$0xf0] %v664
      %681 = vst [vmem:[#allocation3 + $0xd0] sm:$0xff] %v666
      %682 = vst [vmem:[#allocation3 + $0xd8] sm:$0xff] %v668
      %683 = vst [vmem:[#allocation3 + $0xe0] sm:$0xff] %v670
      %684 = vst [vmem:[#allocation3 + $0xe8] sm:$0xff] %v672
      %v685 = vld [vmem:[%s1] sm:$0xf]
      %v686 = vld [vmem:[#allocation3] sm:$0xff]
      %v687 = vld [vmem:[#allocation3 + $0x8] sm:$0xff]
      %v688 = vld [vmem:[#allocation3 + $0x10] sm:$0xff]
      %v689 = vld [vmem:[#allocation3 + $0x18] sm:$0xff]
      %v690 = vld [vmem:[#allocation3 + $0x20] sm:$0xff]
      %v691 = vld [vmem:[#allocation3 + $0x28] sm:$0xff]
      %v692 = vld [vmem:[#allocation3 + $0x30] sm:$0xff]
      %v693 = vld [vmem:[#allocation3 + $0x38] sm:$0xff]
      %v694 = vld [vmem:[#allocation3 + $0x40] sm:$0xff]
      %v695 = vld [vmem:[#allocation3 + $0x48] sm:$0xff]
      %v696 = vld [vmem:[#allocation3 + $0x50] sm:$0xff]
      %v697 = vld [vmem:[#allocation3 + $0x58] sm:$0xff]
      %v698 = vld [vmem:[#allocation3 + $0x60] sm:$0xff]
      %v699 = vld [vmem:[#allocation3 + $0x68] sm:$0xff]
      %v700 = vld [vmem:[#allocation3 + $0x70] sm:$0xff]
      %v701 = vld [vmem:[#allocation3 + $0x78] sm:$0xff]
      %v702 = vld [vmem:[#allocation3 + $0x80] sm:$0xff]
      %v703 = vld [vmem:[#allocation3 + $0x88] sm:$0xff]
      %v704 = vld [vmem:[#allocation3 + $0x90] sm:$0xff]
      %v705 = vld [vmem:[#allocation3 + $0x98] sm:$0xff]
      %v706 = vld [vmem:[#allocation3 + $0xa0] sm:$0xff]
      %v707 = vld [vmem:[#allocation3 + $0xa8] sm:$0xff]
      %v708 = vld [vmem:[#allocation3 + $0xb0] sm:$0xff]
      %v709 = vld [vmem:[#allocation3 + $0xb8] sm:$0xff]
      %v710 = vld [vmem:[#allocation3 + $0xc0] sm:$0xff]
      %v711 = vld [vmem:[#allocation3 + $0xc8] sm:$0xff]
      %v712 = vld [vmem:[#allocation3 + $0xd0] sm:$0xff]
      %v713 = vld [vmem:[#allocation3 + $0xd8] sm:$0xff]
      %v714 = vld [vmem:[#allocation3 + $0xe0] sm:$0xff]
      %v715 = vld [vmem:[#allocation3 + $0xe8] sm:$0xff]
      %v716 = vld [vmem:[#allocation3 + $0xf0] sm:$0xff]
      %v717 = vld [vmem:[#allocation3 + $0xf8] sm:$0xff]
      %v718 = vld [vmem:[%s2] sm:$0xf]
      %720 = vset.pattern.permute.xlu0 0
      %721 = vperm.xlu0 %720, %v718
      %v722 = vpop.permute.xlu0 %721
      %724 = vmatpush.msra.mxu0 %v716
      %725 = vmatpush.msra.mxu0 %v714
      %726 = vmatpush.msra.mxu0 %v712
      %727 = vmatpush.msra.mxu0 %v710
      %728 = vmatpush.msra.mxu0 %v708
      %729 = vmatpush.msra.mxu0 %v706
      %730 = vmatpush.msra.mxu0 %v704
      %731 = vmatpush.msra.mxu0 %v702
      %732 = vmatpush.msra.mxu0 %v700
      %733 = vmatpush.msra.mxu0 %v698
      %734 = vmatpush.msra.mxu0 %v696
      %735 = vmatpush.msra.mxu0 %v694
      %736 = vmatpush.msra.mxu0 %v692
      %737 = vmatpush.msra.mxu0 %v690
      %738 = vmatpush.msra.mxu0 %v688
      %739 = vmatpush.msra.mxu0 %v686
      %740 = vmatmul.f32.gmra.mxu0 %v685
      %v741 = vpop.f32.mrf.mxu0
      %v742 = vadd.f32 %v722, %v741
      %743 = vdwg.mxu0
      %744 = vmatpush.msra.mxu0 %v717
      %745 = vmatpush.msra.mxu0 %v715
      %746 = vmatpush.msra.mxu0 %v713
      %747 = vmatpush.msra.mxu0 %v711
      %748 = vmatpush.msra.mxu0 %v709
      %749 = vmatpush.msra.mxu0 %v707
      %750 = vmatpush.msra.mxu0 %v705
      %751 = vmatpush.msra.mxu0 %v703
      %752 = vmatpush.msra.mxu0 %v701
      %753 = vmatpush.msra.mxu0 %v699
      %754 = vmatpush.msra.mxu0 %v697
      %755 = vmatpush.msra.mxu0 %v695
      %756 = vmatpush.msra.mxu0 %v693
      %757 = vmatpush.msra.mxu0 %v691
      %758 = vmatpush.msra.mxu0 %v689
      %759 = vmatpush.msra.mxu0 %v687
      %760 = vmatmul.f32.gmra.mxu0 %v685
      %v761 = vpop.f32.mrf.mxu0
      %v762 = vadd.f32 %v722, %v761
      %763 = vdwg.mxu0
      %v764 = vmul.f32 %v742, %v742
      %v765 = vmul.f32 %v762, %v762
      %v768 = vrot.slane %v764, 4
      %v769 = vrot.slane %v765, 4
      %v772 = vsel %vm389, %v742, %v768
      %v773 = vsel %vm389, %v762, %v769
      %774 = vrot.lane.b32.xlu0 %v772, 127
      %v775 = vpop.permute.xlu0 %774
      %776 = vrot.lane.b32.xlu0 %v773, 127
      %v777 = vpop.permute.xlu0 %776
      %vm778 = vcmp.lt.s32.totalorder %v282, 127
      %v779 = vsel %vm778, %v775, %v777
      %v780 = vsel %vm778, %v777, %v775
      %781 = vrot.lane.b32.xlu0 %v772, 1
      %v782 = vpop.permute.xlu0 %781
      %783 = vrot.lane.b32.xlu0 %v773, 1
      %v784 = vpop.permute.xlu0 %783
      %vm785 = vcmp.lt.s32.totalorder %v282, 1
      %v786 = vsel %vm785, %v782, %v784
      %v787 = vsel %vm785, %v784, %v782
      %v788 = vsel %vm292, 1, 0
      %v789 = vsel %vm293, 1, 0
      %vm790 = vcmp.eq.s32.totalorder %v788, 1
      %vm791 = vcmp.eq.s32.totalorder %v789, 1
      %v792 = vsel %vm790, %v779, %v787
      %v793 = vsel %vm791, %v780, %v786
      %v794 = vadd.f32 %v772, %v792
      %v795 = vadd.f32 %v773, %v793
      %796 = vrot.lane.b32.xlu0 %v794, 126
      %v797 = vpop.permute.xlu0 %796
      %798 = vrot.lane.b32.xlu0 %v795, 126
      %v799 = vpop.permute.xlu0 %798
      %vm800 = vcmp.lt.s32.totalorder %v282, 126
      %v801 = vsel %vm800, %v797, %v799
      %v802 = vsel %vm800, %v799, %v797
      %803 = vrot.lane.b32.xlu0 %v794, 2
      %v804 = vpop.permute.xlu0 %803
      %805 = vrot.lane.b32.xlu0 %v795, 2
      %v806 = vpop.permute.xlu0 %805
      %vm807 = vcmp.lt.s32.totalorder %v282, 2
      %v808 = vsel %vm807, %v804, %v806
      %v809 = vsel %vm807, %v806, %v804
      %v810 = vsel %vm296, 1, 0
      %v811 = vsel %vm297, 1, 0
      %vm812 = vcmp.eq.s32.totalorder %v810, 1
      %vm813 = vcmp.eq.s32.totalorder %v811, 1
      %v814 = vsel %vm812, %v801, %v809
      %v815 = vsel %vm813, %v802, %v808
      %v816 = vadd.f32 %v794, %v814
      %v817 = vadd.f32 %v795, %v815
      %818 = vrot.lane.b32.xlu0 %v816, 124
      %v819 = vpop.permute.xlu0 %818
      %820 = vrot.lane.b32.xlu0 %v817, 124
      %v821 = vpop.permute.xlu0 %820
      %vm822 = vcmp.lt.s32.totalorder %v282, 124
      %v823 = vsel %vm822, %v819, %v821
      %v824 = vsel %vm822, %v821, %v819
      %825 = vrot.lane.b32.xlu0 %v816, 4
      %v826 = vpop.permute.xlu0 %825
      %827 = vrot.lane.b32.xlu0 %v817, 4
      %v828 = vpop.permute.xlu0 %827
      %vm829 = vcmp.lt.s32.totalorder %v282, 4
      %v830 = vsel %vm829, %v826, %v828
      %v831 = vsel %vm829, %v828, %v826
      %v832 = vsel %vm300, 1, 0
      %v833 = vsel %vm301, 1, 0
      %vm834 = vcmp.eq.s32.totalorder %v832, 1
      %vm835 = vcmp.eq.s32.totalorder %v833, 1
      %v836 = vsel %vm834, %v823, %v831
      %v837 = vsel %vm835, %v824, %v830
      %v838 = vadd.f32 %v816, %v836
      %v839 = vadd.f32 %v817, %v837
      %840 = vrot.lane.b32.xlu0 %v838, 120
      %v841 = vpop.permute.xlu0 %840
      %842 = vrot.lane.b32.xlu0 %v839, 120
      %v843 = vpop.permute.xlu0 %842
      %vm844 = vcmp.lt.s32.totalorder %v282, 120
      %v845 = vsel %vm844, %v841, %v843
      %v846 = vsel %vm844, %v843, %v841
      %847 = vrot.lane.b32.xlu0 %v838, 8
      %v848 = vpop.permute.xlu0 %847
      %849 = vrot.lane.b32.xlu0 %v839, 8
      %v850 = vpop.permute.xlu0 %849
      %vm851 = vcmp.lt.s32.totalorder %v282, 8
      %v852 = vsel %vm851, %v848, %v850
      %v853 = vsel %vm851, %v850, %v848
      %v854 = vsel %vm304, 1, 0
      %v855 = vsel %vm305, 1, 0
      %vm856 = vcmp.eq.s32.totalorder %v854, 1
      %vm857 = vcmp.eq.s32.totalorder %v855, 1
      %v858 = vsel %vm856, %v845, %v853
      %v859 = vsel %vm857, %v846, %v852
      %v860 = vadd.f32 %v838, %v858
      %v861 = vadd.f32 %v839, %v859
      %v862 = vmul.f32 %v860, 0.0625
      %v863 = vmul.f32 %v861, 0.0625
      %v864 = vmul.f32 %v862, %v862
      %v865 = vmul.f32 %v863, %v863
      %v868 = vrot.slane %v864, 4
      %v869 = vrot.slane %v865, 4
      %v872 = vsub.f32 %v862, %v868
      %v873 = vsub.f32 %v863, %v869
      %v874 = vsub.f32 %v742, %v862
      %v875 = vsub.f32 %v762, %v863
      %v876 = vadd.f32 %v872, 1e-05
      %v877 = vadd.f32 %v873, 1e-05
      %v878 = vrsqrt.pop %v876
      %v879 = vmul.f32 %v878, %v876
      %v880 = vmul.f32 %v879, %v878
      %v881 = vmul.f32 0.5, %v880
      %v882 = vsub.f32 1.5, %v881
      %v883 = vmul.f32 %v878, %v882
      %vm884 = vweird.f32 %v876
      %vm885 = vweird.f32 %v878
      %vm886 = vmor %vm884, %vm885
      %v887 = vsel %vm886, %v878, %v883
      %v888 = vrsqrt.pop %v877
      %v889 = vmul.f32 %v888, %v877
      %v890 = vmul.f32 %v889, %v888
      %v891 = vmul.f32 0.5, %v890
      %v892 = vsub.f32 1.5, %v891
      %v893 = vmul.f32 %v888, %v892
      %vm894 = vweird.f32 %v877
      %vm895 = vweird.f32 %v888
      %vm896 = vmor %vm894, %vm895
      %v897 = vsel %vm896, %v888, %v893
      %v900 = vrot.slane %v887, 4
      %v901 = vrot.slane %v897, 4
      %v904 = vmul.f32 %v874, %v900
      %v905 = vmul.f32 %v875, %v901
      %v906 = vld [vmem:[%s3] sm:$0x3]
      %v908 = vperm.slane %v906, 0
      %v909 = vperm.slane %v906, 1
      %v912 = vmul.f32 %v904, %v908
      %v913 = vmul.f32 %v905, %v909
      %v914 = vld [vmem:[%s4] sm:$0x3]
      %v916 = vperm.slane %v914, 0
      %v917 = vperm.slane %v914, 1
      %v920 = vadd.f32 %v912, %v916
      %v921 = vadd.f32 %v913, %v917
      %vm922 = vcmp.gt.f32.partialorder %v920, 0.0
      %vm923 = vcmp.gt.f32.partialorder %v921, 0.0
      %v924 = vld [vmem:[%s5] sm:$0xf]
      %926 = vset.pattern.permute.xlu0 0
      %927 = vperm.xlu0 %926, %v924
      %v928 = vpop.permute.xlu0 %927
      %v930 = vmul.f32 %v928, %v920
      %v931 = vmul.f32 %v928, %v921
      %v932 = vsel %vm922, %v920, %v930
      %v933 = vsel %vm923, %v921, %v931
      %v936 = vrot.slane %v932, 4
      %v937 = vrot.slane %v933, 4
      %940 = vst [vmem:[#allocation2 + $0x18] sm:$0xf0] %v936
      %941 = vst [vmem:[#allocation2 + $0x20] sm:$0xf0] %v937
      %v942 = vld [vmem:[#allocation2 + $0x10] sm:$0xff]
      %v943 = vld [vmem:[#allocation2 + $0x18] sm:$0xff]
      %v944 = vld [vmem:[#allocation2 + $0x20] sm:$0xff]
      %v945 = vld [vmem:[#allocation2 + $0x40] sm:$0xff]
      %v946 = vld [vmem:[#allocation2 + $0x48] sm:$0xff]
      %v947 = vld [vmem:[#allocation2 + $0x50] sm:$0xff]
      %v948 = vld [vmem:[#allocation2 + $0x70] sm:$0xf]
      %v949 = vld [vmem:[#allocation2 + $0x78] sm:$0xf]
      %v950 = vld [vmem:[#allocation2 + $0x80] sm:$0xf]
      %960 = vrot.lane.b32.xlu0 %v942, 33
      %v961 = vpop.permute.xlu0 %960
      %962 = vrot.lane.b32.xlu0 %v943, 33
      %v963 = vpop.permute.xlu0 %962
      %964 = vrot.lane.b32.xlu0 %v944, 33
      %v965 = vpop.permute.xlu0 %964
      %966 = vrot.lane.b32.xlu0 %v945, 33
      %v967 = vpop.permute.xlu0 %966
      %968 = vrot.lane.b32.xlu0 %v946, 33
      %v969 = vpop.permute.xlu0 %968
      %970 = vrot.lane.b32.xlu0 %v947, 33
      %v971 = vpop.permute.xlu0 %970
      %972 = vrot.lane.b32.xlu0 %v948, 33
      %v973 = vpop.permute.xlu0 %972
      %974 = vrot.lane.b32.xlu0 %v949, 33
      %v975 = vpop.permute.xlu0 %974
      %976 = vrot.lane.b32.xlu0 %v950, 33
      %v977 = vpop.permute.xlu0 %976
      %vm978 = vcmask 269312
      %v979 = vsel %vm978, %v961, %v963
      %v980 = vsel %vm978, %v963, %v965
      %v981 = vsel %vm978, %v967, %v969
      %v982 = vsel %vm978, %v969, %v971
      %v983 = vsel %vm978, %v973, %v975
      %v984 = vsel %vm978, %v975, %v977
      %v991 = vsel %vm317, %v979, 0.0
      %v992 = vsel %vm318, %v980, 0.0
      %v993 = vsel %vm317, %v981, 0.0
      %v994 = vsel %vm318, %v982, 0.0
      %v995 = vsel %vm317, %v983, 0.0
      %v996 = vsel %vm318, %v984, 0.0
      %997 = vst [vmem:[#allocation3] sm:$0xff] %v991
      %998 = vst [vmem:[#allocation3 + $0x8] sm:$0xff] %v992
      %999 = vst [vmem:[#allocation3 + $0x10] sm:$0xff] %v993
      %1000 = vst [vmem:[#allocation3 + $0x18] sm:$0xff] %v994
      %1001 = vst [vmem:[#allocation3 + $0x20] sm:$0xf] %v995
      %1002 = vst [vmem:[#allocation3 + $0x28] sm:$0xf] %v996
      %v1003 = vld [vmem:[#allocation2 + $0x10] sm:$0xff]
      %v1004 = vld [vmem:[#allocation2 + $0x18] sm:$0xff]
      %v1005 = vld [vmem:[#allocation2 + $0x20] sm:$0xff]
      %v1006 = vld [vmem:[#allocation2 + $0x40] sm:$0xff]
      %v1007 = vld [vmem:[#allocation2 + $0x48] sm:$0xff]
      %v1008 = vld [vmem:[#allocation2 + $0x50] sm:$0xff]
      %v1009 = vld [vmem:[#allocation2 + $0x70] sm:$0xf]
      %v1010 = vld [vmem:[#allocation2 + $0x78] sm:$0xf]
      %v1011 = vld [vmem:[#allocation2 + $0x80] sm:$0xf]
      %v1021 = vrot.slane %v1003, 4
      %v1022 = vrot.slane %v1004, 4
      %v1023 = vrot.slane %v1005, 4
      %v1024 = vrot.slane %v1006, 4
      %v1025 = vsel %vm389, %v1021, %v1024
      %v1026 = vrot.slane %v1007, 4
      %v1027 = vsel %vm389, %v1022, %v1026
      %v1028 = vrot.slane %v1008, 4
      %v1029 = vsel %vm389, %v1023, %v1028
      %v1030 = vrot.slane %v1009, 4
      %v1031 = vsel %vm389, %v1024, %v1030
      %v1032 = vrot.slane %v1010, 4
      %v1033 = vsel %vm389, %v1026, %v1032
      %v1034 = vrot.slane %v1011, 4
      %v1035 = vsel %vm389, %v1028, %v1034
      %1036 = vrot.lane.b32.xlu0 %v1021, 32
      %v1037 = vpop.permute.xlu0 %1036
      %1038 = vrot.lane.b32.xlu0 %v1022, 32
      %v1039 = vpop.permute.xlu0 %1038
      %1040 = vrot.lane.b32.xlu0 %v1023, 32
      %v1041 = vpop.permute.xlu0 %1040
      %1042 = vrot.lane.b32.xlu0 %v1025, 32
      %v1043 = vpop.permute.xlu0 %1042
      %1044 = vrot.lane.b32.xlu0 %v1027, 32
      %v1045 = vpop.permute.xlu0 %1044
      %1046 = vrot.lane.b32.xlu0 %v1029, 32
      %v1047 = vpop.permute.xlu0 %1046
      %1048 = vrot.lane.b32.xlu0 %v1031, 32
      %v1049 = vpop.permute.xlu0 %1048
      %1050 = vrot.lane.b32.xlu0 %v1033, 32
      %v1051 = vpop.permute.xlu0 %1050
      %1052 = vrot.lane.b32.xlu0 %v1035, 32
      %v1053 = vpop.permute.xlu0 %1052
      %vm1054 = vcmask 261120
      %v1055 = vsel %vm1054, %v1037, %v1039
      %v1056 = vsel %vm1054, %v1039, %v1041
      %v1057 = vsel %vm1054, %v1043, %v1045
      %v1058 = vsel %vm1054, %v1045, %v1047
      %v1059 = vsel %vm1054, %v1049, %v1051
      %v1060 = vsel %vm1054, %v1051, %v1053
      %1067 = vst [vmem:[#allocation3 + $0x20] sm:$0xf0] %v1055
      %1068 = vst [vmem:[#allocation3 + $0x28] sm:$0xf0] %v1056
      %1069 = vst [vmem:[#allocation3 + $0x30] sm:$0xff] %v1057
      %1070 = vst [vmem:[#allocation3 + $0x38] sm:$0xff] %v1058
      %1071 = vst [vmem:[#allocation3 + $0x40] sm:$0xff] %v1059
      %1072 = vst [vmem:[#allocation3 + $0x48] sm:$0xff] %v1060
      %v1073 = vld [vmem:[#allocation2 + $0x10] sm:$0xff]
      %v1074 = vld [vmem:[#allocation2 + $0x18] sm:$0xff]
      %v1075 = vld [vmem:[#allocation2 + $0x20] sm:$0xff]
      %v1076 = vld [vmem:[#allocation2 + $0x40] sm:$0xff]
      %v1077 = vld [vmem:[#allocation2 + $0x48] sm:$0xff]
      %v1078 = vld [vmem:[#allocation2 + $0x50] sm:$0xff]
      %v1079 = vld [vmem:[#allocation2 + $0x70] sm:$0xf]
      %v1080 = vld [vmem:[#allocation2 + $0x78] sm:$0xf]
      %v1081 = vld [vmem:[#allocation2 + $0x80] sm:$0xf]
      %1091 = vrot.lane.b32.xlu0 %v1073, 31
      %v1092 = vpop.permute.xlu0 %1091
      %1093 = vrot.lane.b32.xlu0 %v1074, 31
      %v1094 = vpop.permute.xlu0 %1093
      %1095 = vrot.lane.b32.xlu0 %v1075, 31
      %v1096 = vpop.permute.xlu0 %1095
      %1097 = vrot.lane.b32.xlu0 %v1076, 31
      %v1098 = vpop.permute.xlu0 %1097
      %1099 = vrot.lane.b32.xlu0 %v1077, 31
      %v1100 = vpop.permute.xlu0 %1099
      %1101 = vrot.lane.b32.xlu0 %v1078, 31
      %v1102 = vpop.permute.xlu0 %1101
      %1103 = vrot.lane.b32.xlu0 %v1079, 31
      %v1104 = vpop.permute.xlu0 %1103
      %1105 = vrot.lane.b32.xlu0 %v1080, 31
      %v1106 = vpop.permute.xlu0 %1105
      %1107 = vrot.lane.b32.xlu0 %v1081, 31
      %v1108 = vpop.permute.xlu0 %1107
      %vm1109 = vcmask 252928
      %v1110 = vsel %vm1109, %v1092, %v1094
      %v1111 = vsel %vm1109, %v1094, %v1096
      %v1112 = vsel %vm1109, %v1098, %v1100
      %v1113 = vsel %vm1109, %v1100, %v1102
      %v1114 = vsel %vm1109, %v1104, %v1106
      %v1115 = vsel %vm1109, %v1106, %v1108
      %v1122 = vsel %vm453, %v1110, 0.0
      %v1123 = vsel %vm454, %v1111, 0.0
      %v1124 = vsel %vm453, %v1112, 0.0
      %v1125 = vsel %vm454, %v1113, 0.0
      %v1126 = vsel %vm453, %v1114, 0.0
      %v1127 = vsel %vm454, %v1115, 0.0
      %1128 = vst [vmem:[#allocation3 + $0x50] sm:$0xff] %v1122
      %1129 = vst [vmem:[#allocation3 + $0x58] sm:$0xff] %v1123
      %1130 = vst [vmem:[#allocation3 + $0x60] sm:$0xff] %v1124
      %1131 = vst [vmem:[#allocation3 + $0x68] sm:$0xff] %v1125
      %1132 = vst [vmem:[#allocation3 + $0x70] sm:$0xf] %v1126
      %1133 = vst [vmem:[#allocation3 + $0x78] sm:$0xf] %v1127
      %v1134 = vld [vmem:[#allocation2 + $0x10] sm:$0xff]
      %v1135 = vld [vmem:[#allocation2 + $0x18] sm:$0xff]
      %v1136 = vld [vmem:[#allocation2 + $0x20] sm:$0xff]
      %v1137 = vld [vmem:[#allocation2 + $0x40] sm:$0xff]
      %v1138 = vld [vmem:[#allocation2 + $0x48] sm:$0xff]
      %v1139 = vld [vmem:[#allocation2 + $0x50] sm:$0xff]
      %v1140 = vld [vmem:[#allocation2 + $0x70] sm:$0xf]
      %v1141 = vld [vmem:[#allocation2 + $0x78] sm:$0xf]
      %v1142 = vld [vmem:[#allocation2 + $0x80] sm:$0xf]
      %1152 = vrot.lane.b32.xlu0 %v1134, 1
      %v1153 = vpop.permute.xlu0 %1152
      %1154 = vrot.lane.b32.xlu0 %v1135, 1
      %v1155 = vpop.permute.xlu0 %1154
      %1156 = vrot.lane.b32.xlu0 %v1136, 1
      %v1157 = vpop.permute.xlu0 %1156
      %1158 = vrot.lane.b32.xlu0 %v1137, 1
      %v1159 = vpop.permute.xlu0 %1158
      %1160 = vrot.lane.b32.xlu0 %v1138, 1
      %v1161 = vpop.permute.xlu0 %1160
      %1162 = vrot.lane.b32.xlu0 %v1139, 1
      %v1163 = vpop.permute.xlu0 %1162
      %1164 = vrot.lane.b32.xlu0 %v1140, 1
      %v1165 = vpop.permute.xlu0 %1164
      %1166 = vrot.lane.b32.xlu0 %v1141, 1
      %v1167 = vpop.permute.xlu0 %1166
      %1168 = vrot.lane.b32.xlu0 %v1142, 1
      %v1169 = vpop.permute.xlu0 %1168
      %v1170 = vsel %vm543, %v1153, %v1155
      %v1171 = vsel %vm543, %v1155, %v1157
      %v1172 = vsel %vm543, %v1159, %v1161
      %v1173 = vsel %vm543, %v1161, %v1163
      %v1174 = vsel %vm543, %v1165, %v1167
      %v1175 = vsel %vm543, %v1167, %v1169
      %v1182 = vsel %vm317, %v1170, 0.0
      %v1183 = vsel %vm318, %v1171, 0.0
      %v1184 = vsel %vm317, %v1172, 0.0
      %v1185 = vsel %vm318, %v1173, 0.0
      %v1186 = vsel %vm317, %v1174, 0.0
      %v1187 = vsel %vm318, %v1175, 0.0
      %v1194 = vrot.slane %v1182, 4
      %v1195 = vrot.slane %v1183, 4
      %v1196 = vrot.slane %v1184, 4
      %v1197 = vsel %vm389, %v1194, %v1196
      %v1198 = vrot.slane %v1185, 4
      %v1199 = vsel %vm389, %v1195, %v1198
      %v1200 = vrot.slane %v1186, 4
      %v1201 = vsel %vm389, %v1196, %v1200
      %v1202 = vrot.slane %v1187, 4
      %v1203 = vsel %vm389, %v1198, %v1202
      %1210 = vst [vmem:[#allocation3 + $0x70] sm:$0xf0] %v1194
      %1211 = vst [vmem:[#allocation3 + $0x78] sm:$0xf0] %v1195
      %1212 = vst [vmem:[#allocation3 + $0x80] sm:$0xff] %v1197
      %1213 = vst [vmem:[#allocation3 + $0x88] sm:$0xff] %v1199
      %1214 = vst [vmem:[#allocation3 + $0x90] sm:$0xff] %v1201
      %1215 = vst [vmem:[#allocation3 + $0x98] sm:$0xff] %v1203
      %v1216 = vld [vmem:[#allocation2 + $0x18] sm:$0xff]
      %v1217 = vld [vmem:[#allocation2 + $0x20] sm:$0xff]
      %v1218 = vld [vmem:[#allocation2 + $0x48] sm:$0xff]
      %v1219 = vld [vmem:[#allocation2 + $0x50] sm:$0xff]
      %v1220 = vld [vmem:[#allocation2 + $0x78] sm:$0xf]
      %v1221 = vld [vmem:[#allocation2 + $0x80] sm:$0xf]
      %1222 = vst [vmem:[#allocation3 + $0xa0] sm:$0xff] %v1216
      %1223 = vst [vmem:[#allocation3 + $0xa8] sm:$0xff] %v1217
      %1224 = vst [vmem:[#allocation3 + $0xb0] sm:$0xff] %v1218
      %1225 = vst [vmem:[#allocation3 + $0xb8] sm:$0xff] %v1219
      %1226 = vst [vmem:[#allocation3 + $0xc0] sm:$0xf] %v1220
      %1227 = vst [vmem:[#allocation3 + $0xc8] sm:$0xf] %v1221
      %v1228 = vld [vmem:[#allocation2 + $0x18] sm:$0xff]
      %v1229 = vld [vmem:[#allocation2 + $0x20] sm:$0xff]
      %v1230 = vld [vmem:[#allocation2 + $0x28] sm:$0xff]
      %v1231 = vld [vmem:[#allocation2 + $0x48] sm:$0xff]
      %v1232 = vld [vmem:[#allocation2 + $0x50] sm:$0xff]
      %v1233 = vld [vmem:[#allocation2 + $0x58] sm:$0xff]
      %v1234 = vld [vmem:[#allocation2 + $0x78] sm:$0xf]
      %v1235 = vld [vmem:[#allocation2 + $0x80] sm:$0xf]
      %v1236 = vld [vmem:[#allocation2 + $0x88] sm:$0xf]
      %1246 = vrot.lane.b32.xlu0 %v1228, 127
      %v1247 = vpop.permute.xlu0 %1246
      %1248 = vrot.lane.b32.xlu0 %v1229, 127
      %v1249 = vpop.permute.xlu0 %1248
      %1250 = vrot.lane.b32.xlu0 %v1230, 127
      %v1251 = vpop.permute.xlu0 %1250
      %1252 = vrot.lane.b32.xlu0 %v1231, 127
      %v1253 = vpop.permute.xlu0 %1252
      %1254 = vrot.lane.b32.xlu0 %v1232, 127
      %v1255 = vpop.permute.xlu0 %1254
      %1256 = vrot.lane.b32.xlu0 %v1233, 127
      %v1257 = vpop.permute.xlu0 %1256
      %1258 = vrot.lane.b32.xlu0 %v1234, 127
      %v1259 = vpop.permute.xlu0 %1258
      %1260 = vrot.lane.b32.xlu0 %v1235, 127
      %v1261 = vpop.permute.xlu0 %1260
      %1262 = vrot.lane.b32.xlu0 %v1236, 127
      %v1263 = vpop.permute.xlu0 %1262
      %v1264 = vsel %vm638, %v1247, %v1249
      %v1265 = vsel %vm638, %v1249, %v1251
      %v1266 = vsel %vm638, %v1253, %v1255
      %v1267 = vsel %vm638, %v1255, %v1257
      %v1268 = vsel %vm638, %v1259, %v1261
      %v1269 = vsel %vm638, %v1261, %v1263
      %v1276 = vsel %vm453, %v1264, 0.0
      %v1277 = vsel %vm454, %v1265, 0.0
      %v1278 = vsel %vm453, %v1266, 0.0
      %v1279 = vsel %vm454, %v1267, 0.0
      %v1280 = vsel %vm453, %v1268, 0.0
      %v1281 = vsel %vm454, %v1269, 0.0
      %v1288 = vrot.slane %v1276, 4
      %v1289 = vrot.slane %v1277, 4
      %v1290 = vrot.slane %v1278, 4
      %v1291 = vsel %vm389, %v1288, %v1290
      %v1292 = vrot.slane %v1279, 4
      %v1293 = vsel %vm389, %v1289, %v1292
      %v1294 = vrot.slane %v1280, 4
      %v1295 = vsel %vm389, %v1290, %v1294
      %v1296 = vrot.slane %v1281, 4
      %v1297 = vsel %vm389, %v1292, %v1296
      %1304 = vst [vmem:[#allocation3 + $0xc0] sm:$0xf0] %v1288
      %1305 = vst [vmem:[#allocation3 + $0xc8] sm:$0xf0] %v1289
      %1306 = vst [vmem:[#allocation3 + $0xd0] sm:$0xff] %v1291
      %1307 = vst [vmem:[#allocation3 + $0xd8] sm:$0xff] %v1293
      %1308 = vst [vmem:[#allocation3 + $0xe0] sm:$0xff] %v1295
      %1309 = vst [vmem:[#allocation3 + $0xe8] sm:$0xff] %v1297
      %s1310 = scalar_lea.vmem %s1, 4
      %v1311 = vld [vmem:[%s1310] sm:$0xf]
      %v1312 = vld [vmem:[#allocation3] sm:$0xff]
      %v1313 = vld [vmem:[#allocation3 + $0x8] sm:$0xff]
      %v1314 = vld [vmem:[#allocation3 + $0x10] sm:$0xff]
      %v1315 = vld [vmem:[#allocation3 + $0x18] sm:$0xff]
      %v1316 = vld [vmem:[#allocation3 + $0x20] sm:$0xff]
      %v1317 = vld [vmem:[#allocation3 + $0x28] sm:$0xff]
      %v1318 = vld [vmem:[#allocation3 + $0x30] sm:$0xff]
      %v1319 = vld [vmem:[#allocation3 + $0x38] sm:$0xff]
      %v1320 = vld [vmem:[#allocation3 + $0x40] sm:$0xff]
      %v1321 = vld [vmem:[#allocation3 + $0x48] sm:$0xff]
      %v1322 = vld [vmem:[#allocation3 + $0x50] sm:$0xff]
      %v1323 = vld [vmem:[#allocation3 + $0x58] sm:$0xff]
      %v1324 = vld [vmem:[#allocation3 + $0x60] sm:$0xff]
      %v1325 = vld [vmem:[#allocation3 + $0x68] sm:$0xff]
      %v1326 = vld [vmem:[#allocation3 + $0x70] sm:$0xff]
      %v1327 = vld [vmem:[#allocation3 + $0x78] sm:$0xff]
      %v1328 = vld [vmem:[#allocation3 + $0x80] sm:$0xff]
      %v1329 = vld [vmem:[#allocation3 + $0x88] sm:$0xff]
      %v1330 = vld [vmem:[#allocation3 + $0x90] sm:$0xff]
      %v1331 = vld [vmem:[#allocation3 + $0x98] sm:$0xff]
      %v1332 = vld [vmem:[#allocation3 + $0xa0] sm:$0xff]
      %v1333 = vld [vmem:[#allocation3 + $0xa8] sm:$0xff]
      %v1334 = vld [vmem:[#allocation3 + $0xb0] sm:$0xff]
      %v1335 = vld [vmem:[#allocation3 + $0xb8] sm:$0xff]
      %v1336 = vld [vmem:[#allocation3 + $0xc0] sm:$0xff]
      %v1337 = vld [vmem:[#allocation3 + $0xc8] sm:$0xff]
      %v1338 = vld [vmem:[#allocation3 + $0xd0] sm:$0xff]
      %v1339 = vld [vmem:[#allocation3 + $0xd8] sm:$0xff]
      %v1340 = vld [vmem:[#allocation3 + $0xe0] sm:$0xff]
      %v1341 = vld [vmem:[#allocation3 + $0xe8] sm:$0xff]
      %v1342 = vld [vmem:[#allocation3 + $0xf0] sm:$0xff]
      %v1343 = vld [vmem:[#allocation3 + $0xf8] sm:$0xff]
      %s1344 = scalar_lea.vmem %s2, 4
      %v1345 = vld [vmem:[%s1344] sm:$0xf]
      %1347 = vset.pattern.permute.xlu0 0
      %1348 = vperm.xlu0 %1347, %v1345
      %v1349 = vpop.permute.xlu0 %1348
      %1351 = vmatpush.msra.mxu0 %v1342
      %1352 = vmatpush.msra.mxu0 %v1340
      %1353 = vmatpush.msra.mxu0 %v1338
      %1354 = vmatpush.msra.mxu0 %v1336
      %1355 = vmatpush.msra.mxu0 %v1334
      %1356 = vmatpush.msra.mxu0 %v1332
      %1357 = vmatpush.msra.mxu0 %v1330
      %1358 = vmatpush.msra.mxu0 %v1328
      %1359 = vmatpush.msra.mxu0 %v1326
      %1360 = vmatpush.msra.mxu0 %v1324
      %1361 = vmatpush.msra.mxu0 %v1322
      %1362 = vmatpush.msra.mxu0 %v1320
      %1363 = vmatpush.msra.mxu0 %v1318
      %1364 = vmatpush.msra.mxu0 %v1316
      %1365 = vmatpush.msra.mxu0 %v1314
      %1366 = vmatpush.msra.mxu0 %v1312
      %1367 = vmatmul.f32.gmra.mxu0 %v1311
      %v1368 = vpop.f32.mrf.mxu0
      %v1369 = vadd.f32 %v1349, %v1368
      %1370 = vdwg.mxu0
      %1371 = vmatpush.msra.mxu0 %v1343
      %1372 = vmatpush.msra.mxu0 %v1341
      %1373 = vmatpush.msra.mxu0 %v1339
      %1374 = vmatpush.msra.mxu0 %v1337
      %1375 = vmatpush.msra.mxu0 %v1335
      %1376 = vmatpush.msra.mxu0 %v1333
      %1377 = vmatpush.msra.mxu0 %v1331
      %1378 = vmatpush.msra.mxu0 %v1329
      %1379 = vmatpush.msra.mxu0 %v1327
      %1380 = vmatpush.msra.mxu0 %v1325
      %1381 = vmatpush.msra.mxu0 %v1323
      %1382 = vmatpush.msra.mxu0 %v1321
      %1383 = vmatpush.msra.mxu0 %v1319
      %1384 = vmatpush.msra.mxu0 %v1317
      %1385 = vmatpush.msra.mxu0 %v1315
      %1386 = vmatpush.msra.mxu0 %v1313
      %1387 = vmatmul.f32.gmra.mxu0 %v1311
      %v1388 = vpop.f32.mrf.mxu0
      %v1389 = vadd.f32 %v1349, %v1388
      %1390 = vdwg.mxu0
      %v1391 = vmul.f32 %v1369, %v1369
      %v1392 = vmul.f32 %v1389, %v1389
      %v1395 = vrot.slane %v1391, 4
      %v1396 = vrot.slane %v1392, 4
      %v1399 = vsel %vm389, %v1369, %v1395
      %v1400 = vsel %vm389, %v1389, %v1396
      %1401 = vrot.lane.b32.xlu0 %v1399, 127
      %v1402 = vpop.permute.xlu0 %1401
      %1403 = vrot.lane.b32.xlu0 %v1400, 127
      %v1404 = vpop.permute.xlu0 %1403
      %v1405 = vsel %vm778, %v1402, %v1404
      %v1406 = vsel %vm778, %v1404, %v1402
      %1407 = vrot.lane.b32.xlu0 %v1399, 1
      %v1408 = vpop.permute.xlu0 %1407
      %1409 = vrot.lane.b32.xlu0 %v1400, 1
      %v1410 = vpop.permute.xlu0 %1409
      %v1411 = vsel %vm785, %v1408, %v1410
      %v1412 = vsel %vm785, %v1410, %v1408
      %v1413 = vsel %vm790, %v1405, %v1412
      %v1414 = vsel %vm791, %v1406, %v1411
      %v1415 = vadd.f32 %v1399, %v1413
      %v1416 = vadd.f32 %v1400, %v1414
      %1417 = vrot.lane.b32.xlu0 %v1415, 126
      %v1418 = vpop.permute.xlu0 %1417
      %1419 = vrot.lane.b32.xlu0 %v1416, 126
      %v1420 = vpop.permute.xlu0 %1419
      %v1421 = vsel %vm800, %v1418, %v1420
      %v1422 = vsel %vm800, %v1420, %v1418
      %1423 = vrot.lane.b32.xlu0 %v1415, 2
      %v1424 = vpop.permute.xlu0 %1423
      %1425 = vrot.lane.b32.xlu0 %v1416, 2
      %v1426 = vpop.permute.xlu0 %1425
      %v1427 = vsel %vm807, %v1424, %v1426
      %v1428 = vsel %vm807, %v1426, %v1424
      %v1429 = vsel %vm812, %v1421, %v1428
      %v1430 = vsel %vm813, %v1422, %v1427
      %v1431 = vadd.f32 %v1415, %v1429
      %v1432 = vadd.f32 %v1416, %v1430
      %1433 = vrot.lane.b32.xlu0 %v1431, 124
      %v1434 = vpop.permute.xlu0 %1433
      %1435 = vrot.lane.b32.xlu0 %v1432, 124
      %v1436 = vpop.permute.xlu0 %1435
      %v1437 = vsel %vm822, %v1434, %v1436
      %v1438 = vsel %vm822, %v1436, %v1434
      %1439 = vrot.lane.b32.xlu0 %v1431, 4
      %v1440 = vpop.permute.xlu0 %1439
      %1441 = vrot.lane.b32.xlu0 %v1432, 4
      %v1442 = vpop.permute.xlu0 %1441
      %v1443 = vsel %vm829, %v1440, %v1442
      %v1444 = vsel %vm829, %v1442, %v1440
      %v1445 = vsel %vm834, %v1437, %v1444
      %v1446 = vsel %vm835, %v1438, %v1443
      %v1447 = vadd.f32 %v1431, %v1445
      %v1448 = vadd.f32 %v1432, %v1446
      %1449 = vrot.lane.b32.xlu0 %v1447, 120
      %v1450 = vpop.permute.xlu0 %1449
      %1451 = vrot.lane.b32.xlu0 %v1448, 120
      %v1452 = vpop.permute.xlu0 %1451
      %v1453 = vsel %vm844, %v1450, %v1452
      %v1454 = vsel %vm844, %v1452, %v1450
      %1455 = vrot.lane.b32.xlu0 %v1447, 8
      %v1456 = vpop.permute.xlu0 %1455
      %1457 = vrot.lane.b32.xlu0 %v1448, 8
      %v1458 = vpop.permute.xlu0 %1457
      %v1459 = vsel %vm851, %v1456, %v1458
      %v1460 = vsel %vm851, %v1458, %v1456
      %v1461 = vsel %vm856, %v1453, %v1460
      %v1462 = vsel %vm857, %v1454, %v1459
      %v1463 = vadd.f32 %v1447, %v1461
      %v1464 = vadd.f32 %v1448, %v1462
      %v1465 = vmul.f32 %v1463, 0.0625
      %v1466 = vmul.f32 %v1464, 0.0625
      %v1467 = vmul.f32 %v1465, %v1465
      %v1468 = vmul.f32 %v1466, %v1466
      %v1471 = vrot.slane %v1467, 4
      %v1472 = vrot.slane %v1468, 4
      %v1475 = vsub.f32 %v1465, %v1471
      %v1476 = vsub.f32 %v1466, %v1472
      %v1477 = vsub.f32 %v1369, %v1465
      %v1478 = vsub.f32 %v1389, %v1466
      %v1479 = vadd.f32 %v1475, 1e-05
      %v1480 = vadd.f32 %v1476, 1e-05
      %v1481 = vrsqrt.pop %v1479
      %v1482 = vmul.f32 %v1481, %v1479
      %v1483 = vmul.f32 %v1482, %v1481
      %v1484 = vmul.f32 0.5, %v1483
      %v1485 = vsub.f32 1.5, %v1484
      %v1486 = vmul.f32 %v1481, %v1485
      %vm1487 = vweird.f32 %v1479
      %vm1488 = vweird.f32 %v1481
      %vm1489 = vmor %vm1487, %vm1488
      %v1490 = vsel %vm1489, %v1481, %v1486
      %v1491 = vrsqrt.pop %v1480
      %v1492 = vmul.f32 %v1491, %v1480
      %v1493 = vmul.f32 %v1492, %v1491
      %v1494 = vmul.f32 0.5, %v1493
      %v1495 = vsub.f32 1.5, %v1494
      %v1496 = vmul.f32 %v1491, %v1495
      %vm1497 = vweird.f32 %v1480
      %vm1498 = vweird.f32 %v1491
      %vm1499 = vmor %vm1497, %vm1498
      %v1500 = vsel %vm1499, %v1491, %v1496
      %v1503 = vrot.slane %v1490, 4
      %v1504 = vrot.slane %v1500, 4
      %v1507 = vmul.f32 %v1477, %v1503
      %v1508 = vmul.f32 %v1478, %v1504
      %s1509 = scalar_lea.vmem %s3, 2
      %v1510 = vld [vmem:[%s1509] sm:$0x3]
      %v1512 = vperm.slane %v1510, 0
      %v1513 = vperm.slane %v1510, 1
      %v1516 = vmul.f32 %v1507, %v1512
      %v1517 = vmul.f32 %v1508, %v1513
      %s1518 = scalar_lea.vmem %s4, 2
      %v1519 = vld [vmem:[%s1518] sm:$0x3]
      %v1521 = vperm.slane %v1519, 0
      %v1522 = vperm.slane %v1519, 1
      %v1525 = vadd.f32 %v1516, %v1521
      %v1526 = vadd.f32 %v1517, %v1522
      %vm1527 = vcmp.gt.f32.partialorder %v1525, 0.0
      %vm1528 = vcmp.gt.f32.partialorder %v1526, 0.0
      %s1529 = scalar_lea.vmem %s5, 4
      %v1530 = vld [vmem:[%s1529] sm:$0xf]
      %1532 = vset.pattern.permute.xlu0 0
      %1533 = vperm.xlu0 %1532, %v1530
      %v1534 = vpop.permute.xlu0 %1533
      %v1536 = vmul.f32 %v1534, %v1525
      %v1537 = vmul.f32 %v1534, %v1526
      %v1538 = vsel %vm1527, %v1525, %v1536
      %v1539 = vsel %vm1528, %v1526, %v1537
      %1540 = vst [vmem:[#allocation2 + $0x48] sm:$0xf] %v1538
      %1541 = vst [vmem:[#allocation2 + $0x50] sm:$0xf] %v1539
      %v1542 = vld [vmem:[#allocation2 + $0x10] sm:$0xff]
      %v1543 = vld [vmem:[#allocation2 + $0x18] sm:$0xff]
      %v1544 = vld [vmem:[#allocation2 + $0x20] sm:$0xff]
      %v1545 = vld [vmem:[#allocation2 + $0x40] sm:$0xff]
      %v1546 = vld [vmem:[#allocation2 + $0x48] sm:$0xff]
      %v1547 = vld [vmem:[#allocation2 + $0x50] sm:$0xff]
      %v1548 = vld [vmem:[#allocation2 + $0x70] sm:$0xf]
      %v1549 = vld [vmem:[#allocation2 + $0x78] sm:$0xf]
      %v1550 = vld [vmem:[#allocation2 + $0x80] sm:$0xf]
      %1560 = vrot.lane.b32.xlu0 %v1542, 65
      %v1561 = vpop.permute.xlu0 %1560
      %1562 = vrot.lane.b32.xlu0 %v1543, 65
      %v1563 = vpop.permute.xlu0 %1562
      %1564 = vrot.lane.b32.xlu0 %v1544, 65
      %v1565 = vpop.permute.xlu0 %1564
      %1566 = vrot.lane.b32.xlu0 %v1545, 65
      %v1567 = vpop.permute.xlu0 %1566
      %1568 = vrot.lane.b32.xlu0 %v1546, 65
      %v1569 = vpop.permute.xlu0 %1568
      %1570 = vrot.lane.b32.xlu0 %v1547, 65
      %v1571 = vpop.permute.xlu0 %1570
      %1572 = vrot.lane.b32.xlu0 %v1548, 65
      %v1573 = vpop.permute.xlu0 %1572
      %1574 = vrot.lane.b32.xlu0 %v1549, 65
      %v1575 = vpop.permute.xlu0 %1574
      %1576 = vrot.lane.b32.xlu0 %v1550, 65
      %v1577 = vpop.permute.xlu0 %1576
      %vm1578 = vcmask 531456
      %v1579 = vsel %vm1578, %v1561, %v1563
      %v1580 = vsel %vm1578, %v1563, %v1565
      %v1581 = vsel %vm1578, %v1567, %v1569
      %v1582 = vsel %vm1578, %v1569, %v1571
      %v1583 = vsel %vm1578, %v1573, %v1575
      %v1584 = vsel %vm1578, %v1575, %v1577
      %v1591 = vsel %vm317, %v1579, 0.0
      %v1592 = vsel %vm318, %v1580, 0.0
      %v1593 = vsel %vm317, %v1581, 0.0
      %v1594 = vsel %vm318, %v1582, 0.0
      %v1595 = vsel %vm317, %v1583, 0.0
      %v1596 = vsel %vm318, %v1584, 0.0
      %1597 = vst [vmem:[#allocation3] sm:$0xff] %v1591
      %1598 = vst [vmem:[#allocation3 + $0x8] sm:$0xff] %v1592
      %1599 = vst [vmem:[#allocation3 + $0x10] sm:$0xff] %v1593
      %1600 = vst [vmem:[#allocation3 + $0x18] sm:$0xff] %v1594
      %1601 = vst [vmem:[#allocation3 + $0x20] sm:$0xf] %v1595
      %1602 = vst [vmem:[#allocation3 + $0x28] sm:$0xf] %v1596
      %v1603 = vld [vmem:[#allocation2 + $0x10] sm:$0xff]
      %v1604 = vld [vmem:[#allocation2 + $0x18] sm:$0xff]
      %v1605 = vld [vmem:[#allocation2 + $0x20] sm:$0xff]
      %v1606 = vld [vmem:[#allocation2 + $0x40] sm:$0xff]
      %v1607 = vld [vmem:[#allocation2 + $0x48] sm:$0xff]
      %v1608 = vld [vmem:[#allocation2 + $0x50] sm:$0xff]
      %v1609 = vld [vmem:[#allocation2 + $0x70] sm:$0xf]
      %v1610 = vld [vmem:[#allocation2 + $0x78] sm:$0xf]
      %v1611 = vld [vmem:[#allocation2 + $0x80] sm:$0xf]
      %v1621 = vrot.slane %v1603, 4
      %v1622 = vrot.slane %v1604, 4
      %v1623 = vrot.slane %v1605, 4
      %v1624 = vrot.slane %v1606, 4
      %v1625 = vsel %vm389, %v1621, %v1624
      %v1626 = vrot.slane %v1607, 4
      %v1627 = vsel %vm389, %v1622, %v1626
      %v1628 = vrot.slane %v1608, 4
      %v1629 = vsel %vm389, %v1623, %v1628
      %v1630 = vrot.slane %v1609, 4
      %v1631 = vsel %vm389, %v1624, %v1630
      %v1632 = vrot.slane %v1610, 4
      %v1633 = vsel %vm389, %v1626, %v1632
      %v1634 = vrot.slane %v1611, 4
      %v1635 = vsel %vm389, %v1628, %v1634
      %1636 = vrot.lane.b32.xlu0 %v1621, 64
      %v1637 = vpop.permute.xlu0 %1636
      %1638 = vrot.lane.b32.xlu0 %v1622, 64
      %v1639 = vpop.permute.xlu0 %1638
      %1640 = vrot.lane.b32.xlu0 %v1623, 64
      %v1641 = vpop.permute.xlu0 %1640
      %1642 = vrot.lane.b32.xlu0 %v1625, 64
      %v1643 = vpop.permute.xlu0 %1642
      %1644 = vrot.lane.b32.xlu0 %v1627, 64
      %v1645 = vpop.permute.xlu0 %1644
      %1646 = vrot.lane.b32.xlu0 %v1629, 64
      %v1647 = vpop.permute.xlu0 %1646
      %1648 = vrot.lane.b32.xlu0 %v1631, 64
      %v1649 = vpop.permute.xlu0 %1648
      %1650 = vrot.lane.b32.xlu0 %v1633, 64
      %v1651 = vpop.permute.xlu0 %1650
      %1652 = vrot.lane.b32.xlu0 %v1635, 64
      %v1653 = vpop.permute.xlu0 %1652
      %vm1654 = vcmask 523264
      %v1655 = vsel %vm1654, %v1637, %v1639
      %v1656 = vsel %vm1654, %v1639, %v1641
      %v1657 = vsel %vm1654, %v1643, %v1645
      %v1658 = vsel %vm1654, %v1645, %v1647
      %v1659 = vsel %vm1654, %v1649, %v1651
      %v1660 = vsel %vm1654, %v1651, %v1653
      %1667 = vst [vmem:[#allocation3 + $0x20] sm:$0xf0] %v1655
      %1668 = vst [vmem:[#allocation3 + $0x28] sm:$0xf0] %v1656
      %1669 = vst [vmem:[#allocation3 + $0x30] sm:$0xff] %v1657
      %1670 = vst [vmem:[#allocation3 + $0x38] sm:$0xff] %v1658
      %1671 = vst [vmem:[#allocation3 + $0x40] sm:$0xff] %v1659
      %1672 = vst [vmem:[#allocation3 + $0x48] sm:$0xff] %v1660
      %v1673 = vld [vmem:[#allocation2 + $0x10] sm:$0xff]
      %v1674 = vld [vmem:[#allocation2 + $0x18] sm:$0xff]
      %v1675 = vld [vmem:[#allocation2 + $0x20] sm:$0xff]
      %v1676 = vld [vmem:[#allocation2 + $0x40] sm:$0xff]
      %v1677 = vld [vmem:[#allocation2 + $0x48] sm:$0xff]
      %v1678 = vld [vmem:[#allocation2 + $0x50] sm:$0xff]
      %v1679 = vld [vmem:[#allocation2 + $0x70] sm:$0xf]
      %v1680 = vld [vmem:[#allocation2 + $0x78] sm:$0xf]
      %v1681 = vld [vmem:[#allocation2 + $0x80] sm:$0xf]
      %1691 = vrot.lane.b32.xlu0 %v1673, 63
      %v1692 = vpop.permute.xlu0 %1691
      %1693 = vrot.lane.b32.xlu0 %v1674, 63
      %v1694 = vpop.permute.xlu0 %1693
      %1695 = vrot.lane.b32.xlu0 %v1675, 63
      %v1696 = vpop.permute.xlu0 %1695
      %1697 = vrot.lane.b32.xlu0 %v1676, 63
      %v1698 = vpop.permute.xlu0 %1697
      %1699 = vrot.lane.b32.xlu0 %v1677, 63
      %v1700 = vpop.permute.xlu0 %1699
      %1701 = vrot.lane.b32.xlu0 %v1678, 63
      %v1702 = vpop.permute.xlu0 %1701
      %1703 = vrot.lane.b32.xlu0 %v1679, 63
      %v1704 = vpop.permute.xlu0 %1703
      %1705 = vrot.lane.b32.xlu0 %v1680, 63
      %v1706 = vpop.permute.xlu0 %1705
      %1707 = vrot.lane.b32.xlu0 %v1681, 63
      %v1708 = vpop.permute.xlu0 %1707
      %vm1709 = vcmask 515072
      %v1710 = vsel %vm1709, %v1692, %v1694
      %v1711 = vsel %vm1709, %v1694, %v1696
      %v1712 = vsel %vm1709, %v1698, %v1700
      %v1713 = vsel %vm1709, %v1700, %v1702
      %v1714 = vsel %vm1709, %v1704, %v1706
      %v1715 = vsel %vm1709, %v1706, %v1708
      %v1722 = vsel %vm453, %v1710, 0.0
      %v1723 = vsel %vm454, %v1711, 0.0
      %v1724 = vsel %vm453, %v1712, 0.0
      %v1725 = vsel %vm454, %v1713, 0.0
      %v1726 = vsel %vm453, %v1714, 0.0
      %v1727 = vsel %vm454, %v1715, 0.0
      %1728 = vst [vmem:[#allocation3 + $0x50] sm:$0xff] %v1722
      %1729 = vst [vmem:[#allocation3 + $0x58] sm:$0xff] %v1723
      %1730 = vst [vmem:[#allocation3 + $0x60] sm:$0xff] %v1724
      %1731 = vst [vmem:[#allocation3 + $0x68] sm:$0xff] %v1725
      %1732 = vst [vmem:[#allocation3 + $0x70] sm:$0xf] %v1726
      %1733 = vst [vmem:[#allocation3 + $0x78] sm:$0xf] %v1727
      %v1734 = vld [vmem:[#allocation2 + $0x10] sm:$0xff]
      %v1735 = vld [vmem:[#allocation2 + $0x18] sm:$0xff]
      %v1736 = vld [vmem:[#allocation2 + $0x20] sm:$0xff]
      %v1737 = vld [vmem:[#allocation2 + $0x40] sm:$0xff]
      %v1738 = vld [vmem:[#allocation2 + $0x48] sm:$0xff]
      %v1739 = vld [vmem:[#allocation2 + $0x50] sm:$0xff]
      %v1740 = vld [vmem:[#allocation2 + $0x70] sm:$0xf]
      %v1741 = vld [vmem:[#allocation2 + $0x78] sm:$0xf]
      %v1742 = vld [vmem:[#allocation2 + $0x80] sm:$0xf]
      %1752 = vrot.lane.b32.xlu0 %v1734, 1
      %v1753 = vpop.permute.xlu0 %1752
      %1754 = vrot.lane.b32.xlu0 %v1735, 1
      %v1755 = vpop.permute.xlu0 %1754
      %1756 = vrot.lane.b32.xlu0 %v1736, 1
      %v1757 = vpop.permute.xlu0 %1756
      %1758 = vrot.lane.b32.xlu0 %v1737, 1
      %v1759 = vpop.permute.xlu0 %1758
      %1760 = vrot.lane.b32.xlu0 %v1738, 1
      %v1761 = vpop.permute.xlu0 %1760
      %1762 = vrot.lane.b32.xlu0 %v1739, 1
      %v1763 = vpop.permute.xlu0 %1762
      %1764 = vrot.lane.b32.xlu0 %v1740, 1
      %v1765 = vpop.permute.xlu0 %1764
      %1766 = vrot.lane.b32.xlu0 %v1741, 1
      %v1767 = vpop.permute.xlu0 %1766
      %1768 = vrot.lane.b32.xlu0 %v1742, 1
      %v1769 = vpop.permute.xlu0 %1768
      %v1770 = vsel %vm543, %v1753, %v1755
      %v1771 = vsel %vm543, %v1755, %v1757
      %v1772 = vsel %vm543, %v1759, %v1761
      %v1773 = vsel %vm543, %v1761, %v1763
      %v1774 = vsel %vm543, %v1765, %v1767
      %v1775 = vsel %vm543, %v1767, %v1769
      %v1782 = vsel %vm317, %v1770, 0.0
      %v1783 = vsel %vm318, %v1771, 0.0
      %v1784 = vsel %vm317, %v1772, 0.0
      %v1785 = vsel %vm318, %v1773, 0.0
      %v1786 = vsel %vm317, %v1774, 0.0
      %v1787 = vsel %vm318, %v1775, 0.0
      %v1794 = vrot.slane %v1782, 4
      %v1795 = vrot.slane %v1783, 4
      %v1796 = vrot.slane %v1784, 4
      %v1797 = vsel %vm389, %v1794, %v1796
      %v1798 = vrot.slane %v1785, 4
      %v1799 = vsel %vm389, %v1795, %v1798
      %v1800 = vrot.slane %v1786, 4
      %v1801 = vsel %vm389, %v1796, %v1800
      %v1802 = vrot.slane %v1787, 4
      %v1803 = vsel %vm389, %v1798, %v1802
      %1810 = vst [vmem:[#allocation3 + $0x70] sm:$0xf0] %v1794
      %1811 = vst [vmem:[#allocation3 + $0x78] sm:$0xf0] %v1795
      %1812 = vst [vmem:[#allocation3 + $0x80] sm:$0xff] %v1797
      %1813 = vst [vmem:[#allocation3 + $0x88] sm:$0xff] %v1799
      %1814 = vst [vmem:[#allocation3 + $0x90] sm:$0xff] %v1801
      %1815 = vst [vmem:[#allocation3 + $0x98] sm:$0xff] %v1803
      %v1816 = vld [vmem:[#allocation2 + $0x18] sm:$0xff]
      %v1817 = vld [vmem:[#allocation2 + $0x20] sm:$0xff]
      %v1818 = vld [vmem:[#allocation2 + $0x48] sm:$0xff]
      %v1819 = vld [vmem:[#allocation2 + $0x50] sm:$0xff]
      %v1820 = vld [vmem:[#allocation2 + $0x78] sm:$0xf]
      %v1821 = vld [vmem:[#allocation2 + $0x80] sm:$0xf]
      %1822 = vst [vmem:[#allocation3 + $0xa0] sm:$0xff] %v1816
      %1823 = vst [vmem:[#allocation3 + $0xa8] sm:$0xff] %v1817
      %1824 = vst [vmem:[#allocation3 + $0xb0] sm:$0xff] %v1818
      %1825 = vst [vmem:[#allocation3 + $0xb8] sm:$0xff] %v1819
      %1826 = vst [vmem:[#allocation3 + $0xc0] sm:$0xf] %v1820
      %1827 = vst [vmem:[#allocation3 + $0xc8] sm:$0xf] %v1821
      %v1828 = vld [vmem:[#allocation2 + $0x18] sm:$0xff]
      %v1829 = vld [vmem:[#allocation2 + $0x20] sm:$0xff]
      %v1830 = vld [vmem:[#allocation2 + $0x28] sm:$0xff]
      %v1831 = vld [vmem:[#allocation2 + $0x48] sm:$0xff]
      %v1832 = vld [vmem:[#allocation2 + $0x50] sm:$0xff]
      %v1833 = vld [vmem:[#allocation2 + $0x58] sm:$0xff]
      %v1834 = vld [vmem:[#allocation2 + $0x78] sm:$0xf]
      %v1835 = vld [vmem:[#allocation2 + $0x80] sm:$0xf]
      %v1836 = vld [vmem:[#allocation2 + $0x88] sm:$0xf]
      %1846 = vrot.lane.b32.xlu0 %v1828, 127
      %v1847 = vpop.permute.xlu0 %1846
      %1848 = vrot.lane.b32.xlu0 %v1829, 127
      %v1849 = vpop.permute.xlu0 %1848
      %1850 = vrot.lane.b32.xlu0 %v1830, 127
      %v1851 = vpop.permute.xlu0 %1850
      %1852 = vrot.lane.b32.xlu0 %v1831, 127
      %v1853 = vpop.permute.xlu0 %1852
      %1854 = vrot.lane.b32.xlu0 %v1832, 127
      %v1855 = vpop.permute.xlu0 %1854
      %1856 = vrot.lane.b32.xlu0 %v1833, 127
      %v1857 = vpop.permute.xlu0 %1856
      %1858 = vrot.lane.b32.xlu0 %v1834, 127
      %v1859 = vpop.permute.xlu0 %1858
      %1860 = vrot.lane.b32.xlu0 %v1835, 127
      %v1861 = vpop.permute.xlu0 %1860
      %1862 = vrot.lane.b32.xlu0 %v1836, 127
      %v1863 = vpop.permute.xlu0 %1862
      %v1864 = vsel %vm638, %v1847, %v1849
      %v1865 = vsel %vm638, %v1849, %v1851
      %v1866 = vsel %vm638, %v1853, %v1855
      %v1867 = vsel %vm638, %v1855, %v1857
      %v1868 = vsel %vm638, %v1859, %v1861
      %v1869 = vsel %vm638, %v1861, %v1863
      %v1876 = vsel %vm453, %v1864, 0.0
      %v1877 = vsel %vm454, %v1865, 0.0
      %v1878 = vsel %vm453, %v1866, 0.0
      %v1879 = vsel %vm454, %v1867, 0.0
      %v1880 = vsel %vm453, %v1868, 0.0
      %v1881 = vsel %vm454, %v1869, 0.0
      %v1888 = vrot.slane %v1876, 4
      %v1889 = vrot.slane %v1877, 4
      %v1890 = vrot.slane %v1878, 4
      %v1891 = vsel %vm389, %v1888, %v1890
      %v1892 = vrot.slane %v1879, 4
      %v1893 = vsel %vm389, %v1889, %v1892
      %v1894 = vrot.slane %v1880, 4
      %v1895 = vsel %vm389, %v1890, %v1894
      %v1896 = vrot.slane %v1881, 4
      %v1897 = vsel %vm389, %v1892, %v1896
      %1904 = vst [vmem:[#allocation3 + $0xc0] sm:$0xf0] %v1888
      %1905 = vst [vmem:[#allocation3 + $0xc8] sm:$0xf0] %v1889
      %1906 = vst [vmem:[#allocation3 + $0xd0] sm:$0xff] %v1891
      %1907 = vst [vmem:[#allocation3 + $0xd8] sm:$0xff] %v1893
      %1908 = vst [vmem:[#allocation3 + $0xe0] sm:$0xff] %v1895
      %1909 = vst [vmem:[#allocation3 + $0xe8] sm:$0xff] %v1897
      %s1910 = scalar_lea.vmem %s1, 8
      %v1911 = vld [vmem:[%s1910] sm:$0xf]
      %v1912 = vld [vmem:[#allocation3] sm:$0xff]
      %v1913 = vld [vmem:[#allocation3 + $0x8] sm:$0xff]
      %v1914 = vld [vmem:[#allocation3 + $0x10] sm:$0xff]
      %v1915 = vld [vmem:[#allocation3 + $0x18] sm:$0xff]
      %v1916 = vld [vmem:[#allocation3 + $0x20] sm:$0xff]
      %v1917 = vld [vmem:[#allocation3 + $0x28] sm:$0xff]
      %v1918 = vld [vmem:[#allocation3 + $0x30] sm:$0xff]
      %v1919 = vld [vmem:[#allocation3 + $0x38] sm:$0xff]
      %v1920 = vld [vmem:[#allocation3 + $0x40] sm:$0xff]
      %v1921 = vld [vmem:[#allocation3 + $0x48] sm:$0xff]
      %v1922 = vld [vmem:[#allocation3 + $0x50] sm:$0xff]
      %v1923 = vld [vmem:[#allocation3 + $0x58] sm:$0xff]
      %v1924 = vld [vmem:[#allocation3 + $0x60] sm:$0xff]
      %v1925 = vld [vmem:[#allocation3 + $0x68] sm:$0xff]
      %v1926 = vld [vmem:[#allocation3 + $0x70] sm:$0xff]
      %v1927 = vld [vmem:[#allocation3 + $0x78] sm:$0xff]
      %v1928 = vld [vmem:[#allocation3 + $0x80] sm:$0xff]
      %v1929 = vld [vmem:[#allocation3 + $0x88] sm:$0xff]
      %v1930 = vld [vmem:[#allocation3 + $0x90] sm:$0xff]
      %v1931 = vld [vmem:[#allocation3 + $0x98] sm:$0xff]
      %v1932 = vld [vmem:[#allocation3 + $0xa0] sm:$0xff]
      %v1933 = vld [vmem:[#allocation3 + $0xa8] sm:$0xff]
      %v1934 = vld [vmem:[#allocation3 + $0xb0] sm:$0xff]
      %v1935 = vld [vmem:[#allocation3 + $0xb8] sm:$0xff]
      %v1936 = vld [vmem:[#allocation3 + $0xc0] sm:$0xff]
      %v1937 = vld [vmem:[#allocation3 + $0xc8] sm:$0xff]
      %v1938 = vld [vmem:[#allocation3 + $0xd0] sm:$0xff]
      %v1939 = vld [vmem:[#allocation3 + $0xd8] sm:$0xff]
      %v1940 = vld [vmem:[#allocation3 + $0xe0] sm:$0xff]
      %v1941 = vld [vmem:[#allocation3 + $0xe8] sm:$0xff]
      %v1942 = vld [vmem:[#allocation3 + $0xf0] sm:$0xff]
      %v1943 = vld [vmem:[#allocation3 + $0xf8] sm:$0xff]
      %s1944 = scalar_lea.vmem %s2, 8
      %v1945 = vld [vmem:[%s1944] sm:$0xf]
      %1947 = vset.pattern.permute.xlu0 0
      %1948 = vperm.xlu0 %1947, %v1945
      %v1949 = vpop.permute.xlu0 %1948
      %1951 = vmatpush.msra.mxu0 %v1942
      %1952 = vmatpush.msra.mxu0 %v1940
      %1953 = vmatpush.msra.mxu0 %v1938
      %1954 = vmatpush.msra.mxu0 %v1936
      %1955 = vmatpush.msra.mxu0 %v1934
      %1956 = vmatpush.msra.mxu0 %v1932
      %1957 = vmatpush.msra.mxu0 %v1930
      %1958 = vmatpush.msra.mxu0 %v1928
      %1959 = vmatpush.msra.mxu0 %v1926
      %1960 = vmatpush.msra.mxu0 %v1924
      %1961 = vmatpush.msra.mxu0 %v1922
      %1962 = vmatpush.msra.mxu0 %v1920
      %1963 = vmatpush.msra.mxu0 %v1918
      %1964 = vmatpush.msra.mxu0 %v1916
      %1965 = vmatpush.msra.mxu0 %v1914
      %1966 = vmatpush.msra.mxu0 %v1912
      %1967 = vmatmul.f32.gmra.mxu0 %v1911
      %v1968 = vpop.f32.mrf.mxu0
      %v1969 = vadd.f32 %v1949, %v1968
      %1970 = vdwg.mxu0
      %1971 = vmatpush.msra.mxu0 %v1943
      %1972 = vmatpush.msra.mxu0 %v1941
      %1973 = vmatpush.msra.mxu0 %v1939
      %1974 = vmatpush.msra.mxu0 %v1937
      %1975 = vmatpush.msra.mxu0 %v1935
      %1976 = vmatpush.msra.mxu0 %v1933
      %1977 = vmatpush.msra.mxu0 %v1931
      %1978 = vmatpush.msra.mxu0 %v1929
      %1979 = vmatpush.msra.mxu0 %v1927
      %1980 = vmatpush.msra.mxu0 %v1925
      %1981 = vmatpush.msra.mxu0 %v1923
      %1982 = vmatpush.msra.mxu0 %v1921
      %1983 = vmatpush.msra.mxu0 %v1919
      %1984 = vmatpush.msra.mxu0 %v1917
      %1985 = vmatpush.msra.mxu0 %v1915
      %1986 = vmatpush.msra.mxu0 %v1913
      %1987 = vmatmul.f32.gmra.mxu0 %v1911
      %v1988 = vpop.f32.mrf.mxu0
      %v1989 = vadd.f32 %v1949, %v1988
      %1990 = vdwg.mxu0
      %v1991 = vmul.f32 %v1969, %v1969
      %v1992 = vmul.f32 %v1989, %v1989
      %v1995 = vrot.slane %v1991, 4
      %v1996 = vrot.slane %v1992, 4
      %v1999 = vsel %vm389, %v1969, %v1995
      %v2000 = vsel %vm389, %v1989, %v1996
      %2001 = vrot.lane.b32.xlu0 %v1999, 127
      %v2002 = vpop.permute.xlu0 %2001
      %2003 = vrot.lane.b32.xlu0 %v2000, 127
      %v2004 = vpop.permute.xlu0 %2003
      %v2005 = vsel %vm778, %v2002, %v2004
      %v2006 = vsel %vm778, %v2004, %v2002
      %2007 = vrot.lane.b32.xlu0 %v1999, 1
      %v2008 = vpop.permute.xlu0 %2007
      %2009 = vrot.lane.b32.xlu0 %v2000, 1
      %v2010 = vpop.permute.xlu0 %2009
      %v2011 = vsel %vm785, %v2008, %v2010
      %v2012 = vsel %vm785, %v2010, %v2008
      %v2013 = vsel %vm790, %v2005, %v2012
      %v2014 = vsel %vm791, %v2006, %v2011
      %v2015 = vadd.f32 %v1999, %v2013
      %v2016 = vadd.f32 %v2000, %v2014
      %2017 = vrot.lane.b32.xlu0 %v2015, 126
      %v2018 = vpop.permute.xlu0 %2017
      %2019 = vrot.lane.b32.xlu0 %v2016, 126
      %v2020 = vpop.permute.xlu0 %2019
      %v2021 = vsel %vm800, %v2018, %v2020
      %v2022 = vsel %vm800, %v2020, %v2018
      %2023 = vrot.lane.b32.xlu0 %v2015, 2
      %v2024 = vpop.permute.xlu0 %2023
      %2025 = vrot.lane.b32.xlu0 %v2016, 2
      %v2026 = vpop.permute.xlu0 %2025
      %v2027 = vsel %vm807, %v2024, %v2026
      %v2028 = vsel %vm807, %v2026, %v2024
      %v2029 = vsel %vm812, %v2021, %v2028
      %v2030 = vsel %vm813, %v2022, %v2027
      %v2031 = vadd.f32 %v2015, %v2029
      %v2032 = vadd.f32 %v2016, %v2030
      %2033 = vrot.lane.b32.xlu0 %v2031, 124
      %v2034 = vpop.permute.xlu0 %2033
      %2035 = vrot.lane.b32.xlu0 %v2032, 124
      %v2036 = vpop.permute.xlu0 %2035
      %v2037 = vsel %vm822, %v2034, %v2036
      %v2038 = vsel %vm822, %v2036, %v2034
      %2039 = vrot.lane.b32.xlu0 %v2031, 4
      %v2040 = vpop.permute.xlu0 %2039
      %2041 = vrot.lane.b32.xlu0 %v2032, 4
      %v2042 = vpop.permute.xlu0 %2041
      %v2043 = vsel %vm829, %v2040, %v2042
      %v2044 = vsel %vm829, %v2042, %v2040
      %v2045 = vsel %vm834, %v2037, %v2044
      %v2046 = vsel %vm835, %v2038, %v2043
      %v2047 = vadd.f32 %v2031, %v2045
      %v2048 = vadd.f32 %v2032, %v2046
      %2049 = vrot.lane.b32.xlu0 %v2047, 120
      %v2050 = vpop.permute.xlu0 %2049
      %2051 = vrot.lane.b32.xlu0 %v2048, 120
      %v2052 = vpop.permute.xlu0 %2051
      %v2053 = vsel %vm844, %v2050, %v2052
      %v2054 = vsel %vm844, %v2052, %v2050
      %2055 = vrot.lane.b32.xlu0 %v2047, 8
      %v2056 = vpop.permute.xlu0 %2055
      %2057 = vrot.lane.b32.xlu0 %v2048, 8
      %v2058 = vpop.permute.xlu0 %2057
      %v2059 = vsel %vm851, %v2056, %v2058
      %v2060 = vsel %vm851, %v2058, %v2056
      %v2061 = vsel %vm856, %v2053, %v2060
      %v2062 = vsel %vm857, %v2054, %v2059
      %v2063 = vadd.f32 %v2047, %v2061
      %v2064 = vadd.f32 %v2048, %v2062
      %v2065 = vmul.f32 %v2063, 0.0625
      %v2066 = vmul.f32 %v2064, 0.0625
      %v2067 = vmul.f32 %v2065, %v2065
      %v2068 = vmul.f32 %v2066, %v2066
      %v2071 = vrot.slane %v2067, 4
      %v2072 = vrot.slane %v2068, 4
      %v2075 = vsub.f32 %v2065, %v2071
      %v2076 = vsub.f32 %v2066, %v2072
      %v2077 = vsub.f32 %v1969, %v2065
      %v2078 = vsub.f32 %v1989, %v2066
      %v2079 = vadd.f32 %v2075, 1e-05
      %v2080 = vadd.f32 %v2076, 1e-05
      %v2081 = vrsqrt.pop %v2079
      %v2082 = vmul.f32 %v2081, %v2079
      %v2083 = vmul.f32 %v2082, %v2081
      %v2084 = vmul.f32 0.5, %v2083
      %v2085 = vsub.f32 1.5, %v2084
      %v2086 = vmul.f32 %v2081, %v2085
      %vm2087 = vweird.f32 %v2079
      %vm2088 = vweird.f32 %v2081
      %vm2089 = vmor %vm2087, %vm2088
      %v2090 = vsel %vm2089, %v2081, %v2086
      %v2091 = vrsqrt.pop %v2080
      %v2092 = vmul.f32 %v2091, %v2080
      %v2093 = vmul.f32 %v2092, %v2091
      %v2094 = vmul.f32 0.5, %v2093
      %v2095 = vsub.f32 1.5, %v2094
      %v2096 = vmul.f32 %v2091, %v2095
      %vm2097 = vweird.f32 %v2080
      %vm2098 = vweird.f32 %v2091
      %vm2099 = vmor %vm2097, %vm2098
      %v2100 = vsel %vm2099, %v2091, %v2096
      %v2103 = vrot.slane %v2090, 4
      %v2104 = vrot.slane %v2100, 4
      %v2107 = vmul.f32 %v2077, %v2103
      %v2108 = vmul.f32 %v2078, %v2104
      %s2109 = scalar_lea.vmem %s3, 4
      %v2110 = vld [vmem:[%s2109] sm:$0x3]
      %v2112 = vperm.slane %v2110, 0
      %v2113 = vperm.slane %v2110, 1
      %v2116 = vmul.f32 %v2107, %v2112
      %v2117 = vmul.f32 %v2108, %v2113
      %s2118 = scalar_lea.vmem %s4, 4
      %v2119 = vld [vmem:[%s2118] sm:$0x3]
      %v2121 = vperm.slane %v2119, 0
      %v2122 = vperm.slane %v2119, 1
      %v2125 = vadd.f32 %v2116, %v2121
      %v2126 = vadd.f32 %v2117, %v2122
      %vm2127 = vcmp.gt.f32.partialorder %v2125, 0.0
      %vm2128 = vcmp.gt.f32.partialorder %v2126, 0.0
      %s2129 = scalar_lea.vmem %s5, 8
      %v2130 = vld [vmem:[%s2129] sm:$0xf]
      %2132 = vset.pattern.permute.xlu0 0
      %2133 = vperm.xlu0 %2132, %v2130
      %v2134 = vpop.permute.xlu0 %2133
      %v2136 = vmul.f32 %v2134, %v2125
      %v2137 = vmul.f32 %v2134, %v2126
      %v2138 = vsel %vm2127, %v2125, %v2136
      %v2139 = vsel %vm2128, %v2126, %v2137
      %v2142 = vrot.slane %v2138, 4
      %v2143 = vrot.slane %v2139, 4
      %2146 = vst [vmem:[#allocation2 + $0x48] sm:$0xf0] %v2142
      %2147 = vst [vmem:[#allocation2 + $0x50] sm:$0xf0] %v2143
      %v2148 = vld [vmem:[#allocation2 + $0x8] sm:$0xff]
      %v2149 = vld [vmem:[#allocation2 + $0x10] sm:$0xff]
      %v2150 = vld [vmem:[#allocation2 + $0x18] sm:$0xff]
      %v2151 = vld [vmem:[#allocation2 + $0x38] sm:$0xff]
      %v2152 = vld [vmem:[#allocation2 + $0x40] sm:$0xff]
      %v2153 = vld [vmem:[#allocation2 + $0x48] sm:$0xff]
      %v2154 = vld [vmem:[#allocation2 + $0x68] sm:$0xf]
      %v2155 = vld [vmem:[#allocation2 + $0x70] sm:$0xf]
      %v2156 = vld [vmem:[#allocation2 + $0x78] sm:$0xf]
      %2166 = vrot.lane.b32.xlu0 %v2148, 1
      %v2167 = vpop.permute.xlu0 %2166
      %2168 = vrot.lane.b32.xlu0 %v2149, 1
      %v2169 = vpop.permute.xlu0 %2168
      %2170 = vrot.lane.b32.xlu0 %v2150, 1
      %v2171 = vpop.permute.xlu0 %2170
      %2172 = vrot.lane.b32.xlu0 %v2151, 1
      %v2173 = vpop.permute.xlu0 %2172
      %2174 = vrot.lane.b32.xlu0 %v2152, 1
      %v2175 = vpop.permute.xlu0 %2174
      %2176 = vrot.lane.b32.xlu0 %v2153, 1
      %v2177 = vpop.permute.xlu0 %2176
      %2178 = vrot.lane.b32.xlu0 %v2154, 1
      %v2179 = vpop.permute.xlu0 %2178
      %2180 = vrot.lane.b32.xlu0 %v2155, 1
      %v2181 = vpop.permute.xlu0 %2180
      %2182 = vrot.lane.b32.xlu0 %v2156, 1
      %v2183 = vpop.permute.xlu0 %2182
      %v2184 = vsel %vm543, %v2167, %v2169
      %v2185 = vsel %vm543, %v2169, %v2171
      %v2186 = vsel %vm543, %v2173, %v2175
      %v2187 = vsel %vm543, %v2175, %v2177
      %v2188 = vsel %vm543, %v2179, %v2181
      %v2189 = vsel %vm543, %v2181, %v2183
      %v2196 = vsel %vm317, %v2184, 0.0
      %v2197 = vsel %vm318, %v2185, 0.0
      %v2198 = vsel %vm317, %v2186, 0.0
      %v2199 = vsel %vm318, %v2187, 0.0
      %v2200 = vsel %vm317, %v2188, 0.0
      %v2201 = vsel %vm318, %v2189, 0.0
      %2202 = vst [vmem:[#allocation3] sm:$0xff] %v2196
      %2203 = vst [vmem:[#allocation3 + $0x8] sm:$0xff] %v2197
      %2204 = vst [vmem:[#allocation3 + $0x10] sm:$0xff] %v2198
      %2205 = vst [vmem:[#allocation3 + $0x18] sm:$0xff] %v2199
      %2206 = vst [vmem:[#allocation3 + $0x20] sm:$0xf] %v2200
      %2207 = vst [vmem:[#allocation3 + $0x28] sm:$0xf] %v2201
      %v2208 = vld [vmem:[#allocation2 + $0x10] sm:$0xff]
      %v2209 = vld [vmem:[#allocation2 + $0x18] sm:$0xff]
      %v2210 = vld [vmem:[#allocation2 + $0x40] sm:$0xff]
      %v2211 = vld [vmem:[#allocation2 + $0x48] sm:$0xff]
      %v2212 = vld [vmem:[#allocation2 + $0x70] sm:$0xf]
      %v2213 = vld [vmem:[#allocation2 + $0x78] sm:$0xf]
      %v2220 = vrot.slane %v2208, 4
      %v2221 = vrot.slane %v2209, 4
      %v2222 = vrot.slane %v2210, 4
      %v2223 = vsel %vm389, %v2220, %v2222
      %v2224 = vrot.slane %v2211, 4
      %v2225 = vsel %vm389, %v2221, %v2224
      %v2226 = vrot.slane %v2212, 4
      %v2227 = vsel %vm389, %v2222, %v2226
      %v2228 = vrot.slane %v2213, 4
      %v2229 = vsel %vm389, %v2224, %v2228
      %2236 = vst [vmem:[#allocation3 + $0x20] sm:$0xf0] %v2220
      %2237 = vst [vmem:[#allocation3 + $0x28] sm:$0xf0] %v2221
      %2238 = vst [vmem:[#allocation3 + $0x30] sm:$0xff] %v2223
      %2239 = vst [vmem:[#allocation3 + $0x38] sm:$0xff] %v2225
      %2240 = vst [vmem:[#allocation3 + $0x40] sm:$0xff] %v2227
      %2241 = vst [vmem:[#allocation3 + $0x48] sm:$0xff] %v2229
      %v2242 = vld [vmem:[#allocation2 + $0x10] sm:$0xff]
      %v2243 = vld [vmem:[#allocation2 + $0x18] sm:$0xff]
      %v2244 = vld [vmem:[#allocation2 + $0x20] sm:$0xff]
      %v2245 = vld [vmem:[#allocation2 + $0x40] sm:$0xff]
      %v2246 = vld [vmem:[#allocation2 + $0x48] sm:$0xff]
      %v2247 = vld [vmem:[#allocation2 + $0x50] sm:$0xff]
      %v2248 = vld [vmem:[#allocation2 + $0x70] sm:$0xf]
      %v2249 = vld [vmem:[#allocation2 + $0x78] sm:$0xf]
      %v2250 = vld [vmem:[#allocation2 + $0x80] sm:$0xf]
      %2260 = vrot.lane.b32.xlu0 %v2242, 127
      %v2261 = vpop.permute.xlu0 %2260
      %2262 = vrot.lane.b32.xlu0 %v2243, 127
      %v2263 = vpop.permute.xlu0 %2262
      %2264 = vrot.lane.b32.xlu0 %v2244, 127
      %v2265 = vpop.permute.xlu0 %2264
      %2266 = vrot.lane.b32.xlu0 %v2245, 127
      %v2267 = vpop.permute.xlu0 %2266
      %2268 = vrot.lane.b32.xlu0 %v2246, 127
      %v2269 = vpop.permute.xlu0 %2268
      %2270 = vrot.lane.b32.xlu0 %v2247, 127
      %v2271 = vpop.permute.xlu0 %2270
      %2272 = vrot.lane.b32.xlu0 %v2248, 127
      %v2273 = vpop.permute.xlu0 %2272
      %2274 = vrot.lane.b32.xlu0 %v2249, 127
      %v2275 = vpop.permute.xlu0 %2274
      %2276 = vrot.lane.b32.xlu0 %v2250, 127
      %v2277 = vpop.permute.xlu0 %2276
      %v2278 = vsel %vm638, %v2261, %v2263
      %v2279 = vsel %vm638, %v2263, %v2265
      %v2280 = vsel %vm638, %v2267, %v2269
      %v2281 = vsel %vm638, %v2269, %v2271
      %v2282 = vsel %vm638, %v2273, %v2275
      %v2283 = vsel %vm638, %v2275, %v2277
      %v2290 = vsel %vm453, %v2278, 0.0
      %v2291 = vsel %vm454, %v2279, 0.0
      %v2292 = vsel %vm453, %v2280, 0.0
      %v2293 = vsel %vm454, %v2281, 0.0
      %v2294 = vsel %vm453, %v2282, 0.0
      %v2295 = vsel %vm454, %v2283, 0.0
      %2296 = vst [vmem:[#allocation3 + $0x50] sm:$0xff] %v2290
      %2297 = vst [vmem:[#allocation3 + $0x58] sm:$0xff] %v2291
      %2298 = vst [vmem:[#allocation3 + $0x60] sm:$0xff] %v2292
      %2299 = vst [vmem:[#allocation3 + $0x68] sm:$0xff] %v2293
      %2300 = vst [vmem:[#allocation3 + $0x70] sm:$0xf] %v2294
      %2301 = vst [vmem:[#allocation3 + $0x78] sm:$0xf] %v2295
      %v2302 = vld [vmem:[#allocation2 + $0x10] sm:$0xff]
      %v2303 = vld [vmem:[#allocation2 + $0x18] sm:$0xff]
      %v2304 = vld [vmem:[#allocation2 + $0x20] sm:$0xff]
      %v2305 = vld [vmem:[#allocation2 + $0x40] sm:$0xff]
      %v2306 = vld [vmem:[#allocation2 + $0x48] sm:$0xff]
      %v2307 = vld [vmem:[#allocation2 + $0x50] sm:$0xff]
      %v2308 = vld [vmem:[#allocation2 + $0x70] sm:$0xf]
      %v2309 = vld [vmem:[#allocation2 + $0x78] sm:$0xf]
      %v2310 = vld [vmem:[#allocation2 + $0x80] sm:$0xf]
      %2320 = vrot.lane.b32.xlu0 %v2302, 1
      %v2321 = vpop.permute.xlu0 %2320
      %2322 = vrot.lane.b32.xlu0 %v2303, 1
      %v2323 = vpop.permute.xlu0 %2322
      %2324 = vrot.lane.b32.xlu0 %v2304, 1
      %v2325 = vpop.permute.xlu0 %2324
      %2326 = vrot.lane.b32.xlu0 %v2305, 1
      %v2327 = vpop.permute.xlu0 %2326
      %2328 = vrot.lane.b32.xlu0 %v2306, 1
      %v2329 = vpop.permute.xlu0 %2328
      %2330 = vrot.lane.b32.xlu0 %v2307, 1
      %v2331 = vpop.permute.xlu0 %2330
      %2332 = vrot.lane.b32.xlu0 %v2308, 1
      %v2333 = vpop.permute.xlu0 %2332
      %2334 = vrot.lane.b32.xlu0 %v2309, 1
      %v2335 = vpop.permute.xlu0 %2334
      %2336 = vrot.lane.b32.xlu0 %v2310, 1
      %v2337 = vpop.permute.xlu0 %2336
      %v2338 = vsel %vm543, %v2321, %v2323
      %v2339 = vsel %vm543, %v2323, %v2325
      %v2340 = vsel %vm543, %v2327, %v2329
      %v2341 = vsel %vm543, %v2329, %v2331
      %v2342 = vsel %vm543, %v2333, %v2335
      %v2343 = vsel %vm543, %v2335, %v2337
      %v2350 = vsel %vm317, %v2338, 0.0
      %v2351 = vsel %vm318, %v2339, 0.0
      %v2352 = vsel %vm317, %v2340, 0.0
      %v2353 = vsel %vm318, %v2341, 0.0
      %v2354 = vsel %vm317, %v2342, 0.0
      %v2355 = vsel %vm318, %v2343, 0.0
      %v2362 = vrot.slane %v2350, 4
      %v2363 = vrot.slane %v2351, 4
      %v2364 = vrot.slane %v2352, 4
      %v2365 = vsel %vm389, %v2362, %v2364
      %v2366 = vrot.slane %v2353, 4
      %v2367 = vsel %vm389, %v2363, %v2366
      %v2368 = vrot.slane %v2354, 4
      %v2369 = vsel %vm389, %v2364, %v2368
      %v2370 = vrot.slane %v2355, 4
      %v2371 = vsel %vm389, %v2366, %v2370
      %2378 = vst [vmem:[#allocation3 + $0x70] sm:$0xf0] %v2362
      %2379 = vst [vmem:[#allocation3 + $0x78] sm:$0xf0] %v2363
      %2380 = vst [vmem:[#allocation3 + $0x80] sm:$0xff] %v2365
      %2381 = vst [vmem:[#allocation3 + $0x88] sm:$0xff] %v2367
      %2382 = vst [vmem:[#allocation3 + $0x90] sm:$0xff] %v2369
      %2383 = vst [vmem:[#allocation3 + $0x98] sm:$0xff] %v2371
      %v2384 = vld [vmem:[#allocation2 + $0x18] sm:$0xff]
      %v2385 = vld [vmem:[#allocation2 + $0x20] sm:$0xff]
      %v2386 = vld [vmem:[#allocation2 + $0x48] sm:$0xff]
      %v2387 = vld [vmem:[#allocation2 + $0x50] sm:$0xff]
      %v2388 = vld [vmem:[#allocation2 + $0x78] sm:$0xf]
      %v2389 = vld [vmem:[#allocation2 + $0x80] sm:$0xf]
      %2390 = vst [vmem:[#allocation3 + $0xa0] sm:$0xff] %v2384
      %2391 = vst [vmem:[#allocation3 + $0xa8] sm:$0xff] %v2385
      %2392 = vst [vmem:[#allocation3 + $0xb0] sm:$0xff] %v2386
      %2393 = vst [vmem:[#allocation3 + $0xb8] sm:$0xff] %v2387
      %2394 = vst [vmem:[#allocation3 + $0xc0] sm:$0xf] %v2388
      %2395 = vst [vmem:[#allocation3 + $0xc8] sm:$0xf] %v2389
      %v2396 = vld [vmem:[#allocation2 + $0x18] sm:$0xff]
      %v2397 = vld [vmem:[#allocation2 + $0x20] sm:$0xff]
      %v2398 = vld [vmem:[#allocation2 + $0x28] sm:$0xff]
      %v2399 = vld [vmem:[#allocation2 + $0x48] sm:$0xff]
      %v2400 = vld [vmem:[#allocation2 + $0x50] sm:$0xff]
      %v2401 = vld [vmem:[#allocation2 + $0x58] sm:$0xff]
      %v2402 = vld [vmem:[#allocation2 + $0x78] sm:$0xf]
      %v2403 = vld [vmem:[#allocation2 + $0x80] sm:$0xf]
      %v2404 = vld [vmem:[#allocation2 + $0x88] sm:$0xf]
      %2414 = vrot.lane.b32.xlu0 %v2396, 127
      %v2415 = vpop.permute.xlu0 %2414
      %2416 = vrot.lane.b32.xlu0 %v2397, 127
      %v2417 = vpop.permute.xlu0 %2416
      %2418 = vrot.lane.b32.xlu0 %v2398, 127
      %v2419 = vpop.permute.xlu0 %2418
      %2420 = vrot.lane.b32.xlu0 %v2399, 127
      %v2421 = vpop.permute.xlu0 %2420
      %2422 = vrot.lane.b32.xlu0 %v2400, 127
      %v2423 = vpop.permute.xlu0 %2422
      %2424 = vrot.lane.b32.xlu0 %v2401, 127
      %v2425 = vpop.permute.xlu0 %2424
      %2426 = vrot.lane.b32.xlu0 %v2402, 127
      %v2427 = vpop.permute.xlu0 %2426
      %2428 = vrot.lane.b32.xlu0 %v2403, 127
      %v2429 = vpop.permute.xlu0 %2428
      %2430 = vrot.lane.b32.xlu0 %v2404, 127
      %v2431 = vpop.permute.xlu0 %2430
      %v2432 = vsel %vm638, %v2415, %v2417
      %v2433 = vsel %vm638, %v2417, %v2419
      %v2434 = vsel %vm638, %v2421, %v2423
      %v2435 = vsel %vm638, %v2423, %v2425
      %v2436 = vsel %vm638, %v2427, %v2429
      %v2437 = vsel %vm638, %v2429, %v2431
      %v2444 = vsel %vm453, %v2432, 0.0
      %v2445 = vsel %vm454, %v2433, 0.0
      %v2446 = vsel %vm453, %v2434, 0.0
      %v2447 = vsel %vm454, %v2435, 0.0
      %v2448 = vsel %vm453, %v2436, 0.0
      %v2449 = vsel %vm454, %v2437, 0.0
      %v2456 = vrot.slane %v2444, 4
      %v2457 = vrot.slane %v2445, 4
      %v2458 = vrot.slane %v2446, 4
      %v2459 = vsel %vm389, %v2456, %v2458
      %v2460 = vrot.slane %v2447, 4
      %v2461 = vsel %vm389, %v2457, %v2460
      %v2462 = vrot.slane %v2448, 4
      %v2463 = vsel %vm389, %v2458, %v2462
      %v2464 = vrot.slane %v2449, 4
      %v2465 = vsel %vm389, %v2460, %v2464
      %2472 = vst [vmem:[#allocation3 + $0xc0] sm:$0xf0] %v2456
      %2473 = vst [vmem:[#allocation3 + $0xc8] sm:$0xf0] %v2457
      %2474 = vst [vmem:[#allocation3 + $0xd0] sm:$0xff] %v2459
      %2475 = vst [vmem:[#allocation3 + $0xd8] sm:$0xff] %v2461
      %2476 = vst [vmem:[#allocation3 + $0xe0] sm:$0xff] %v2463
      %2477 = vst [vmem:[#allocation3 + $0xe8] sm:$0xff] %v2465
      %s2478 = scalar_lea.vmem %s1, 12
      %v2479 = vld [vmem:[%s2478] sm:$0xf]
      %v2480 = vld [vmem:[#allocation3] sm:$0xff]
      %v2481 = vld [vmem:[#allocation3 + $0x8] sm:$0xff]
      %v2482 = vld [vmem:[#allocation3 + $0x10] sm:$0xff]
      %v2483 = vld [vmem:[#allocation3 + $0x18] sm:$0xff]
      %v2484 = vld [vmem:[#allocation3 + $0x20] sm:$0xff]
      %v2485 = vld [vmem:[#allocation3 + $0x28] sm:$0xff]
      %v2486 = vld [vmem:[#allocation3 + $0x30] sm:$0xff]
      %v2487 = vld [vmem:[#allocation3 + $0x38] sm:$0xff]
      %v2488 = vld [vmem:[#allocation3 + $0x40] sm:$0xff]
      %v2489 = vld [vmem:[#allocation3 + $0x48] sm:$0xff]
      %v2490 = vld [vmem:[#allocation3 + $0x50] sm:$0xff]
      %v2491 = vld [vmem:[#allocation3 + $0x58] sm:$0xff]
      %v2492 = vld [vmem:[#allocation3 + $0x60] sm:$0xff]
      %v2493 = vld [vmem:[#allocation3 + $0x68] sm:$0xff]
      %v2494 = vld [vmem:[#allocation3 + $0x70] sm:$0xff]
      %v2495 = vld [vmem:[#allocation3 + $0x78] sm:$0xff]
      %v2496 = vld [vmem:[#allocation3 + $0x80] sm:$0xff]
      %v2497 = vld [vmem:[#allocation3 + $0x88] sm:$0xff]
      %v2498 = vld [vmem:[#allocation3 + $0x90] sm:$0xff]
      %v2499 = vld [vmem:[#allocation3 + $0x98] sm:$0xff]
      %v2500 = vld [vmem:[#allocation3 + $0xa0] sm:$0xff]
      %v2501 = vld [vmem:[#allocation3 + $0xa8] sm:$0xff]
      %v2502 = vld [vmem:[#allocation3 + $0xb0] sm:$0xff]
      %v2503 = vld [vmem:[#allocation3 + $0xb8] sm:$0xff]
      %v2504 = vld [vmem:[#allocation3 + $0xc0] sm:$0xff]
      %v2505 = vld [vmem:[#allocation3 + $0xc8] sm:$0xff]
      %v2506 = vld [vmem:[#allocation3 + $0xd0] sm:$0xff]
      %v2507 = vld [vmem:[#allocation3 + $0xd8] sm:$0xff]
      %v2508 = vld [vmem:[#allocation3 + $0xe0] sm:$0xff]
      %v2509 = vld [vmem:[#allocation3 + $0xe8] sm:$0xff]
      %v2510 = vld [vmem:[#allocation3 + $0xf0] sm:$0xff]
      %v2511 = vld [vmem:[#allocation3 + $0xf8] sm:$0xff]
      %s2512 = scalar_lea.vmem %s2, 12
      %v2513 = vld [vmem:[%s2512] sm:$0xf]
      %2515 = vset.pattern.permute.xlu0 0
      %2516 = vperm.xlu0 %2515, %v2513
      %v2517 = vpop.permute.xlu0 %2516
      %2519 = vmatpush.msra.mxu0 %v2510
      %2520 = vmatpush.msra.mxu0 %v2508
      %2521 = vmatpush.msra.mxu0 %v2506
      %2522 = vmatpush.msra.mxu0 %v2504
      %2523 = vmatpush.msra.mxu0 %v2502
      %2524 = vmatpush.msra.mxu0 %v2500
      %2525 = vmatpush.msra.mxu0 %v2498
      %2526 = vmatpush.msra.mxu0 %v2496
      %2527 = vmatpush.msra.mxu0 %v2494
      %2528 = vmatpush.msra.mxu0 %v2492
      %2529 = vmatpush.msra.mxu0 %v2490
      %2530 = vmatpush.msra.mxu0 %v2488
      %2531 = vmatpush.msra.mxu0 %v2486
      %2532 = vmatpush.msra.mxu0 %v2484
      %2533 = vmatpush.msra.mxu0 %v2482
      %2534 = vmatpush.msra.mxu0 %v2480
      %2535 = vmatmul.f32.gmra.mxu0 %v2479
      %v2536 = vpop.f32.mrf.mxu0
      %v2537 = vadd.f32 %v2517, %v2536
      %2538 = vdwg.mxu0
      %2539 = vmatpush.msra.mxu0 %v2511
      %2540 = vmatpush.msra.mxu0 %v2509
      %2541 = vmatpush.msra.mxu0 %v2507
      %2542 = vmatpush.msra.mxu0 %v2505
      %2543 = vmatpush.msra.mxu0 %v2503
      %2544 = vmatpush.msra.mxu0 %v2501
      %2545 = vmatpush.msra.mxu0 %v2499
      %2546 = vmatpush.msra.mxu0 %v2497
      %2547 = vmatpush.msra.mxu0 %v2495
      %2548 = vmatpush.msra.mxu0 %v2493
      %2549 = vmatpush.msra.mxu0 %v2491
      %2550 = vmatpush.msra.mxu0 %v2489
      %2551 = vmatpush.msra.mxu0 %v2487
      %2552 = vmatpush.msra.mxu0 %v2485
      %2553 = vmatpush.msra.mxu0 %v2483
      %2554 = vmatpush.msra.mxu0 %v2481
      %2555 = vmatmul.f32.gmra.mxu0 %v2479
      %v2556 = vpop.f32.mrf.mxu0
      %v2557 = vadd.f32 %v2517, %v2556
      %2558 = vdwg.mxu0
      %v2559 = vmul.f32 %v2537, %v2537
      %v2560 = vmul.f32 %v2557, %v2557
      %v2563 = vrot.slane %v2559, 4
      %v2564 = vrot.slane %v2560, 4
      %v2567 = vsel %vm389, %v2537, %v2563
      %v2568 = vsel %vm389, %v2557, %v2564
      %2569 = vrot.lane.b32.xlu0 %v2567, 127
      %v2570 = vpop.permute.xlu0 %2569
      %2571 = vrot.lane.b32.xlu0 %v2568, 127
      %v2572 = vpop.permute.xlu0 %2571
      %v2573 = vsel %vm778, %v2570, %v2572
      %v2574 = vsel %vm778, %v2572, %v2570
      %2575 = vrot.lane.b32.xlu0 %v2567, 1
      %v2576 = vpop.permute.xlu0 %2575
      %2577 = vrot.lane.b32.xlu0 %v2568, 1
      %v2578 = vpop.permute.xlu0 %2577
      %v2579 = vsel %vm785, %v2576, %v2578
      %v2580 = vsel %vm785, %v2578, %v2576
      %v2581 = vsel %vm790, %v2573, %v2580
      %v2582 = vsel %vm791, %v2574, %v2579
      %v2583 = vadd.f32 %v2567, %v2581
      %v2584 = vadd.f32 %v2568, %v2582
      %2585 = vrot.lane.b32.xlu0 %v2583, 126
      %v2586 = vpop.permute.xlu0 %2585
      %2587 = vrot.lane.b32.xlu0 %v2584, 126
      %v2588 = vpop.permute.xlu0 %2587
      %v2589 = vsel %vm800, %v2586, %v2588
      %v2590 = vsel %vm800, %v2588, %v2586
      %2591 = vrot.lane.b32.xlu0 %v2583, 2
      %v2592 = vpop.permute.xlu0 %2591
      %2593 = vrot.lane.b32.xlu0 %v2584, 2
      %v2594 = vpop.permute.xlu0 %2593
      %v2595 = vsel %vm807, %v2592, %v2594
      %v2596 = vsel %vm807, %v2594, %v2592
      %v2597 = vsel %vm812, %v2589, %v2596
      %v2598 = vsel %vm813, %v2590, %v2595
      %v2599 = vadd.f32 %v2583, %v2597
      %v2600 = vadd.f32 %v2584, %v2598
      %2601 = vrot.lane.b32.xlu0 %v2599, 124
      %v2602 = vpop.permute.xlu0 %2601
      %2603 = vrot.lane.b32.xlu0 %v2600, 124
      %v2604 = vpop.permute.xlu0 %2603
      %v2605 = vsel %vm822, %v2602, %v2604
      %v2606 = vsel %vm822, %v2604, %v2602
      %2607 = vrot.lane.b32.xlu0 %v2599, 4
      %v2608 = vpop.permute.xlu0 %2607
      %2609 = vrot.lane.b32.xlu0 %v2600, 4
      %v2610 = vpop.permute.xlu0 %2609
      %v2611 = vsel %vm829, %v2608, %v2610
      %v2612 = vsel %vm829, %v2610, %v2608
      %v2613 = vsel %vm834, %v2605, %v2612
      %v2614 = vsel %vm835, %v2606, %v2611
      %v2615 = vadd.f32 %v2599, %v2613
      %v2616 = vadd.f32 %v2600, %v2614
      %2617 = vrot.lane.b32.xlu0 %v2615, 120
      %v2618 = vpop.permute.xlu0 %2617
      %2619 = vrot.lane.b32.xlu0 %v2616, 120
      %v2620 = vpop.permute.xlu0 %2619
      %v2621 = vsel %vm844, %v2618, %v2620
      %v2622 = vsel %vm844, %v2620, %v2618
      %2623 = vrot.lane.b32.xlu0 %v2615, 8
      %v2624 = vpop.permute.xlu0 %2623
      %2625 = vrot.lane.b32.xlu0 %v2616, 8
      %v2626 = vpop.permute.xlu0 %2625
      %v2627 = vsel %vm851, %v2624, %v2626
      %v2628 = vsel %vm851, %v2626, %v2624
      %v2629 = vsel %vm856, %v2621, %v2628
      %v2630 = vsel %vm857, %v2622, %v2627
      %v2631 = vadd.f32 %v2615, %v2629
      %v2632 = vadd.f32 %v2616, %v2630
      %v2633 = vmul.f32 %v2631, 0.0625
      %v2634 = vmul.f32 %v2632, 0.0625
      %v2635 = vmul.f32 %v2633, %v2633
      %v2636 = vmul.f32 %v2634, %v2634
      %v2639 = vrot.slane %v2635, 4
      %v2640 = vrot.slane %v2636, 4
      %v2643 = vsub.f32 %v2633, %v2639
      %v2644 = vsub.f32 %v2634, %v2640
      %v2645 = vsub.f32 %v2537, %v2633
      %v2646 = vsub.f32 %v2557, %v2634
      %v2647 = vadd.f32 %v2643, 1e-05
      %v2648 = vadd.f32 %v2644, 1e-05
      %v2649 = vrsqrt.pop %v2647
      %v2650 = vmul.f32 %v2649, %v2647
      %v2651 = vmul.f32 %v2650, %v2649
      %v2652 = vmul.f32 0.5, %v2651
      %v2653 = vsub.f32 1.5, %v2652
      %v2654 = vmul.f32 %v2649, %v2653
      %vm2655 = vweird.f32 %v2647
      %vm2656 = vweird.f32 %v2649
      %vm2657 = vmor %vm2655, %vm2656
      %v2658 = vsel %vm2657, %v2649, %v2654
      %v2659 = vrsqrt.pop %v2648
      %v2660 = vmul.f32 %v2659, %v2648
      %v2661 = vmul.f32 %v2660, %v2659
      %v2662 = vmul.f32 0.5, %v2661
      %v2663 = vsub.f32 1.5, %v2662
      %v2664 = vmul.f32 %v2659, %v2663
      %vm2665 = vweird.f32 %v2648
      %vm2666 = vweird.f32 %v2659
      %vm2667 = vmor %vm2665, %vm2666
      %v2668 = vsel %vm2667, %v2659, %v2664
      %v2671 = vrot.slane %v2658, 4
      %v2672 = vrot.slane %v2668, 4
      %v2675 = vmul.f32 %v2645, %v2671
      %v2676 = vmul.f32 %v2646, %v2672
      %s2677 = scalar_lea.vmem %s3, 6
      %v2678 = vld [vmem:[%s2677] sm:$0x3]
      %v2680 = vperm.slane %v2678, 0
      %v2681 = vperm.slane %v2678, 1
      %v2684 = vmul.f32 %v2675, %v2680
      %v2685 = vmul.f32 %v2676, %v2681
      %s2686 = scalar_lea.vmem %s4, 6
      %v2687 = vld [vmem:[%s2686] sm:$0x3]
      %v2689 = vperm.slane %v2687, 0
      %v2690 = vperm.slane %v2687, 1
      %v2693 = vadd.f32 %v2684, %v2689
      %v2694 = vadd.f32 %v2685, %v2690
      %vm2695 = vcmp.gt.f32.partialorder %v2693, 0.0
      %vm2696 = vcmp.gt.f32.partialorder %v2694, 0.0
      %s2697 = scalar_lea.vmem %s5, 12
      %v2698 = vld [vmem:[%s2697] sm:$0xf]
      %2700 = vset.pattern.permute.xlu0 0
      %2701 = vperm.xlu0 %2700, %v2698
      %v2702 = vpop.permute.xlu0 %2701
      %v2704 = vmul.f32 %v2702, %v2693
      %v2705 = vmul.f32 %v2702, %v2694
      %v2706 = vsel %vm2695, %v2693, %v2704
      %v2707 = vsel %vm2696, %v2694, %v2705
      %2708 = vst [vmem:[#allocation2 + $0x78] sm:$0xf] %v2706
      %2709 = vst [vmem:[#allocation2 + $0x80] sm:$0xf] %v2707
      %v2710 = vld [vmem:[#allocation2] sm:$0xff]
      %v2711 = vld [vmem:[#allocation2 + $0x8] sm:$0xff]
      %v2712 = vld [vmem:[#allocation2 + $0x10] sm:$0xff]
      %v2713 = vld [vmem:[#allocation2 + $0x30] sm:$0xff]
      %v2714 = vld [vmem:[#allocation2 + $0x38] sm:$0xff]
      %v2715 = vld [vmem:[#allocation2 + $0x40] sm:$0xff]
      %v2716 = vld [vmem:[#allocation2 + $0x60] sm:$0xf]
      %v2717 = vld [vmem:[#allocation2 + $0x68] sm:$0xf]
      %v2718 = vld [vmem:[#allocation2 + $0x70] sm:$0xf]
      %2728 = vrot.lane.b32.xlu0 %v2710, 1
      %v2729 = vpop.permute.xlu0 %2728
      %2730 = vrot.lane.b32.xlu0 %v2711, 1
      %v2731 = vpop.permute.xlu0 %2730
      %2732 = vrot.lane.b32.xlu0 %v2712, 1
      %v2733 = vpop.permute.xlu0 %2732
      %2734 = vrot.lane.b32.xlu0 %v2713, 1
      %v2735 = vpop.permute.xlu0 %2734
      %2736 = vrot.lane.b32.xlu0 %v2714, 1
      %v2737 = vpop.permute.xlu0 %2736
      %2738 = vrot.lane.b32.xlu0 %v2715, 1
      %v2739 = vpop.permute.xlu0 %2738
      %2740 = vrot.lane.b32.xlu0 %v2716, 1
      %v2741 = vpop.permute.xlu0 %2740
      %2742 = vrot.lane.b32.xlu0 %v2717, 1
      %v2743 = vpop.permute.xlu0 %2742
      %2744 = vrot.lane.b32.xlu0 %v2718, 1
      %v2745 = vpop.permute.xlu0 %2744
      %v2746 = vsel %vm543, %v2729, %v2731
      %v2747 = vsel %vm543, %v2731, %v2733
      %v2748 = vsel %vm543, %v2735, %v2737
      %v2749 = vsel %vm543, %v2737, %v2739
      %v2750 = vsel %vm543, %v2741, %v2743
      %v2751 = vsel %vm543, %v2743, %v2745
      %v2758 = vsel %vm317, %v2746, 0.0
      %v2759 = vsel %vm318, %v2747, 0.0
      %v2760 = vsel %vm317, %v2748, 0.0
      %v2761 = vsel %vm318, %v2749, 0.0
      %v2762 = vsel %vm317, %v2750, 0.0
      %v2763 = vsel %vm318, %v2751, 0.0
      %2764 = vst [vmem:[#allocation3] sm:$0xff] %v2758
      %2765 = vst [vmem:[#allocation3 + $0x8] sm:$0xff] %v2759
      %2766 = vst [vmem:[#allocation3 + $0x10] sm:$0xff] %v2760
      %2767 = vst [vmem:[#allocation3 + $0x18] sm:$0xff] %v2761
      %2768 = vst [vmem:[#allocation3 + $0x20] sm:$0xf] %v2762
      %2769 = vst [vmem:[#allocation3 + $0x28] sm:$0xf] %v2763
      %v2770 = vld [vmem:[#allocation2 + $0x8] sm:$0xff]
      %v2771 = vld [vmem:[#allocation2 + $0x10] sm:$0xff]
      %v2772 = vld [vmem:[#allocation2 + $0x38] sm:$0xff]
      %v2773 = vld [vmem:[#allocation2 + $0x40] sm:$0xff]
      %v2774 = vld [vmem:[#allocation2 + $0x68] sm:$0xf]
      %v2775 = vld [vmem:[#allocation2 + $0x70] sm:$0xf]
      %v2782 = vrot.slane %v2770, 4
      %v2783 = vrot.slane %v2771, 4
      %v2784 = vrot.slane %v2772, 4
      %v2785 = vsel %vm389, %v2782, %v2784
      %v2786 = vrot.slane %v2773, 4
      %v2787 = vsel %vm389, %v2783, %v2786
      %v2788 = vrot.slane %v2774, 4
      %v2789 = vsel %vm389, %v2784, %v2788
      %v2790 = vrot.slane %v2775, 4
      %v2791 = vsel %vm389, %v2786, %v2790
      %2798 = vst [vmem:[#allocation3 + $0x20] sm:$0xf0] %v2782
      %2799 = vst [vmem:[#allocation3 + $0x28] sm:$0xf0] %v2783
      %2800 = vst [vmem:[#allocation3 + $0x30] sm:$0xff] %v2785
      %2801 = vst [vmem:[#allocation3 + $0x38] sm:$0xff] %v2787
      %2802 = vst [vmem:[#allocation3 + $0x40] sm:$0xff] %v2789
      %2803 = vst [vmem:[#allocation3 + $0x48] sm:$0xff] %v2791
      %v2804 = vld [vmem:[#allocation2 + $0x8] sm:$0xff]
      %v2805 = vld [vmem:[#allocation2 + $0x10] sm:$0xff]
      %v2806 = vld [vmem:[#allocation2 + $0x18] sm:$0xff]
      %v2807 = vld [vmem:[#allocation2 + $0x38] sm:$0xff]
      %v2808 = vld [vmem:[#allocation2 + $0x40] sm:$0xff]
      %v2809 = vld [vmem:[#allocation2 + $0x48] sm:$0xff]
      %v2810 = vld [vmem:[#allocation2 + $0x68] sm:$0xf]
      %v2811 = vld [vmem:[#allocation2 + $0x70] sm:$0xf]
      %v2812 = vld [vmem:[#allocation2 + $0x78] sm:$0xf]
      %2822 = vrot.lane.b32.xlu0 %v2804, 127
      %v2823 = vpop.permute.xlu0 %2822
      %2824 = vrot.lane.b32.xlu0 %v2805, 127
      %v2825 = vpop.permute.xlu0 %2824
      %2826 = vrot.lane.b32.xlu0 %v2806, 127
      %v2827 = vpop.permute.xlu0 %2826
      %2828 = vrot.lane.b32.xlu0 %v2807, 127
      %v2829 = vpop.permute.xlu0 %2828
      %2830 = vrot.lane.b32.xlu0 %v2808, 127
      %v2831 = vpop.permute.xlu0 %2830
      %2832 = vrot.lane.b32.xlu0 %v2809, 127
      %v2833 = vpop.permute.xlu0 %2832
      %2834 = vrot.lane.b32.xlu0 %v2810, 127
      %v2835 = vpop.permute.xlu0 %2834
      %2836 = vrot.lane.b32.xlu0 %v2811, 127
      %v2837 = vpop.permute.xlu0 %2836
      %2838 = vrot.lane.b32.xlu0 %v2812, 127
      %v2839 = vpop.permute.xlu0 %2838
      %v2840 = vsel %vm638, %v2823, %v2825
      %v2841 = vsel %vm638, %v2825, %v2827
      %v2842 = vsel %vm638, %v2829, %v2831
      %v2843 = vsel %vm638, %v2831, %v2833
      %v2844 = vsel %vm638, %v2835, %v2837
      %v2845 = vsel %vm638, %v2837, %v2839
      %v2852 = vsel %vm453, %v2840, 0.0
      %v2853 = vsel %vm454, %v2841, 0.0
      %v2854 = vsel %vm453, %v2842, 0.0
      %v2855 = vsel %vm454, %v2843, 0.0
      %v2856 = vsel %vm453, %v2844, 0.0
      %v2857 = vsel %vm454, %v2845, 0.0
      %2858 = vst [vmem:[#allocation3 + $0x50] sm:$0xff] %v2852
      %2859 = vst [vmem:[#allocation3 + $0x58] sm:$0xff] %v2853
      %2860 = vst [vmem:[#allocation3 + $0x60] sm:$0xff] %v2854
      %2861 = vst [vmem:[#allocation3 + $0x68] sm:$0xff] %v2855
      %2862 = vst [vmem:[#allocation3 + $0x70] sm:$0xf] %v2856
      %2863 = vst [vmem:[#allocation3 + $0x78] sm:$0xf] %v2857
      %v2864 = vld [vmem:[#allocation2 + $0x10] sm:$0xff]
      %v2865 = vld [vmem:[#allocation2 + $0x18] sm:$0xff]
      %v2866 = vld [vmem:[#allocation2 + $0x20] sm:$0xff]
      %v2867 = vld [vmem:[#allocation2 + $0x40] sm:$0xff]
      %v2868 = vld [vmem:[#allocation2 + $0x48] sm:$0xff]
      %v2869 = vld [vmem:[#allocation2 + $0x50] sm:$0xff]
      %v2870 = vld [vmem:[#allocation2 + $0x70] sm:$0xf]
      %v2871 = vld [vmem:[#allocation2 + $0x78] sm:$0xf]
      %v2872 = vld [vmem:[#allocation2 + $0x80] sm:$0xf]
      %2882 = vrot.lane.b32.xlu0 %v2864, 1
      %v2883 = vpop.permute.xlu0 %2882
      %2884 = vrot.lane.b32.xlu0 %v2865, 1
      %v2885 = vpop.permute.xlu0 %2884
      %2886 = vrot.lane.b32.xlu0 %v2866, 1
      %v2887 = vpop.permute.xlu0 %2886
      %2888 = vrot.lane.b32.xlu0 %v2867, 1
      %v2889 = vpop.permute.xlu0 %2888
      %2890 = vrot.lane.b32.xlu0 %v2868, 1
      %v2891 = vpop.permute.xlu0 %2890
      %2892 = vrot.lane.b32.xlu0 %v2869, 1
      %v2893 = vpop.permute.xlu0 %2892
      %2894 = vrot.lane.b32.xlu0 %v2870, 1
      %v2895 = vpop.permute.xlu0 %2894
      %2896 = vrot.lane.b32.xlu0 %v2871, 1
      %v2897 = vpop.permute.xlu0 %2896
      %2898 = vrot.lane.b32.xlu0 %v2872, 1
      %v2899 = vpop.permute.xlu0 %2898
      %v2900 = vsel %vm543, %v2883, %v2885
      %v2901 = vsel %vm543, %v2885, %v2887
      %v2902 = vsel %vm543, %v2889, %v2891
      %v2903 = vsel %vm543, %v2891, %v2893
      %v2904 = vsel %vm543, %v2895, %v2897
      %v2905 = vsel %vm543, %v2897, %v2899
      %v2912 = vsel %vm317, %v2900, 0.0
      %v2913 = vsel %vm318, %v2901, 0.0
      %v2914 = vsel %vm317, %v2902, 0.0
      %v2915 = vsel %vm318, %v2903, 0.0
      %v2916 = vsel %vm317, %v2904, 0.0
      %v2917 = vsel %vm318, %v2905, 0.0
      %v2924 = vrot.slane %v2912, 4
      %v2925 = vrot.slane %v2913, 4
      %v2926 = vrot.slane %v2914, 4
      %v2927 = vsel %vm389, %v2924, %v2926
      %v2928 = vrot.slane %v2915, 4
      %v2929 = vsel %vm389, %v2925, %v2928
      %v2930 = vrot.slane %v2916, 4
      %v2931 = vsel %vm389, %v2926, %v2930
      %v2932 = vrot.slane %v2917, 4
      %v2933 = vsel %vm389, %v2928, %v2932
      %2940 = vst [vmem:[#allocation3 + $0x70] sm:$0xf0] %v2924
      %2941 = vst [vmem:[#allocation3 + $0x78] sm:$0xf0] %v2925
      %2942 = vst [vmem:[#allocation3 + $0x80] sm:$0xff] %v2927
      %2943 = vst [vmem:[#allocation3 + $0x88] sm:$0xff] %v2929
      %2944 = vst [vmem:[#allocation3 + $0x90] sm:$0xff] %v2931
      %2945 = vst [vmem:[#allocation3 + $0x98] sm:$0xff] %v2933
      %v2946 = vld [vmem:[#allocation2 + $0x18] sm:$0xff]
      %v2947 = vld [vmem:[#allocation2 + $0x20] sm:$0xff]
      %v2948 = vld [vmem:[#allocation2 + $0x48] sm:$0xff]
      %v2949 = vld [vmem:[#allocation2 + $0x50] sm:$0xff]
      %v2950 = vld [vmem:[#allocation2 + $0x78] sm:$0xf]
      %v2951 = vld [vmem:[#allocation2 + $0x80] sm:$0xf]
      %2952 = vst [vmem:[#allocation3 + $0xa0] sm:$0xff] %v2946
      %2953 = vst [vmem:[#allocation3 + $0xa8] sm:$0xff] %v2947
      %2954 = vst [vmem:[#allocation3 + $0xb0] sm:$0xff] %v2948
      %2955 = vst [vmem:[#allocation3 + $0xb8] sm:$0xff] %v2949
      %2956 = vst [vmem:[#allocation3 + $0xc0] sm:$0xf] %v2950
      %2957 = vst [vmem:[#allocation3 + $0xc8] sm:$0xf] %v2951
      %v2958 = vld [vmem:[#allocation2 + $0x18] sm:$0xff]
      %v2959 = vld [vmem:[#allocation2 + $0x20] sm:$0xff]
      %v2960 = vld [vmem:[#allocation2 + $0x28] sm:$0xff]
      %v2961 = vld [vmem:[#allocation2 + $0x48] sm:$0xff]
      %v2962 = vld [vmem:[#allocation2 + $0x50] sm:$0xff]
      %v2963 = vld [vmem:[#allocation2 + $0x58] sm:$0xff]
      %v2964 = vld [vmem:[#allocation2 + $0x78] sm:$0xf]
      %v2965 = vld [vmem:[#allocation2 + $0x80] sm:$0xf]
      %v2966 = vld [vmem:[#allocation2 + $0x88] sm:$0xf]
      %2976 = vrot.lane.b32.xlu0 %v2958, 127
      %v2977 = vpop.permute.xlu0 %2976
      %2978 = vrot.lane.b32.xlu0 %v2959, 127
      %v2979 = vpop.permute.xlu0 %2978
      %2980 = vrot.lane.b32.xlu0 %v2960, 127
      %v2981 = vpop.permute.xlu0 %2980
      %2982 = vrot.lane.b32.xlu0 %v2961, 127
      %v2983 = vpop.permute.xlu0 %2982
      %2984 = vrot.lane.b32.xlu0 %v2962, 127
      %v2985 = vpop.permute.xlu0 %2984
      %2986 = vrot.lane.b32.xlu0 %v2963, 127
      %v2987 = vpop.permute.xlu0 %2986
      %2988 = vrot.lane.b32.xlu0 %v2964, 127
      %v2989 = vpop.permute.xlu0 %2988
      %2990 = vrot.lane.b32.xlu0 %v2965, 127
      %v2991 = vpop.permute.xlu0 %2990
      %2992 = vrot.lane.b32.xlu0 %v2966, 127
      %v2993 = vpop.permute.xlu0 %2992
      %v2994 = vsel %vm638, %v2977, %v2979
      %v2995 = vsel %vm638, %v2979, %v2981
      %v2996 = vsel %vm638, %v2983, %v2985
      %v2997 = vsel %vm638, %v2985, %v2987
      %v2998 = vsel %vm638, %v2989, %v2991
      %v2999 = vsel %vm638, %v2991, %v2993
      %v3006 = vsel %vm453, %v2994, 0.0
      %v3007 = vsel %vm454, %v2995, 0.0
      %v3008 = vsel %vm453, %v2996, 0.0
      %v3009 = vsel %vm454, %v2997, 0.0
      %v3010 = vsel %vm453, %v2998, 0.0
      %v3011 = vsel %vm454, %v2999, 0.0
      %v3018 = vrot.slane %v3006, 4
      %v3019 = vrot.slane %v3007, 4
      %v3020 = vrot.slane %v3008, 4
      %v3021 = vsel %vm389, %v3018, %v3020
      %v3022 = vrot.slane %v3009, 4
      %v3023 = vsel %vm389, %v3019, %v3022
      %v3024 = vrot.slane %v3010, 4
      %v3025 = vsel %vm389, %v3020, %v3024
      %v3026 = vrot.slane %v3011, 4
      %v3027 = vsel %vm389, %v3022, %v3026
      %3034 = vst [vmem:[#allocation3 + $0xc0] sm:$0xf0] %v3018
      %3035 = vst [vmem:[#allocation3 + $0xc8] sm:$0xf0] %v3019
      %3036 = vst [vmem:[#allocation3 + $0xd0] sm:$0xff] %v3021
      %3037 = vst [vmem:[#allocation3 + $0xd8] sm:$0xff] %v3023
      %3038 = vst [vmem:[#allocation3 + $0xe0] sm:$0xff] %v3025
      %3039 = vst [vmem:[#allocation3 + $0xe8] sm:$0xff] %v3027
      %s3040 = scalar_lea.vmem %s1, 16
      %v3041 = vld [vmem:[%s3040] sm:$0xf]
      %v3042 = vld [vmem:[#allocation3] sm:$0xff]
      %v3043 = vld [vmem:[#allocation3 + $0x8] sm:$0xff]
      %v3044 = vld [vmem:[#allocation3 + $0x10] sm:$0xff]
      %v3045 = vld [vmem:[#allocation3 + $0x18] sm:$0xff]
      %v3046 = vld [vmem:[#allocation3 + $0x20] sm:$0xff]
      %v3047 = vld [vmem:[#allocation3 + $0x28] sm:$0xff]
      %v3048 = vld [vmem:[#allocation3 + $0x30] sm:$0xff]
      %v3049 = vld [vmem:[#allocation3 + $0x38] sm:$0xff]
      %v3050 = vld [vmem:[#allocation3 + $0x40] sm:$0xff]
      %v3051 = vld [vmem:[#allocation3 + $0x48] sm:$0xff]
      %v3052 = vld [vmem:[#allocation3 + $0x50] sm:$0xff]
      %v3053 = vld [vmem:[#allocation3 + $0x58] sm:$0xff]
      %v3054 = vld [vmem:[#allocation3 + $0x60] sm:$0xff]
      %v3055 = vld [vmem:[#allocation3 + $0x68] sm:$0xff]
      %v3056 = vld [vmem:[#allocation3 + $0x70] sm:$0xff]
      %v3057 = vld [vmem:[#allocation3 + $0x78] sm:$0xff]
      %v3058 = vld [vmem:[#allocation3 + $0x80] sm:$0xff]
      %v3059 = vld [vmem:[#allocation3 + $0x88] sm:$0xff]
      %v3060 = vld [vmem:[#allocation3 + $0x90] sm:$0xff]
      %v3061 = vld [vmem:[#allocation3 + $0x98] sm:$0xff]
      %v3062 = vld [vmem:[#allocation3 + $0xa0] sm:$0xff]
      %v3063 = vld [vmem:[#allocation3 + $0xa8] sm:$0xff]
      %v3064 = vld [vmem:[#allocation3 + $0xb0] sm:$0xff]
      %v3065 = vld [vmem:[#allocation3 + $0xb8] sm:$0xff]
      %v3066 = vld [vmem:[#allocation3 + $0xc0] sm:$0xff]
      %v3067 = vld [vmem:[#allocation3 + $0xc8] sm:$0xff]
      %v3068 = vld [vmem:[#allocation3 + $0xd0] sm:$0xff]
      %v3069 = vld [vmem:[#allocation3 + $0xd8] sm:$0xff]
      %v3070 = vld [vmem:[#allocation3 + $0xe0] sm:$0xff]
      %v3071 = vld [vmem:[#allocation3 + $0xe8] sm:$0xff]
      %v3072 = vld [vmem:[#allocation3 + $0xf0] sm:$0xff]
      %v3073 = vld [vmem:[#allocation3 + $0xf8] sm:$0xff]
      %s3074 = scalar_lea.vmem %s2, 16
      %v3075 = vld [vmem:[%s3074] sm:$0xf]
      %3077 = vset.pattern.permute.xlu0 0
      %3078 = vperm.xlu0 %3077, %v3075
      %v3079 = vpop.permute.xlu0 %3078
      %3081 = vmatpush.msra.mxu0 %v3072
      %3082 = vmatpush.msra.mxu0 %v3070
      %3083 = vmatpush.msra.mxu0 %v3068
      %3084 = vmatpush.msra.mxu0 %v3066
      %3085 = vmatpush.msra.mxu0 %v3064
      %3086 = vmatpush.msra.mxu0 %v3062
      %3087 = vmatpush.msra.mxu0 %v3060
      %3088 = vmatpush.msra.mxu0 %v3058
      %3089 = vmatpush.msra.mxu0 %v3056
      %3090 = vmatpush.msra.mxu0 %v3054
      %3091 = vmatpush.msra.mxu0 %v3052
      %3092 = vmatpush.msra.mxu0 %v3050
      %3093 = vmatpush.msra.mxu0 %v3048
      %3094 = vmatpush.msra.mxu0 %v3046
      %3095 = vmatpush.msra.mxu0 %v3044
      %3096 = vmatpush.msra.mxu0 %v3042
      %3097 = vmatmul.f32.gmra.mxu0 %v3041
      %v3098 = vpop.f32.mrf.mxu0
      %v3099 = vadd.f32 %v3079, %v3098
      %3100 = vdwg.mxu0
      %3101 = vmatpush.msra.mxu0 %v3073
      %3102 = vmatpush.msra.mxu0 %v3071
      %3103 = vmatpush.msra.mxu0 %v3069
      %3104 = vmatpush.msra.mxu0 %v3067
      %3105 = vmatpush.msra.mxu0 %v3065
      %3106 = vmatpush.msra.mxu0 %v3063
      %3107 = vmatpush.msra.mxu0 %v3061
      %3108 = vmatpush.msra.mxu0 %v3059
      %3109 = vmatpush.msra.mxu0 %v3057
      %3110 = vmatpush.msra.mxu0 %v3055
      %3111 = vmatpush.msra.mxu0 %v3053
      %3112 = vmatpush.msra.mxu0 %v3051
      %3113 = vmatpush.msra.mxu0 %v3049
      %3114 = vmatpush.msra.mxu0 %v3047
      %3115 = vmatpush.msra.mxu0 %v3045
      %3116 = vmatpush.msra.mxu0 %v3043
      %3117 = vmatmul.f32.gmra.mxu0 %v3041
      %v3118 = vpop.f32.mrf.mxu0
      %v3119 = vadd.f32 %v3079, %v3118
      %3120 = vdwg.mxu0
      %v3121 = vmul.f32 %v3099, %v3099
      %v3122 = vmul.f32 %v3119, %v3119
      %v3125 = vrot.slane %v3121, 4
      %v3126 = vrot.slane %v3122, 4
      %v3129 = vsel %vm389, %v3099, %v3125
      %v3130 = vsel %vm389, %v3119, %v3126
      %3131 = vrot.lane.b32.xlu0 %v3129, 127
      %v3132 = vpop.permute.xlu0 %3131
      %3133 = vrot.lane.b32.xlu0 %v3130, 127
      %v3134 = vpop.permute.xlu0 %3133
      %v3135 = vsel %vm778, %v3132, %v3134
      %v3136 = vsel %vm778, %v3134, %v3132
      %3137 = vrot.lane.b32.xlu0 %v3129, 1
      %v3138 = vpop.permute.xlu0 %3137
      %3139 = vrot.lane.b32.xlu0 %v3130, 1
      %v3140 = vpop.permute.xlu0 %3139
      %v3141 = vsel %vm785, %v3138, %v3140
      %v3142 = vsel %vm785, %v3140, %v3138
      %v3143 = vsel %vm790, %v3135, %v3142
      %v3144 = vsel %vm791, %v3136, %v3141
      %v3145 = vadd.f32 %v3129, %v3143
      %v3146 = vadd.f32 %v3130, %v3144
      %3147 = vrot.lane.b32.xlu0 %v3145, 126
      %v3148 = vpop.permute.xlu0 %3147
      %3149 = vrot.lane.b32.xlu0 %v3146, 126
      %v3150 = vpop.permute.xlu0 %3149
      %v3151 = vsel %vm800, %v3148, %v3150
      %v3152 = vsel %vm800, %v3150, %v3148
      %3153 = vrot.lane.b32.xlu0 %v3145, 2
      %v3154 = vpop.permute.xlu0 %3153
      %3155 = vrot.lane.b32.xlu0 %v3146, 2
      %v3156 = vpop.permute.xlu0 %3155
      %v3157 = vsel %vm807, %v3154, %v3156
      %v3158 = vsel %vm807, %v3156, %v3154
      %v3159 = vsel %vm812, %v3151, %v3158
      %v3160 = vsel %vm813, %v3152, %v3157
      %v3161 = vadd.f32 %v3145, %v3159
      %v3162 = vadd.f32 %v3146, %v3160
      %3163 = vrot.lane.b32.xlu0 %v3161, 124
      %v3164 = vpop.permute.xlu0 %3163
      %3165 = vrot.lane.b32.xlu0 %v3162, 124
      %v3166 = vpop.permute.xlu0 %3165
      %v3167 = vsel %vm822, %v3164, %v3166
      %v3168 = vsel %vm822, %v3166, %v3164
      %3169 = vrot.lane.b32.xlu0 %v3161, 4
      %v3170 = vpop.permute.xlu0 %3169
      %3171 = vrot.lane.b32.xlu0 %v3162, 4
      %v3172 = vpop.permute.xlu0 %3171
      %v3173 = vsel %vm829, %v3170, %v3172
      %v3174 = vsel %vm829, %v3172, %v3170
      %v3175 = vsel %vm834, %v3167, %v3174
      %v3176 = vsel %vm835, %v3168, %v3173
      %v3177 = vadd.f32 %v3161, %v3175
      %v3178 = vadd.f32 %v3162, %v3176
      %3179 = vrot.lane.b32.xlu0 %v3177, 120
      %v3180 = vpop.permute.xlu0 %3179
      %3181 = vrot.lane.b32.xlu0 %v3178, 120
      %v3182 = vpop.permute.xlu0 %3181
      %v3183 = vsel %vm844, %v3180, %v3182
      %v3184 = vsel %vm844, %v3182, %v3180
      %3185 = vrot.lane.b32.xlu0 %v3177, 8
      %v3186 = vpop.permute.xlu0 %3185
      %3187 = vrot.lane.b32.xlu0 %v3178, 8
      %v3188 = vpop.permute.xlu0 %3187
      %v3189 = vsel %vm851, %v3186, %v3188
      %v3190 = vsel %vm851, %v3188, %v3186
      %v3191 = vsel %vm856, %v3183, %v3190
      %v3192 = vsel %vm857, %v3184, %v3189
      %v3193 = vadd.f32 %v3177, %v3191
      %v3194 = vadd.f32 %v3178, %v3192
      %v3195 = vmul.f32 %v3193, 0.0625
      %v3196 = vmul.f32 %v3194, 0.0625
      %v3197 = vmul.f32 %v3195, %v3195
      %v3198 = vmul.f32 %v3196, %v3196
      %v3201 = vrot.slane %v3197, 4
      %v3202 = vrot.slane %v3198, 4
      %v3205 = vsub.f32 %v3195, %v3201
      %v3206 = vsub.f32 %v3196, %v3202
      %v3207 = vsub.f32 %v3099, %v3195
      %v3208 = vsub.f32 %v3119, %v3196
      %v3209 = vadd.f32 %v3205, 1e-05
      %v3210 = vadd.f32 %v3206, 1e-05
      %v3211 = vrsqrt.pop %v3209
      %v3212 = vmul.f32 %v3211, %v3209
      %v3213 = vmul.f32 %v3212, %v3211
      %v3214 = vmul.f32 0.5, %v3213
      %v3215 = vsub.f32 1.5, %v3214
      %v3216 = vmul.f32 %v3211, %v3215
      %vm3217 = vweird.f32 %v3209
      %vm3218 = vweird.f32 %v3211
      %vm3219 = vmor %vm3217, %vm3218
      %v3220 = vsel %vm3219, %v3211, %v3216
      %v3221 = vrsqrt.pop %v3210
      %v3222 = vmul.f32 %v3221, %v3210
      %v3223 = vmul.f32 %v3222, %v3221
      %v3224 = vmul.f32 0.5, %v3223
      %v3225 = vsub.f32 1.5, %v3224
      %v3226 = vmul.f32 %v3221, %v3225
      %vm3227 = vweird.f32 %v3210
      %vm3228 = vweird.f32 %v3221
      %vm3229 = vmor %vm3227, %vm3228
      %v3230 = vsel %vm3229, %v3221, %v3226
      %v3233 = vrot.slane %v3220, 4
      %v3234 = vrot.slane %v3230, 4
      %v3237 = vmul.f32 %v3207, %v3233
      %v3238 = vmul.f32 %v3208, %v3234
      %s3239 = scalar_lea.vmem %s3, 8
      %v3240 = vld [vmem:[%s3239] sm:$0x3]
      %v3242 = vperm.slane %v3240, 0
      %v3243 = vperm.slane %v3240, 1
      %v3246 = vmul.f32 %v3237, %v3242
      %v3247 = vmul.f32 %v3238, %v3243
      %s3248 = scalar_lea.vmem %s4, 8
      %v3249 = vld [vmem:[%s3248] sm:$0x3]
      %v3251 = vperm.slane %v3249, 0
      %v3252 = vperm.slane %v3249, 1
      %v3255 = vadd.f32 %v3246, %v3251
      %v3256 = vadd.f32 %v3247, %v3252
      %vm3257 = vcmp.gt.f32.partialorder %v3255, 0.0
      %vm3258 = vcmp.gt.f32.partialorder %v3256, 0.0
      %s3259 = scalar_lea.vmem %s5, 16
      %v3260 = vld [vmem:[%s3259] sm:$0xf]
      %3262 = vset.pattern.permute.xlu0 0
      %3263 = vperm.xlu0 %3262, %v3260
      %v3264 = vpop.permute.xlu0 %3263
      %v3266 = vmul.f32 %v3264, %v3255
      %v3267 = vmul.f32 %v3264, %v3256
      %v3268 = vsel %vm3257, %v3255, %v3266
      %v3269 = vsel %vm3258, %v3256, %v3267
      %v3272 = vrot.slane %v3269, 4
      %v3273 = vsel %vm389, %v3268, %v3272
      %3275 = vst [vmem:[%s251] sm:$0xff] %v3273
      %p3276 = scmp.lt.s32.totalorder %s17, 1
      %s3277 = scalar_select %p3276, %s17, 1
      %s3278 = smul.addr %s3277, 2
      %s3279 = smul.addr %s3278, 4
      %s3280 = scalar_lea.vmem %s6, %s3279
      // Predicated region
      $region45: #{dense_block_fused.1} parent=43 // pred_check
        %p3281 = pneg %p166
      $region46: #{dense_block_fused.1} parent=43 // pred_check_branch
        %3283 = sbr.rel (%p3281) target = $region48
      $region47: #{dense_block_fused.1} parent=43 // pred_region
        _
      $region48: #{dense_block_fused.1} parent=43 // pred_fallthru
        _
    $region44: #{dense_block_fused.1} parent=5 // pred_fallthru
      _
    %p3284 = scmp.le.s32.totalorder 2, %s12
    // Predicated region
    $region49: #{dense_block_fused.1} parent=5 // pred_check
      %p3285 = pneg %p3284
    $region50: #{dense_block_fused.1} parent=5 // pred_check_branch
      %3287 = sbr.rel (%p3285) target = $region52
    $region51: #{dense_block_fused.1} parent=5 // pred_region
      %s3288 = ssub.s32 %s12, 2
      // Predicated region
      $region53: #{dense_block_fused.1} parent=51 // pred_check
        %p3289 = pneg %p172
      $region54: #{dense_block_fused.1} parent=51 // pred_check_branch
        %3291 = sbr.rel (%p3289) target = $region56
      $region55: #{dense_block_fused.1} parent=51 // pred_region
        %p3292 = scmp.lt.s32.totalorder %s18, 1
        %s3293 = scalar_select %p3292, %s18, 1
        %s3294 = smul.addr %s3293, 2
        %s3295 = smul.addr %s3294, 4
        %s3296 = scalar_lea.vmem %s6, %s3295
      $region56: #{dense_block_fused.1} parent=51 // pred_fallthru
        _
    $region52: #{dense_block_fused.1} parent=5 // pred_fallthru
      _
  $region6: #{dense_block_fused.1} parent=0 // loop_footer
    %s16 = sadd.s32 1, %s12
  $region7: #{dense_block_fused.1} parent=0 // loop_footer_branch
    %11 = sbr.rel target = $region3
  $region8: #{dense_block_fused.1} parent=0 // loop_exit
    _

</llo_original>
